<compile_context>
chip_gen: v7x
topology: tpu7x:2x2x1
jax: 0.10.0
libtpu: 0.0.40
codegen_flags: <defaults>
</compile_context>

<pallas_src>
import numpy as np
import jax
import jax.numpy as jnp
from jax.experimental import pallas as pl
from jax.experimental.pallas import tpu as pltpu

_BN_EPS = 1e-5
BLOCK_EXPANSION = 1
_VMEM = pl.BlockSpec(memory_space=pltpu.MemorySpace.VMEM)


# ----------------------------- parameters (PyTorch layouts) -----------------------------

def bn_affine(channels):
    # Eval-mode BatchNorm with default running stats / init -> affine (scale, bias).
    scale = jnp.full((channels,), 1.0 / np.sqrt(1.0 + _BN_EPS), jnp.float32)
    bias = jnp.zeros((channels,), jnp.float32)
    return scale, bias


def _kaiming(key, shape, fan):
    return jax.random.normal(key, shape, jnp.float32) * np.sqrt(2.0 / fan)


def make_block_params(key, inplanes, planes, stride, has_shortcut, is_transpose):
    k1, k2, k3 = jax.random.split(key, 3)
    p = {"stride": stride, "is_transpose": is_transpose, "planes": planes}
    if is_transpose:
        p["w1"] = _kaiming(k1, (inplanes, planes, 3, 3), planes * 9)
        p["w2"] = _kaiming(k2, (planes, planes, 3, 3), planes * 9)
    else:
        p["w1"] = _kaiming(k1, (planes, inplanes, 3, 3), planes * 9)
        p["w2"] = _kaiming(k2, (planes, planes, 3, 3), planes * 9)
    p["bn1"] = bn_affine(planes)
    p["bn2"] = bn_affine(planes)
    if has_shortcut:
        if is_transpose:
            p["ws"] = _kaiming(k3, (inplanes, planes, 1, 1), planes)
        else:
            p["ws"] = _kaiming(k3, (planes, inplanes, 1, 1), planes)
        p["bns"] = bn_affine(planes)
    return p


def make_net_params(key, layers, r, n_compressed):
    base = 64 if r > 512 else r
    inplanes = 2 * base
    keys = jax.random.split(key, 5)
    params = {
        "conv1_w": _kaiming(keys[0], (2 * base, r, 7, 3), 2 * base * 7 * 3),
        "bn1": bn_affine(2 * base),
    }

    def make_layer(k, inpl, planes, blocks, stride, transpose):
        ks = jax.random.split(k, blocks)
        has_shortcut = (stride != 1) or (inpl != planes * BLOCK_EXPANSION)
        st = stride if isinstance(stride, tuple) else (stride, stride)
        ps = [make_block_params(ks[0], inpl, planes, st, has_shortcut, transpose)]
        for i in range(1, blocks):
            ps.append(make_block_params(ks[i], planes, planes, (1, 1), False, transpose))
        return ps, planes * BLOCK_EXPANSION

    params["layer1"], inplanes = make_layer(keys[1], inplanes, 2 * base, layers[0], 1, False)
    params["layer2"], inplanes = make_layer(keys[2], inplanes, 4 * base, layers[1], (1, 1), False)
    params["layer3"], inplanes = make_layer(keys[3], inplanes, 2 * base, layers[2], (2, 1), True)
    params["layer4"], inplanes = make_layer(keys[4], inplanes, base, layers[3], (2, 1), True)
    return params


# ----------------------------- weight preparation (host, once) -----------------------------

def _lane_pad(c, width):
    """Smallest c' >= c such that width * c' is a multiple of 128 (lane-dense groups)."""
    m = 128 // int(np.gcd(width, 128))
    return int(-(-c // m) * m)


def _adaptive_rows(out_h, h):
    # Row weights of nn.AdaptiveAvgPool2d along one axis: (out_h, h).
    p = np.zeros((out_h, h), np.float32)
    for i in range(out_h):
        s = (i * h) // out_h
        e = -(((-(i + 1)) * h) // out_h)          # ceil((i+1)*h / out_h)
        p[i, s:e] = 1.0 / (e - s)
    return p


def _conv_taps(w, scale, transpose):
    """Conv weight + folded BN scale as (kh, kw, cin, cout) taps of an equivalent Conv2d."""
    w = np.asarray(w, np.float32)
    scale = np.asarray(scale, np.float32)
    if transpose:
        # ConvTranspose2d weight (cin, cout, kh, kw): flip spatially -> equivalent Conv2d
        # on the zero-dilated input with padding (k - 1 - p).
        m = np.transpose(w[:, :, ::-1, ::-1], (2, 3, 0, 1))
    else:
        # Conv2d weight (cout, cin, kh, kw).
        m = np.transpose(w, (2, 3, 1, 0))
    return m * scale[None, None, None, :]


def _band(m, width, pad_w, cin_pad, cout_pad):
    """Per-tap banded GEMM matrices (kh, width*cin_pad, width*cout_pad) for the (H, W*C) layout."""
    kh, kw, cin, cout = m.shape
    b = np.zeros((kh, width * cin_pad, width * cout_pad), np.float32)
    for i in range(kh):
        for wo in range(width):
            for j in range(kw):
                wi = wo + j - pad_w
                if 0 <= wi < width:
                    b[i, wi * cin_pad:wi * cin_pad + cin,
                      wo * cout_pad:wo * cout_pad + cout] = m[i, j]
    return b


def _bias_band(bias, width, cout_pad):
    b = np.zeros((cout_pad,), np.float32)
    bias = np.asarray(bias, np.float32)
    b[:bias.shape[0]] = bias
    return np.tile(b, width)[None, :]


def _interleave_rows(a, b):
    """Rows [a0, b0, a1, b1, ..., a_{n-1}] where a has exactly one more row than b."""
    nb = b.shape[0]
    parts = []
    for i in range(nb):
        parts.append(a[i:i + 1])
        parts.append(b[i:i + 1])
    parts.append(a[nb:nb + 1])
    return jnp.concatenate(parts, axis=0)


# --------------------------------- fused forward builder ---------------------------------

def build_forward(params, r, n_compressed, h_in, w_in):
    """Returns a jitted forward(x) for x of shape (1, r, h_in, w_in) (NCHW)."""
    base = 64 if r > 512 else r
    width = w_in                                      # W-stride is 1 everywhere -> constant.
    c_in = r
    cin_pad = _lane_pad(c_in, width)
    c_stem = 2 * base
    cs_pad = _lane_pad(c_stem, width)

    consts = []

    def add(a, dtype=jnp.float32):
        consts.append(jnp.asarray(a, dtype))
        return len(consts) - 1

    # ---- conv1 (7x3, stride (2,1), pad (3,1)) fused with bn1: single stacked band matrix ----
    s1, b1 = params["bn1"]
    band1 = _band(_conv_taps(params["conv1_w"], s1, False), width, 1, cin_pad, cs_pad)
    i_c1w = add(band1.reshape(-1, band1.shape[-1]), jnp.bfloat16)     # (7*W*Cin', W*Cstem')
    i_c1b = add(_bias_band(b1, width, cs_pad))

    h1 = (h_in + 2 * 3 - 7) // 2 + 1                  # after conv1 (stride 2 in H)
    hp = (h1 + 2 * 1 - 3) // 2 + 1                    # after maxpool (stride 2 in H)

    # ---- residual stages ----
    blocks = []
    h_cur, c_cur, cp_cur = hp, c_stem, cs_pad
    for name in ("layer1", "layer2", "layer3", "layer4"):
        for bp in params[name]:
            tr = bp["is_transpose"]
            sh, sw = bp["stride"]
            assert sw == 1, "W-stride != 1 not used by ResCompressionNet"
            assert tr or sh == 1, "strided non-transpose blocks not used by ResCompressionNet"
            dil = sh if tr else 1
            planes = bp["planes"]
            ppad = _lane_pad(planes, width)
            sc1, bb1 = bp["bn1"]
            sc2, bb2 = bp["bn2"]
            band_w1 = _band(_conv_taps(bp["w1"], sc1, tr), width, 1, cp_cur, ppad)
            band_w2 = _band(_conv_taps(bp["w2"], sc2, tr), width, 1, ppad, ppad)
            d = {"dil": dil, "ws": None}
            if dil == 1:
                d["w1"] = add(band_w1.reshape(-1, band_w1.shape[-1]), jnp.bfloat16)
            else:
                # even output rows use only the middle tap; odd rows use taps {0, 2}.
                d["w1_mid"] = add(band_w1[1], jnp.bfloat16)
                d["w1_02"] = add(band_w1[[0, 2]].reshape(-1, band_w1.shape[-1]), jnp.bfloat16)
            d["b1"] = add(_bias_band(bb1, width, ppad))
            d["w2"] = add(band_w2.reshape(-1, band_w2.shape[-1]), jnp.bfloat16)
            d["b2"] = add(_bias_band(bb2, width, ppad))
            if "ws" in bp:
                scs, bbs = bp["bns"]
                band_ws = _band(_conv_taps(bp["ws"], scs, tr), width, 0, cp_cur, ppad)
                d["ws"] = add(band_ws.reshape(-1, band_ws.shape[-1]), jnp.bfloat16)
                d["bs"] = add(_bias_band(bbs, width, ppad))
            blocks.append(d)
            h_cur = (h_cur - 1) * dil + 1             # 3x3 pad-1 keeps H for dil==1
            c_cur, cp_cur = planes, ppad

    h_last, c_last, cl_pad = h_cur, c_cur, cp_cur

    # ---- avgpool1 = (mean over W) then adaptive pooling over H, both as small matmuls ----
    out_lanes = max(128, -(-c_last // 128) * 128)
    out_rows = max(8, -(-n_compressed // 8) * 8)
    S = np.zeros((width * cl_pad, out_lanes), np.float32)
    for w in range(width):
        for c in range(c_last):
            S[w * cl_pad + c, c] = 1.0 / width
    i_s = add(S)
    Q = np.zeros((out_rows, h_last), np.float32)
    Q[:n_compressed] = _adaptive_rows(n_compressed, h_last)
    i_q = add(Q)

    n_consts = len(consts)

    def kernel(*refs):
        xe_ref, xo_ref = refs[0], refs[1]             # bf16 even/odd planes of H-padded input
        cref = refs[2:2 + n_consts]
        out_ref = refs[2 + n_consts]

        def conv3(xb, w_idx, b_idx, relu):
            """3x3, pad 1, dil 1 conv (+BN affine) on a bf16 (h, W*Cin') activation: one GEMM."""
            h, k1 = xb.shape
            z = jnp.zeros((1, k1), xb.dtype)
            xp = jnp.concatenate([z, xb, z], axis=0)                    # (h+2, K1)
            lhs = jnp.concatenate([xp[i:i + h] for i in range(3)], axis=1)   # (h, 3*K1)
            acc = jnp.dot(lhs, cref[w_idx][...], preferred_element_type=jnp.float32)
            acc = acc + cref[b_idx][...]
            return jnp.maximum(acc, 0.0) if relu else acc

        # ---- conv1 + bn1 + relu: stride (2,1) via even/odd row planes, ONE stacked GEMM ----
        slabs = [( xe_ref if i % 2 == 0 else xo_ref)[i // 2: i // 2 + h1, :] for i in range(7)]
        lhs1 = jnp.concatenate(slabs, axis=1)                           # (h1, 7*W*Cin') bf16
        acc1 = jnp.dot(lhs1, cref[i_c1w][...], preferred_element_type=jnp.float32)
        x = jnp.maximum(acc1 + cref[i_c1b][...], 0.0)                   # (h1, W*Cstem') f32

        # ---- maxpool 3x3, stride (2,1), pad 1 ----
        # Out-of-range neighbours are filled with 0, which is only valid because x >= 0
        # (post-ReLU); do not move the maxpool away from the ReLU.
        L = width * cs_pad
        lane = jax.lax.broadcasted_iota(jnp.int32, x.shape, 1)
        x_wp1 = jnp.where(lane < (width - 1) * cs_pad,
                          pltpu.roll(x, (width - 1) * cs_pad, 1), 0.0)  # neighbour w+1
        x_wm1 = jnp.where(lane >= cs_pad, pltpu.roll(x, cs_pad, 1), 0.0)  # neighbour w-1
        wmax = jnp.maximum(x, jnp.maximum(x_wp1, x_wm1))
        zrow = jnp.zeros((1, L), jnp.float32)
        up = jnp.concatenate([zrow, wmax[:-1]], axis=0)                 # row r -> wmax[r-1]
        dn = jnp.concatenate([wmax[1:], zrow], axis=0)                  # row r -> wmax[r+1]
        hmax = jnp.maximum(wmax, jnp.maximum(up, dn))
        x = jnp.concatenate([hmax[2 * p:2 * p + 1] for p in range(hp)], axis=0)  # even rows

        # ---- residual stages (all straight-line value ops; activations stay in vregs/VMEM) ----
        h = hp
        for d in blocks:
            xb = x.astype(jnp.bfloat16)               # single cast per block input
            # shortcut first (smaller peak live footprint).
            sc_core = None
            if d["ws"] is not None:
                sc_core = jnp.dot(xb, cref[d["ws"]][...], preferred_element_type=jnp.float32)
                bs = cref[d["bs"]][...]
            # conv1 (+bn1+relu)
            if d["dil"] == 1:
                y = conv3(xb, d["w1"], d["b1"], relu=True)
                oh = h
            else:
                # stride-2 ConvTranspose2d: even/odd output-phase GEMMs on the un-dilated input.
                e = jnp.dot(xb, cref[d["w1_mid"]][...], preferred_element_type=jnp.float32)
                if h > 1:
                    lhs_o = jnp.concatenate([xb[:h - 1], xb[1:]], axis=1)
                    o = jnp.dot(lhs_o, cref[d["w1_02"]][...], preferred_element_type=jnp.float32)
                    y = _interleave_rows(e, o)
                else:
                    y = e
                y = jnp.maximum(y + cref[d["b1"]][...], 0.0)
                oh = 2 * h - 1
            # conv2 (+bn2), no relu yet
            out2 = conv3(y.astype(jnp.bfloat16), d["w2"], d["b2"], relu=False)
            # residual add + relu (all f32)
            if d["ws"] is None:
                x = jnp.maximum(out2 + x, 0.0)
            elif d["dil"] == 1:
                x = jnp.maximum(out2 + sc_core + bs, 0.0)
            else:
                # 1x1 transposed shortcut lands on even rows only; odd rows only get the BN bias.
                if h > 1:
                    sc_full = _interleave_rows(
                        sc_core, jnp.zeros((h - 1, sc_core.shape[1]), jnp.float32))
                else:
                    sc_full = sc_core
                x = jnp.maximum(out2 + sc_full + bs, 0.0)
            h = oh

        # ---- avgpool1: mean over W, then adaptive pooling over H (lane-dense output block) ----
        t = jnp.dot(x, cref[i_s][...], preferred_element_type=jnp.float32)   # (h_last, out_lanes)
        out_ref[...] = jnp.dot(cref[i_q][...], t, preferred_element_type=jnp.float32)

    const_bytes = sum(int(c.size) * c.dtype.itemsize for c in consts)
    vmem_limit = int(min(60 * 1024 * 1024, 2 * const_bytes + 16 * 1024 * 1024))

    net_call = pl.pallas_call(
        kernel,
        out_shape=jax.ShapeDtypeStruct((out_rows, out_lanes), jnp.float32),
        in_specs=[_VMEM] * (2 + n_consts),
        out_specs=_VMEM,
        compiler_params=pltpu.CompilerParams(vmem_limit_bytes=vmem_limit),
    )

    consts_t = tuple(consts)
    p2_t = jnp.asarray(_adaptive_rows(r, c_last).T)      # (c_last, r); identity when c_last == r
    hpad = h_in + 6

    def forward(x):
        # Prologue (tiny XLA under jit): NCHW -> lane-dense (H, W*C'), pad H and channels,
        # split even/odd rows so the stride-2 conv1 only needs contiguous row windows.
        xs = jnp.transpose(x[0], (1, 2, 0))                                   # (H, W, C)
        xs = jnp.pad(xs, ((3, 3), (0, 0), (0, cin_pad - c_in)))
        xs = xs.reshape(hpad, width * cin_pad).astype(jnp.bfloat16)
        pooled = net_call(xs[0::2], xs[1::2], *consts_t)[:n_compressed, :c_last]
        # TODO(synk): the trailing `view(1, n_comp, -1, 1)` regroup + avgpool2 + view is a
        # permutation + tiny matmul on a few dozen floats; done in plain jitted XLA.
        v = jnp.transpose(pooled).reshape(n_compressed, -1)
        return jnp.dot(v, p2_t)                                               # (n_comp, r)

    return jax.jit(forward)


# TODO(synk): `add_specific_args` is argparse plumbing with no compute; not translated.

if __name__ == "__main__":
    r, n_compressed = 8, 4
    layers = (1, 1, 1, 1)
    h_in, w_in = 16, 8

    key = jax.random.PRNGKey(0)
    kx, kp = jax.random.split(key)
    x = jax.random.normal(kx, (1, r, h_in, w_in), jnp.float32)   # NCHW, in_channels == r
    params = make_net_params(kp, layers, r, n_compressed)

    forward = build_forward(params, r, n_compressed, h_in, w_in)
    out = jax.block_until_ready(forward(x))

    assert out.shape == (n_compressed, r), out.shape
    assert bool(jnp.all(jnp.isfinite(out)))
    print("KERNEL_OK")
</pallas_src>

<mosaic_0001>
module attributes {stable_mosaic.version = 11 : i64} {
  func.func @kernel(%arg0: memref<11x128xbf16, #tpu.memory_space<vmem>>, %arg1: memref<11x128xbf16, #tpu.memory_space<vmem>>, %arg2: memref<896x128xbf16, #tpu.memory_space<vmem>>, %arg3: memref<1x128xf32, #tpu.memory_space<vmem>>, %arg4: memref<384x128xbf16, #tpu.memory_space<vmem>>, %arg5: memref<1x128xf32, #tpu.memory_space<vmem>>, %arg6: memref<384x128xbf16, #tpu.memory_space<vmem>>, %arg7: memref<1x128xf32, #tpu.memory_space<vmem>>, %arg8: memref<384x256xbf16, #tpu.memory_space<vmem>>, %arg9: memref<1x256xf32, #tpu.memory_space<vmem>>, %arg10: memref<768x256xbf16, #tpu.memory_space<vmem>>, %arg11: memref<1x256xf32, #tpu.memory_space<vmem>>, %arg12: memref<128x256xbf16, #tpu.memory_space<vmem>>, %arg13: memref<1x256xf32, #tpu.memory_space<vmem>>, %arg14: memref<256x128xbf16, #tpu.memory_space<vmem>>, %arg15: memref<512x128xbf16, #tpu.memory_space<vmem>>, %arg16: memref<1x128xf32, #tpu.memory_space<vmem>>, %arg17: memref<384x128xbf16, #tpu.memory_space<vmem>>, %arg18: memref<1x128xf32, #tpu.memory_space<vmem>>, %arg19: memref<256x128xbf16, #tpu.memory_space<vmem>>, %arg20: memref<1x128xf32, #tpu.memory_space<vmem>>, %arg21: memref<128x128xbf16, #tpu.memory_space<vmem>>, %arg22: memref<256x128xbf16, #tpu.memory_space<vmem>>, %arg23: memref<1x128xf32, #tpu.memory_space<vmem>>, %arg24: memref<384x128xbf16, #tpu.memory_space<vmem>>, %arg25: memref<1x128xf32, #tpu.memory_space<vmem>>, %arg26: memref<128x128xbf16, #tpu.memory_space<vmem>>, %arg27: memref<1x128xf32, #tpu.memory_space<vmem>>, %arg28: memref<128x128xf32, #tpu.memory_space<vmem>>, %arg29: memref<8x13xf32, #tpu.memory_space<vmem>>, %arg30: memref<8x128xf32, #tpu.memory_space<vmem>>) attributes {dimension_semantics = [], scalar_prefetch = 0 : i64, scratch_operands = 0 : i64, tpu.core_type = #tpu.core_type<tc>} {
    %c0 = arith.constant 0 : index
    %c0_0 = arith.constant 0 : index
    %0 = vector.load %arg0[%c0, %c0_0] : memref<11x128xbf16, #tpu.memory_space<vmem>>, vector<8x128xbf16>
    %c0_1 = arith.constant 0 : index
    %c0_2 = arith.constant 0 : index
    %1 = vector.load %arg1[%c0_1, %c0_2] : memref<11x128xbf16, #tpu.memory_space<vmem>>, vector<8x128xbf16>
    %c1 = arith.constant 1 : index
    %c0_3 = arith.constant 0 : index
    %2 = vector.load %arg0[%c1, %c0_3] : memref<11x128xbf16, #tpu.memory_space<vmem>>, vector<8x128xbf16>
    %c1_4 = arith.constant 1 : index
    %c0_5 = arith.constant 0 : index
    %3 = vector.load %arg1[%c1_4, %c0_5] : memref<11x128xbf16, #tpu.memory_space<vmem>>, vector<8x128xbf16>
    %c2 = arith.constant 2 : index
    %c0_6 = arith.constant 0 : index
    %4 = vector.load %arg0[%c2, %c0_6] : memref<11x128xbf16, #tpu.memory_space<vmem>>, vector<8x128xbf16>
    %c2_7 = arith.constant 2 : index
    %c0_8 = arith.constant 0 : index
    %5 = vector.load %arg1[%c2_7, %c0_8] : memref<11x128xbf16, #tpu.memory_space<vmem>>, vector<8x128xbf16>
    %c3 = arith.constant 3 : index
    %c0_9 = arith.constant 0 : index
    %6 = vector.load %arg0[%c3, %c0_9] : memref<11x128xbf16, #tpu.memory_space<vmem>>, vector<8x128xbf16>
    %7 = tpu.concatenate %0, %1, %2, %3, %4, %5, %6 in 1 : vector<8x128xbf16>, vector<8x128xbf16>, vector<8x128xbf16>, vector<8x128xbf16>, vector<8x128xbf16>, vector<8x128xbf16>, vector<8x128xbf16> -> vector<8x896xbf16>
    %c0_10 = arith.constant 0 : index
    %c0_11 = arith.constant 0 : index
    %8 = vector.load %arg2[%c0_10, %c0_11] : memref<896x128xbf16, #tpu.memory_space<vmem>>, vector<896x128xbf16>
    %cst = arith.constant dense<0.000000e+00> : vector<8x128xf32>
    %9 = tpu.matmul %7, %8, %cst {dimension_numbers = #tpu.dot_dimension_numbers<[1], [0], [0], [1], [0, 0, 1, 1], [], []>} : vector<8x896xbf16>, vector<896x128xbf16>, vector<8x128xf32> -> vector<8x128xf32>
    %c0_12 = arith.constant 0 : index
    %c0_13 = arith.constant 0 : index
    %10 = vector.load %arg3[%c0_12, %c0_13] : memref<1x128xf32, #tpu.memory_space<vmem>>, vector<1x128xf32>
    %11 = vector.broadcast %10 : vector<1x128xf32> to vector<8x128xf32>
    %12 = arith.addf %9, %11 : vector<8x128xf32>
    %cst_14 = arith.constant 0.000000e+00 : f32
    %13 = vector.broadcast %cst_14 : f32 to vector<8x128xf32>
    %14 = arith.maximumf %12, %13 : vector<8x128xf32>
    %15 = tpu.iota {dimensions = array<i32: 1>} : vector<8x128xi32>
    %c112_i32 = arith.constant 112 : i32
    %16 = vector.broadcast %c112_i32 : i32 to vector<8x128xi32>
    %17 = arith.cmpi slt, %15, %16 : vector<8x128xi32>
    %c112_i32_15 = arith.constant 112 : i32
    %18 = tpu.dynamic_rotate %14 by %c112_i32_15 dim 1 : vector<8x128xf32>, i32 -> vector<8x128xf32>
    %cst_16 = arith.constant 0.000000e+00 : f32
    %19 = vector.broadcast %cst_16 : f32 to vector<8x128xf32>
    %20 = arith.select %17, %18, %19 : vector<8x128xi1>, vector<8x128xf32>
    %c16_i32 = arith.constant 16 : i32
    %21 = vector.broadcast %c16_i32 : i32 to vector<8x128xi32>
    %22 = arith.cmpi sge, %15, %21 : vector<8x128xi32>
    %c16_i32_17 = arith.constant 16 : i32
    %23 = tpu.dynamic_rotate %14 by %c16_i32_17 dim 1 : vector<8x128xf32>, i32 -> vector<8x128xf32>
    %cst_18 = arith.constant 0.000000e+00 : f32
    %24 = vector.broadcast %cst_18 : f32 to vector<8x128xf32>
    %25 = arith.select %22, %23, %24 : vector<8x128xi1>, vector<8x128xf32>
    %26 = arith.maximumf %20, %25 : vector<8x128xf32>
    %27 = arith.maximumf %14, %26 : vector<8x128xf32>
    %cst_19 = arith.constant 0.000000e+00 : f32
    %28 = vector.broadcast %cst_19 : f32 to vector<1x128xf32>
    %29 = vector.extract_strided_slice %27 {offsets = [0, 0], sizes = [7, 128], strides = [1, 1]} : vector<8x128xf32> to vector<7x128xf32>
    %30 = tpu.concatenate %28, %29 in 0 : vector<1x128xf32>, vector<7x128xf32> -> vector<8x128xf32>
    %31 = vector.extract_strided_slice %27 {offsets = [1, 0], sizes = [7, 128], strides = [1, 1]} : vector<8x128xf32> to vector<7x128xf32>
    %32 = tpu.concatenate %31, %28 in 0 : vector<7x128xf32>, vector<1x128xf32> -> vector<8x128xf32>
    %33 = arith.maximumf %30, %32 : vector<8x128xf32>
    %34 = arith.maximumf %27, %33 : vector<8x128xf32>
    %35 = vector.extract_strided_slice %34 {offsets = [0, 0], sizes = [1, 128], strides = [1, 1]} : vector<8x128xf32> to vector<1x128xf32>
    %36 = vector.extract_strided_slice %34 {offsets = [2, 0], sizes = [1, 128], strides = [1, 1]} : vector<8x128xf32> to vector<1x128xf32>
    %37 = vector.extract_strided_slice %34 {offsets = [4, 0], sizes = [1, 128], strides = [1, 1]} : vector<8x128xf32> to vector<1x128xf32>
    %38 = vector.extract_strided_slice %34 {offsets = [6, 0], sizes = [1, 128], strides = [1, 1]} : vector<8x128xf32> to vector<1x128xf32>
    %39 = tpu.concatenate %35, %36, %37, %38 in 0 : vector<1x128xf32>, vector<1x128xf32>, vector<1x128xf32>, vector<1x128xf32> -> vector<4x128xf32>
    %40 = arith.truncf %39 : vector<4x128xf32> to vector<4x128xbf16>
    %cst_20 = arith.constant 0.000000e+00 : bf16
    %41 = vector.broadcast %cst_20 : bf16 to vector<1x128xbf16>
    %42 = tpu.concatenate %41, %40, %41 in 0 : vector<1x128xbf16>, vector<4x128xbf16>, vector<1x128xbf16> -> vector<6x128xbf16>
    %43 = vector.extract_strided_slice %42 {offsets = [0, 0], sizes = [4, 128], strides = [1, 1]} : vector<6x128xbf16> to vector<4x128xbf16>
    %44 = vector.extract_strided_slice %42 {offsets = [1, 0], sizes = [4, 128], strides = [1, 1]} : vector<6x128xbf16> to vector<4x128xbf16>
    %45 = vector.extract_strided_slice %42 {offsets = [2, 0], sizes = [4, 128], strides = [1, 1]} : vector<6x128xbf16> to vector<4x128xbf16>
    %46 = tpu.concatenate %43, %44, %45 in 1 : vector<4x128xbf16>, vector<4x128xbf16>, vector<4x128xbf16> -> vector<4x384xbf16>
    %c0_21 = arith.constant 0 : index
    %c0_22 = arith.constant 0 : index
    %47 = vector.load %arg4[%c0_21, %c0_22] : memref<384x128xbf16, #tpu.memory_space<vmem>>, vector<384x128xbf16>
    %cst_23 = arith.constant dense<0.000000e+00> : vector<4x128xf32>
    %48 = tpu.matmul %46, %47, %cst_23 {dimension_numbers = #tpu.dot_dimension_numbers<[1], [0], [0], [1], [0, 0, 1, 1], [], []>} : vector<4x384xbf16>, vector<384x128xbf16>, vector<4x128xf32> -> vector<4x128xf32>
    %c0_24 = arith.constant 0 : index
    %c0_25 = arith.constant 0 : index
    %49 = vector.load %arg5[%c0_24, %c0_25] : memref<1x128xf32, #tpu.memory_space<vmem>>, vector<1x128xf32>
    %50 = vector.broadcast %49 : vector<1x128xf32> to vector<4x128xf32>
    %51 = arith.addf %48, %50 : vector<4x128xf32>
    %cst_26 = arith.constant 0.000000e+00 : f32
    %52 = vector.broadcast %cst_26 : f32 to vector<4x128xf32>
    %53 = arith.maximumf %51, %52 : vector<4x128xf32>
    %54 = arith.truncf %53 : vector<4x128xf32> to vector<4x128xbf16>
    %cst_27 = arith.constant 0.000000e+00 : bf16
    %55 = vector.broadcast %cst_27 : bf16 to vector<1x128xbf16>
    %56 = tpu.concatenate %55, %54, %55 in 0 : vector<1x128xbf16>, vector<4x128xbf16>, vector<1x128xbf16> -> vector<6x128xbf16>
    %57 = vector.extract_strided_slice %56 {offsets = [0, 0], sizes = [4, 128], strides = [1, 1]} : vector<6x128xbf16> to vector<4x128xbf16>
    %58 = vector.extract_strided_slice %56 {offsets = [1, 0], sizes = [4, 128], strides = [1, 1]} : vector<6x128xbf16> to vector<4x128xbf16>
    %59 = vector.extract_strided_slice %56 {offsets = [2, 0], sizes = [4, 128], strides = [1, 1]} : vector<6x128xbf16> to vector<4x128xbf16>
    %60 = tpu.concatenate %57, %58, %59 in 1 : vector<4x128xbf16>, vector<4x128xbf16>, vector<4x128xbf16> -> vector<4x384xbf16>
    %c0_28 = arith.constant 0 : index
    %c0_29 = arith.constant 0 : index
    %61 = vector.load %arg6[%c0_28, %c0_29] : memref<384x128xbf16, #tpu.memory_space<vmem>>, vector<384x128xbf16>
    %cst_30 = arith.constant dense<0.000000e+00> : vector<4x128xf32>
    %62 = tpu.matmul %60, %61, %cst_30 {dimension_numbers = #tpu.dot_dimension_numbers<[1], [0], [0], [1], [0, 0, 1, 1], [], []>} : vector<4x384xbf16>, vector<384x128xbf16>, vector<4x128xf32> -> vector<4x128xf32>
    %c0_31 = arith.constant 0 : index
    %c0_32 = arith.constant 0 : index
    %63 = vector.load %arg7[%c0_31, %c0_32] : memref<1x128xf32, #tpu.memory_space<vmem>>, vector<1x128xf32>
    %64 = vector.broadcast %63 : vector<1x128xf32> to vector<4x128xf32>
    %65 = arith.addf %62, %64 : vector<4x128xf32>
    %66 = arith.addf %65, %39 : vector<4x128xf32>
    %cst_33 = arith.constant 0.000000e+00 : f32
    %67 = vector.broadcast %cst_33 : f32 to vector<4x128xf32>
    %68 = arith.maximumf %66, %67 : vector<4x128xf32>
    %69 = arith.truncf %68 : vector<4x128xf32> to vector<4x128xbf16>
    %c0_34 = arith.constant 0 : index
    %c0_35 = arith.constant 0 : index
    %70 = vector.load %arg12[%c0_34, %c0_35] : memref<128x256xbf16, #tpu.memory_space<vmem>>, vector<128x256xbf16>
    %cst_36 = arith.constant dense<0.000000e+00> : vector<4x256xf32>
    %71 = tpu.matmul %69, %70, %cst_36 {dimension_numbers = #tpu.dot_dimension_numbers<[1], [0], [0], [1], [0, 0, 1, 1], [], []>} : vector<4x128xbf16>, vector<128x256xbf16>, vector<4x256xf32> -> vector<4x256xf32>
    %c0_37 = arith.constant 0 : index
    %c0_38 = arith.constant 0 : index
    %72 = vector.load %arg13[%c0_37, %c0_38] : memref<1x256xf32, #tpu.memory_space<vmem>>, vector<1x256xf32>
    %cst_39 = arith.constant 0.000000e+00 : bf16
    %73 = vector.broadcast %cst_39 : bf16 to vector<1x128xbf16>
    %74 = tpu.concatenate %73, %69, %73 in 0 : vector<1x128xbf16>, vector<4x128xbf16>, vector<1x128xbf16> -> vector<6x128xbf16>
    %75 = vector.extract_strided_slice %74 {offsets = [0, 0], sizes = [4, 128], strides = [1, 1]} : vector<6x128xbf16> to vector<4x128xbf16>
    %76 = vector.extract_strided_slice %74 {offsets = [1, 0], sizes = [4, 128], strides = [1, 1]} : vector<6x128xbf16> to vector<4x128xbf16>
    %77 = vector.extract_strided_slice %74 {offsets = [2, 0], sizes = [4, 128], strides = [1, 1]} : vector<6x128xbf16> to vector<4x128xbf16>
    %78 = tpu.concatenate %75, %76, %77 in 1 : vector<4x128xbf16>, vector<4x128xbf16>, vector<4x128xbf16> -> vector<4x384xbf16>
    %c0_40 = arith.constant 0 : index
    %c0_41 = arith.constant 0 : index
    %79 = vector.load %arg8[%c0_40, %c0_41] : memref<384x256xbf16, #tpu.memory_space<vmem>>, vector<384x256xbf16>
    %cst_42 = arith.constant dense<0.000000e+00> : vector<4x256xf32>
    %80 = tpu.matmul %78, %79, %cst_42 {dimension_numbers = #tpu.dot_dimension_numbers<[1], [0], [0], [1], [0, 0, 1, 1], [], []>} : vector<4x384xbf16>, vector<384x256xbf16>, vector<4x256xf32> -> vector<4x256xf32>
    %c0_43 = arith.constant 0 : index
    %c0_44 = arith.constant 0 : index
    %81 = vector.load %arg9[%c0_43, %c0_44] : memref<1x256xf32, #tpu.memory_space<vmem>>, vector<1x256xf32>
    %82 = vector.broadcast %81 : vector<1x256xf32> to vector<4x256xf32>
    %83 = arith.addf %80, %82 : vector<4x256xf32>
    %cst_45 = arith.constant 0.000000e+00 : f32
    %84 = vector.broadcast %cst_45 : f32 to vector<4x256xf32>
    %85 = arith.maximumf %83, %84 : vector<4x256xf32>
    %86 = arith.truncf %85 : vector<4x256xf32> to vector<4x256xbf16>
    %cst_46 = arith.constant 0.000000e+00 : bf16
    %87 = vector.broadcast %cst_46 : bf16 to vector<1x256xbf16>
    %88 = tpu.concatenate %87, %86, %87 in 0 : vector<1x256xbf16>, vector<4x256xbf16>, vector<1x256xbf16> -> vector<6x256xbf16>
    %89 = vector.extract_strided_slice %88 {offsets = [0, 0], sizes = [4, 256], strides = [1, 1]} : vector<6x256xbf16> to vector<4x256xbf16>
    %90 = vector.extract_strided_slice %88 {offsets = [1, 0], sizes = [4, 256], strides = [1, 1]} : vector<6x256xbf16> to vector<4x256xbf16>
    %91 = vector.extract_strided_slice %88 {offsets = [2, 0], sizes = [4, 256], strides = [1, 1]} : vector<6x256xbf16> to vector<4x256xbf16>
    %92 = tpu.concatenate %89, %90, %91 in 1 : vector<4x256xbf16>, vector<4x256xbf16>, vector<4x256xbf16> -> vector<4x768xbf16>
    %c0_47 = arith.constant 0 : index
    %c0_48 = arith.constant 0 : index
    %93 = vector.load %arg10[%c0_47, %c0_48] : memref<768x256xbf16, #tpu.memory_space<vmem>>, vector<768x256xbf16>
    %cst_49 = arith.constant dense<0.000000e+00> : vector<4x256xf32>
    %94 = tpu.matmul %92, %93, %cst_49 {dimension_numbers = #tpu.dot_dimension_numbers<[1], [0], [0], [1], [0, 0, 1, 1], [], []>} : vector<4x768xbf16>, vector<768x256xbf16>, vector<4x256xf32> -> vector<4x256xf32>
    %c0_50 = arith.constant 0 : index
    %c0_51 = arith.constant 0 : index
    %95 = vector.load %arg11[%c0_50, %c0_51] : memref<1x256xf32, #tpu.memory_space<vmem>>, vector<1x256xf32>
    %96 = vector.broadcast %95 : vector<1x256xf32> to vector<4x256xf32>
    %97 = arith.addf %94, %96 : vector<4x256xf32>
    %98 = arith.addf %97, %71 : vector<4x256xf32>
    %99 = vector.broadcast %72 : vector<1x256xf32> to vector<4x256xf32>
    %100 = arith.addf %98, %99 : vector<4x256xf32>
    %cst_52 = arith.constant 0.000000e+00 : f32
    %101 = vector.broadcast %cst_52 : f32 to vector<4x256xf32>
    %102 = arith.maximumf %100, %101 : vector<4x256xf32>
    %103 = arith.truncf %102 : vector<4x256xf32> to vector<4x256xbf16>
    %c0_53 = arith.constant 0 : index
    %c0_54 = arith.constant 0 : index
    %104 = vector.load %arg19[%c0_53, %c0_54] : memref<256x128xbf16, #tpu.memory_space<vmem>>, vector<256x128xbf16>
    %cst_55 = arith.constant dense<0.000000e+00> : vector<4x128xf32>
    %105 = tpu.matmul %103, %104, %cst_55 {dimension_numbers = #tpu.dot_dimension_numbers<[1], [0], [0], [1], [0, 0, 1, 1], [], []>} : vector<4x256xbf16>, vector<256x128xbf16>, vector<4x128xf32> -> vector<4x128xf32>
    %c0_56 = arith.constant 0 : index
    %c0_57 = arith.constant 0 : index
    %106 = vector.load %arg20[%c0_56, %c0_57] : memref<1x128xf32, #tpu.memory_space<vmem>>, vector<1x128xf32>
    %c0_58 = arith.constant 0 : index
    %c0_59 = arith.constant 0 : index
    %107 = vector.load %arg14[%c0_58, %c0_59] : memref<256x128xbf16, #tpu.memory_space<vmem>>, vector<256x128xbf16>
    %cst_60 = arith.constant dense<0.000000e+00> : vector<4x128xf32>
    %108 = tpu.matmul %103, %107, %cst_60 {dimension_numbers = #tpu.dot_dimension_numbers<[1], [0], [0], [1], [0, 0, 1, 1], [], []>} : vector<4x256xbf16>, vector<256x128xbf16>, vector<4x128xf32> -> vector<4x128xf32>
    %109 = vector.extract_strided_slice %103 {offsets = [0, 0], sizes = [3, 256], strides = [1, 1]} : vector<4x256xbf16> to vector<3x256xbf16>
    %110 = vector.extract_strided_slice %103 {offsets = [1, 0], sizes = [3, 256], strides = [1, 1]} : vector<4x256xbf16> to vector<3x256xbf16>
    %111 = tpu.concatenate %109, %110 in 1 : vector<3x256xbf16>, vector<3x256xbf16> -> vector<3x512xbf16>
    %c0_61 = arith.constant 0 : index
    %c0_62 = arith.constant 0 : index
    %112 = vector.load %arg15[%c0_61, %c0_62] : memref<512x128xbf16, #tpu.memory_space<vmem>>, vector<512x128xbf16>
    %cst_63 = arith.constant dense<0.000000e+00> : vector<3x128xf32>
    %113 = tpu.matmul %111, %112, %cst_63 {dimension_numbers = #tpu.dot_dimension_numbers<[1], [0], [0], [1], [0, 0, 1, 1], [], []>} : vector<3x512xbf16>, vector<512x128xbf16>, vector<3x128xf32> -> vector<3x128xf32>
    %114 = vector.extract_strided_slice %108 {offsets = [0, 0], sizes = [1, 128], strides = [1, 1]} : vector<4x128xf32> to vector<1x128xf32>
    %115 = vector.extract_strided_slice %113 {offsets = [0, 0], sizes = [1, 128], strides = [1, 1]} : vector<3x128xf32> to vector<1x128xf32>
    %116 = vector.extract_strided_slice %108 {offsets = [1, 0], sizes = [1, 128], strides = [1, 1]} : vector<4x128xf32> to vector<1x128xf32>
    %117 = vector.extract_strided_slice %113 {offsets = [1, 0], sizes = [1, 128], strides = [1, 1]} : vector<3x128xf32> to vector<1x128xf32>
    %118 = vector.extract_strided_slice %108 {offsets = [2, 0], sizes = [1, 128], strides = [1, 1]} : vector<4x128xf32> to vector<1x128xf32>
    %119 = vector.extract_strided_slice %113 {offsets = [2, 0], sizes = [1, 128], strides = [1, 1]} : vector<3x128xf32> to vector<1x128xf32>
    %120 = vector.extract_strided_slice %108 {offsets = [3, 0], sizes = [1, 128], strides = [1, 1]} : vector<4x128xf32> to vector<1x128xf32>
    %121 = tpu.concatenate %114, %115, %116, %117, %118, %119, %120 in 0 : vector<1x128xf32>, vector<1x128xf32>, vector<1x128xf32>, vector<1x128xf32>, vector<1x128xf32>, vector<1x128xf32>, vector<1x128xf32> -> vector<7x128xf32>
    %c0_64 = arith.constant 0 : index
    %c0_65 = arith.constant 0 : index
    %122 = vector.load %arg16[%c0_64, %c0_65] : memref<1x128xf32, #tpu.memory_space<vmem>>, vector<1x128xf32>
    %123 = vector.broadcast %122 : vector<1x128xf32> to vector<7x128xf32>
    %124 = arith.addf %121, %123 : vector<7x128xf32>
    %cst_66 = arith.constant 0.000000e+00 : f32
    %125 = vector.broadcast %cst_66 : f32 to vector<7x128xf32>
    %126 = arith.maximumf %124, %125 : vector<7x128xf32>
    %127 = arith.truncf %126 : vector<7x128xf32> to vector<7x128xbf16>
    %cst_67 = arith.constant 0.000000e+00 : bf16
    %128 = vector.broadcast %cst_67 : bf16 to vector<1x128xbf16>
    %129 = tpu.concatenate %128, %127, %128 in 0 : vector<1x128xbf16>, vector<7x128xbf16>, vector<1x128xbf16> -> vector<9x128xbf16>
    %130 = vector.extract_strided_slice %129 {offsets = [0, 0], sizes = [7, 128], strides = [1, 1]} : vector<9x128xbf16> to vector<7x128xbf16>
    %131 = vector.extract_strided_slice %129 {offsets = [1, 0], sizes = [7, 128], strides = [1, 1]} : vector<9x128xbf16> to vector<7x128xbf16>
    %132 = vector.extract_strided_slice %129 {offsets = [2, 0], sizes = [7, 128], strides = [1, 1]} : vector<9x128xbf16> to vector<7x128xbf16>
    %133 = tpu.concatenate %130, %131, %132 in 1 : vector<7x128xbf16>, vector<7x128xbf16>, vector<7x128xbf16> -> vector<7x384xbf16>
    %c0_68 = arith.constant 0 : index
    %c0_69 = arith.constant 0 : index
    %134 = vector.load %arg17[%c0_68, %c0_69] : memref<384x128xbf16, #tpu.memory_space<vmem>>, vector<384x128xbf16>
    %cst_70 = arith.constant dense<0.000000e+00> : vector<7x128xf32>
    %135 = tpu.matmul %133, %134, %cst_70 {dimension_numbers = #tpu.dot_dimension_numbers<[1], [0], [0], [1], [0, 0, 1, 1], [], []>} : vector<7x384xbf16>, vector<384x128xbf16>, vector<7x128xf32> -> vector<7x128xf32>
    %c0_71 = arith.constant 0 : index
    %c0_72 = arith.constant 0 : index
    %136 = vector.load %arg18[%c0_71, %c0_72] : memref<1x128xf32, #tpu.memory_space<vmem>>, vector<1x128xf32>
    %137 = vector.broadcast %136 : vector<1x128xf32> to vector<7x128xf32>
    %138 = arith.addf %135, %137 : vector<7x128xf32>
    %cst_73 = arith.constant 0.000000e+00 : f32
    %139 = vector.broadcast %cst_73 : f32 to vector<3x128xf32>
    %140 = vector.extract_strided_slice %105 {offsets = [0, 0], sizes = [1, 128], strides = [1, 1]} : vector<4x128xf32> to vector<1x128xf32>
    %141 = vector.extract_strided_slice %139 {offsets = [0, 0], sizes = [1, 128], strides = [1, 1]} : vector<3x128xf32> to vector<1x128xf32>
    %142 = vector.extract_strided_slice %105 {offsets = [1, 0], sizes = [1, 128], strides = [1, 1]} : vector<4x128xf32> to vector<1x128xf32>
    %143 = vector.extract_strided_slice %139 {offsets = [1, 0], sizes = [1, 128], strides = [1, 1]} : vector<3x128xf32> to vector<1x128xf32>
    %144 = vector.extract_strided_slice %105 {offsets = [2, 0], sizes = [1, 128], strides = [1, 1]} : vector<4x128xf32> to vector<1x128xf32>
    %145 = vector.extract_strided_slice %139 {offsets = [2, 0], sizes = [1, 128], strides = [1, 1]} : vector<3x128xf32> to vector<1x128xf32>
    %146 = vector.extract_strided_slice %105 {offsets = [3, 0], sizes = [1, 128], strides = [1, 1]} : vector<4x128xf32> to vector<1x128xf32>
    %147 = tpu.concatenate %140, %141, %142, %143, %144, %145, %146 in 0 : vector<1x128xf32>, vector<1x128xf32>, vector<1x128xf32>, vector<1x128xf32>, vector<1x128xf32>, vector<1x128xf32>, vector<1x128xf32> -> vector<7x128xf32>
    %148 = arith.addf %138, %147 : vector<7x128xf32>
    %149 = vector.broadcast %106 : vector<1x128xf32> to vector<7x128xf32>
    %150 = arith.addf %148, %149 : vector<7x128xf32>
    %cst_74 = arith.constant 0.000000e+00 : f32
    %151 = vector.broadcast %cst_74 : f32 to vector<7x128xf32>
    %152 = arith.maximumf %150, %151 : vector<7x128xf32>
    %153 = arith.truncf %152 : vector<7x128xf32> to vector<7x128xbf16>
    %c0_75 = arith.constant 0 : index
    %c0_76 = arith.constant 0 : index
    %154 = vector.load %arg26[%c0_75, %c0_76] : memref<128x128xbf16, #tpu.memory_space<vmem>>, vector<128x128xbf16>
    %cst_77 = arith.constant dense<0.000000e+00> : vector<7x128xf32>
    %155 = tpu.matmul %153, %154, %cst_77 {dimension_numbers = #tpu.dot_dimension_numbers<[1], [0], [0], [1], [0, 0, 1, 1], [], []>} : vector<7x128xbf16>, vector<128x128xbf16>, vector<7x128xf32> -> vector<7x128xf32>
    %c0_78 = arith.constant 0 : index
    %c0_79 = arith.constant 0 : index
    %156 = vector.load %arg27[%c0_78, %c0_79] : memref<1x128xf32, #tpu.memory_space<vmem>>, vector<1x128xf32>
    %c0_80 = arith.constant 0 : index
    %c0_81 = arith.constant 0 : index
    %157 = vector.load %arg21[%c0_80, %c0_81] : memref<128x128xbf16, #tpu.memory_space<vmem>>, vector<128x128xbf16>
    %cst_82 = arith.constant dense<0.000000e+00> : vector<7x128xf32>
    %158 = tpu.matmul %153, %157, %cst_82 {dimension_numbers = #tpu.dot_dimension_numbers<[1], [0], [0], [1], [0, 0, 1, 1], [], []>} : vector<7x128xbf16>, vector<128x128xbf16>, vector<7x128xf32> -> vector<7x128xf32>
    %159 = vector.extract_strided_slice %153 {offsets = [0, 0], sizes = [6, 128], strides = [1, 1]} : vector<7x128xbf16> to vector<6x128xbf16>
    %160 = vector.extract_strided_slice %153 {offsets = [1, 0], sizes = [6, 128], strides = [1, 1]} : vector<7x128xbf16> to vector<6x128xbf16>
    %161 = tpu.concatenate %159, %160 in 1 : vector<6x128xbf16>, vector<6x128xbf16> -> vector<6x256xbf16>
    %c0_83 = arith.constant 0 : index
    %c0_84 = arith.constant 0 : index
    %162 = vector.load %arg22[%c0_83, %c0_84] : memref<256x128xbf16, #tpu.memory_space<vmem>>, vector<256x128xbf16>
    %cst_85 = arith.constant dense<0.000000e+00> : vector<6x128xf32>
    %163 = tpu.matmul %161, %162, %cst_85 {dimension_numbers = #tpu.dot_dimension_numbers<[1], [0], [0], [1], [0, 0, 1, 1], [], []>} : vector<6x256xbf16>, vector<256x128xbf16>, vector<6x128xf32> -> vector<6x128xf32>
    %164 = vector.extract_strided_slice %158 {offsets = [0, 0], sizes = [1, 128], strides = [1, 1]} : vector<7x128xf32> to vector<1x128xf32>
    %165 = vector.extract_strided_slice %163 {offsets = [0, 0], sizes = [1, 128], strides = [1, 1]} : vector<6x128xf32> to vector<1x128xf32>
    %166 = vector.extract_strided_slice %158 {offsets = [1, 0], sizes = [1, 128], strides = [1, 1]} : vector<7x128xf32> to vector<1x128xf32>
    %167 = vector.extract_strided_slice %163 {offsets = [1, 0], sizes = [1, 128], strides = [1, 1]} : vector<6x128xf32> to vector<1x128xf32>
    %168 = vector.extract_strided_slice %158 {offsets = [2, 0], sizes = [1, 128], strides = [1, 1]} : vector<7x128xf32> to vector<1x128xf32>
    %169 = vector.extract_strided_slice %163 {offsets = [2, 0], sizes = [1, 128], strides = [1, 1]} : vector<6x128xf32> to vector<1x128xf32>
    %170 = vector.extract_strided_slice %158 {offsets = [3, 0], sizes = [1, 128], strides = [1, 1]} : vector<7x128xf32> to vector<1x128xf32>
    %171 = vector.extract_strided_slice %163 {offsets = [3, 0], sizes = [1, 128], strides = [1, 1]} : vector<6x128xf32> to vector<1x128xf32>
    %172 = vector.extract_strided_slice %158 {offsets = [4, 0], sizes = [1, 128], strides = [1, 1]} : vector<7x128xf32> to vector<1x128xf32>
    %173 = vector.extract_strided_slice %163 {offsets = [4, 0], sizes = [1, 128], strides = [1, 1]} : vector<6x128xf32> to vector<1x128xf32>
    %174 = vector.extract_strided_slice %158 {offsets = [5, 0], sizes = [1, 128], strides = [1, 1]} : vector<7x128xf32> to vector<1x128xf32>
    %175 = vector.extract_strided_slice %163 {offsets = [5, 0], sizes = [1, 128], strides = [1, 1]} : vector<6x128xf32> to vector<1x128xf32>
    %176 = vector.extract_strided_slice %158 {offsets = [6, 0], sizes = [1, 128], strides = [1, 1]} : vector<7x128xf32> to vector<1x128xf32>
    %177 = tpu.concatenate %164, %165, %166, %167, %168, %169, %170, %171, %172, %173, %174, %175, %176 in 0 : vector<1x128xf32>, vector<1x128xf32>, vector<1x128xf32>, vector<1x128xf32>, vector<1x128xf32>, vector<1x128xf32>, vector<1x128xf32>, vector<1x128xf32>, vector<1x128xf32>, vector<1x128xf32>, vector<1x128xf32>, vector<1x128xf32>, vector<1x128xf32> -> vector<13x128xf32>
    %c0_86 = arith.constant 0 : index
    %c0_87 = arith.constant 0 : index
    %178 = vector.load %arg23[%c0_86, %c0_87] : memref<1x128xf32, #tpu.memory_space<vmem>>, vector<1x128xf32>
    %179 = vector.broadcast %178 : vector<1x128xf32> to vector<13x128xf32>
    %180 = arith.addf %177, %179 : vector<13x128xf32>
    %cst_88 = arith.constant 0.000000e+00 : f32
    %181 = vector.broadcast %cst_88 : f32 to vector<13x128xf32>
    %182 = arith.maximumf %180, %181 : vector<13x128xf32>
    %183 = arith.truncf %182 : vector<13x128xf32> to vector<13x128xbf16>
    %cst_89 = arith.constant 0.000000e+00 : bf16
    %184 = vector.broadcast %cst_89 : bf16 to vector<1x128xbf16>
    %185 = tpu.concatenate %184, %183, %184 in 0 : vector<1x128xbf16>, vector<13x128xbf16>, vector<1x128xbf16> -> vector<15x128xbf16>
    %186 = vector.extract_strided_slice %185 {offsets = [0, 0], sizes = [13, 128], strides = [1, 1]} : vector<15x128xbf16> to vector<13x128xbf16>
    %187 = vector.extract_strided_slice %185 {offsets = [1, 0], sizes = [13, 128], strides = [1, 1]} : vector<15x128xbf16> to vector<13x128xbf16>
    %188 = vector.extract_strided_slice %185 {offsets = [2, 0], sizes = [13, 128], strides = [1, 1]} : vector<15x128xbf16> to vector<13x128xbf16>
    %189 = tpu.concatenate %186, %187, %188 in 1 : vector<13x128xbf16>, vector<13x128xbf16>, vector<13x128xbf16> -> vector<13x384xbf16>
    %c0_90 = arith.constant 0 : index
    %c0_91 = arith.constant 0 : index
    %190 = vector.load %arg24[%c0_90, %c0_91] : memref<384x128xbf16, #tpu.memory_space<vmem>>, vector<384x128xbf16>
    %cst_92 = arith.constant dense<0.000000e+00> : vector<13x128xf32>
    %191 = tpu.matmul %189, %190, %cst_92 {dimension_numbers = #tpu.dot_dimension_numbers<[1], [0], [0], [1], [0, 0, 1, 1], [], []>} : vector<13x384xbf16>, vector<384x128xbf16>, vector<13x128xf32> -> vector<13x128xf32>
    %c0_93 = arith.constant 0 : index
    %c0_94 = arith.constant 0 : index
    %192 = vector.load %arg25[%c0_93, %c0_94] : memref<1x128xf32, #tpu.memory_space<vmem>>, vector<1x128xf32>
    %193 = vector.broadcast %192 : vector<1x128xf32> to vector<13x128xf32>
    %194 = arith.addf %191, %193 : vector<13x128xf32>
    %cst_95 = arith.constant 0.000000e+00 : f32
    %195 = vector.broadcast %cst_95 : f32 to vector<6x128xf32>
    %196 = vector.extract_strided_slice %155 {offsets = [0, 0], sizes = [1, 128], strides = [1, 1]} : vector<7x128xf32> to vector<1x128xf32>
    %197 = vector.extract_strided_slice %195 {offsets = [0, 0], sizes = [1, 128], strides = [1, 1]} : vector<6x128xf32> to vector<1x128xf32>
    %198 = vector.extract_strided_slice %155 {offsets = [1, 0], sizes = [1, 128], strides = [1, 1]} : vector<7x128xf32> to vector<1x128xf32>
    %199 = vector.extract_strided_slice %195 {offsets = [1, 0], sizes = [1, 128], strides = [1, 1]} : vector<6x128xf32> to vector<1x128xf32>
    %200 = vector.extract_strided_slice %155 {offsets = [2, 0], sizes = [1, 128], strides = [1, 1]} : vector<7x128xf32> to vector<1x128xf32>
    %201 = vector.extract_strided_slice %195 {offsets = [2, 0], sizes = [1, 128], strides = [1, 1]} : vector<6x128xf32> to vector<1x128xf32>
    %202 = vector.extract_strided_slice %155 {offsets = [3, 0], sizes = [1, 128], strides = [1, 1]} : vector<7x128xf32> to vector<1x128xf32>
    %203 = vector.extract_strided_slice %195 {offsets = [3, 0], sizes = [1, 128], strides = [1, 1]} : vector<6x128xf32> to vector<1x128xf32>
    %204 = vector.extract_strided_slice %155 {offsets = [4, 0], sizes = [1, 128], strides = [1, 1]} : vector<7x128xf32> to vector<1x128xf32>
    %205 = vector.extract_strided_slice %195 {offsets = [4, 0], sizes = [1, 128], strides = [1, 1]} : vector<6x128xf32> to vector<1x128xf32>
    %206 = vector.extract_strided_slice %155 {offsets = [5, 0], sizes = [1, 128], strides = [1, 1]} : vector<7x128xf32> to vector<1x128xf32>
    %207 = vector.extract_strided_slice %195 {offsets = [5, 0], sizes = [1, 128], strides = [1, 1]} : vector<6x128xf32> to vector<1x128xf32>
    %208 = vector.extract_strided_slice %155 {offsets = [6, 0], sizes = [1, 128], strides = [1, 1]} : vector<7x128xf32> to vector<1x128xf32>
    %209 = tpu.concatenate %196, %197, %198, %199, %200, %201, %202, %203, %204, %205, %206, %207, %208 in 0 : vector<1x128xf32>, vector<1x128xf32>, vector<1x128xf32>, vector<1x128xf32>, vector<1x128xf32>, vector<1x128xf32>, vector<1x128xf32>, vector<1x128xf32>, vector<1x128xf32>, vector<1x128xf32>, vector<1x128xf32>, vector<1x128xf32>, vector<1x128xf32> -> vector<13x128xf32>
    %210 = arith.addf %194, %209 : vector<13x128xf32>
    %211 = vector.broadcast %156 : vector<1x128xf32> to vector<13x128xf32>
    %212 = arith.addf %210, %211 : vector<13x128xf32>
    %cst_96 = arith.constant 0.000000e+00 : f32
    %213 = vector.broadcast %cst_96 : f32 to vector<13x128xf32>
    %214 = arith.maximumf %212, %213 : vector<13x128xf32>
    %c0_97 = arith.constant 0 : index
    %c0_98 = arith.constant 0 : index
    %215 = vector.load %arg28[%c0_97, %c0_98] : memref<128x128xf32, #tpu.memory_space<vmem>>, vector<128x128xf32>
    %cst_99 = arith.constant dense<0.000000e+00> : vector<13x128xf32>
    %216 = tpu.matmul %214, %215, %cst_99 {dimension_numbers = #tpu.dot_dimension_numbers<[1], [0], [0], [1], [0, 0, 1, 1], [], []>} : vector<13x128xf32>, vector<128x128xf32>, vector<13x128xf32> -> vector<13x128xf32>
    %c0_100 = arith.constant 0 : index
    %c0_101 = arith.constant 0 : index
    %217 = vector.load %arg29[%c0_100, %c0_101] : memref<8x13xf32, #tpu.memory_space<vmem>>, vector<8x13xf32>
    %cst_102 = arith.constant dense<0.000000e+00> : vector<8x128xf32>
    %218 = tpu.matmul %217, %216, %cst_102 {dimension_numbers = #tpu.dot_dimension_numbers<[1], [0], [0], [1], [0, 0, 1, 1], [], []>} : vector<8x13xf32>, vector<13x128xf32>, vector<8x128xf32> -> vector<8x128xf32>
    %c0_103 = arith.constant 0 : index
    %c0_104 = arith.constant 0 : index
    %219 = vector.load %arg30[%c0_103, %c0_104] : memref<8x128xf32, #tpu.memory_space<vmem>>, vector<8x128xf32>
    tpu.vector_store %arg30[%c0_103, %c0_104], %218 {strides = array<i32>} : memref<8x128xf32, #tpu.memory_space<vmem>>, vector<8x128xf32>,
    return
  }
}

</mosaic_0001>

<llo_original>
// kernel: forward.1
$region0: #{forward.1}
  #allocation0 [shape = 'u32[]', space=smem, size = 0x4, offset = 0x4, fixed_abs, tag = 'smem constant byte address 0x4 - core index']
  #allocation1 [shape = 'u32[144,128]{1,0:T(1,128)}', space=vmem, size = 0x12000, scoped, tag = 'internal scratch']
  %s0 = inlined_call_operand.smem [shape: u32[31], index: -1, kind: input, shape index: {}]
  %s1 = sld [smem:[%s0]]
  %s2 = scalar_lea.smem %s0, 1
  %s3 = sld [smem:[%s2]]
  %s4 = scalar_lea.smem %s0, 2
  %s5 = sld [smem:[%s4]]
  %s6 = scalar_lea.smem %s0, 3
  %s7 = sld [smem:[%s6]]
  %s8 = scalar_lea.smem %s0, 4
  %s9 = sld [smem:[%s8]]
  %s10 = scalar_lea.smem %s0, 5
  %s11 = sld [smem:[%s10]]
  %s12 = scalar_lea.smem %s0, 6
  %s13 = sld [smem:[%s12]]
  %s14 = scalar_lea.smem %s0, 7
  %s15 = sld [smem:[%s14]]
  %s16 = scalar_lea.smem %s0, 8
  %s17 = sld [smem:[%s16]]
  %s18 = scalar_lea.smem %s0, 9
  %s19 = sld [smem:[%s18]]
  %s20 = scalar_lea.smem %s0, 10
  %s21 = sld [smem:[%s20]]
  %s22 = scalar_lea.smem %s0, 11
  %s23 = sld [smem:[%s22]]
  %s24 = scalar_lea.smem %s0, 12
  %s25 = sld [smem:[%s24]]
  %s26 = scalar_lea.smem %s0, 13
  %s27 = sld [smem:[%s26]]
  %s28 = scalar_lea.smem %s0, 14
  %s29 = sld [smem:[%s28]]
  %s30 = scalar_lea.smem %s0, 15
  %s31 = sld [smem:[%s30]]
  %s32 = scalar_lea.smem %s0, 16
  %s33 = sld [smem:[%s32]]
  %s34 = scalar_lea.smem %s0, 17
  %s35 = sld [smem:[%s34]]
  %s36 = scalar_lea.smem %s0, 18
  %s37 = sld [smem:[%s36]]
  %s38 = scalar_lea.smem %s0, 19
  %s39 = sld [smem:[%s38]]
  %s40 = scalar_lea.smem %s0, 20
  %s41 = sld [smem:[%s40]]
  %s42 = scalar_lea.smem %s0, 21
  %s43 = sld [smem:[%s42]]
  %s44 = scalar_lea.smem %s0, 22
  %s45 = sld [smem:[%s44]]
  %s46 = scalar_lea.smem %s0, 23
  %s47 = sld [smem:[%s46]]
  %s48 = scalar_lea.smem %s0, 24
  %s49 = sld [smem:[%s48]]
  %s50 = scalar_lea.smem %s0, 25
  %s51 = sld [smem:[%s50]]
  %s52 = scalar_lea.smem %s0, 26
  %s53 = sld [smem:[%s52]]
  %s54 = scalar_lea.smem %s0, 27
  %s55 = sld [smem:[%s54]]
  %s56 = scalar_lea.smem %s0, 28
  %s57 = sld [smem:[%s56]]
  %s58 = scalar_lea.smem %s0, 29
  %s59 = sld [smem:[%s58]]
  %s60 = scalar_lea.smem %s0, 30
  %s61 = sld [smem:[%s60]]
  %s62 = sld [smem:[#allocation0]]
  $region134: #{forward.1} parent=0
    _
  %s64 = ssub.s32 1, %s62
  %s65 = scalar_select 0, %s64, %s62
  $region1: #{forward.1} parent=0
    #allocation2 [shape = 'u8[65536]{0}', space=vmem, size = 0x10000, scoped, tag = 'input window, operand 28, single buffered']
    #allocation3 [shape = 's32[1]{0}', space=sflag, size = 0x4, scoped, tag = 'scoped memory for forward.1']
    %66 = vsyncpa [#allocation3], 0
    // Predicated region
    $region2: #{forward.1} parent=1 // pred_check
      _
    $region3: #{forward.1} parent=1 // pred_check_branch
      %68 = sbr.rel (0) target = $region5
    $region4: #{forward.1} parent=1 // pred_region
      _
    $region5: #{forward.1} parent=1 // pred_fallthru
      _
    // Predicated region
    $region6: #{forward.1} parent=1 // pred_check
      _
    $region7: #{forward.1} parent=1 // pred_check_branch
      %70 = sbr.rel (0) target = $region9
    $region8: #{forward.1} parent=1 // pred_region
      _
    $region9: #{forward.1} parent=1 // pred_fallthru
      _
    // Predicated region
    $region10: #{forward.1} parent=1 // pred_check
      _
    $region11: #{forward.1} parent=1 // pred_check_branch
      %72 = sbr.rel (0) target = $region13
    $region12: #{forward.1} parent=1 // pred_region
      _
    $region13: #{forward.1} parent=1 // pred_fallthru
      _
    // Predicated region
    $region14: #{forward.1} parent=1 // pred_check
      _
    $region15: #{forward.1} parent=1 // pred_check_branch
      %74 = sbr.rel (0) target = $region17
    $region16: #{forward.1} parent=1 // pred_region
      _
    $region17: #{forward.1} parent=1 // pred_fallthru
      _
    // Predicated region
    $region18: #{forward.1} parent=1 // pred_check
      _
    $region19: #{forward.1} parent=1 // pred_check_branch
      %76 = sbr.rel (0) target = $region21
    $region20: #{forward.1} parent=1 // pred_region
      _
    $region21: #{forward.1} parent=1 // pred_fallthru
      _
    // Predicated region
    $region22: #{forward.1} parent=1 // pred_check
      _
    $region23: #{forward.1} parent=1 // pred_check_branch
      %78 = sbr.rel (0) target = $region25
    $region24: #{forward.1} parent=1 // pred_region
      _
    $region25: #{forward.1} parent=1 // pred_fallthru
      _
    // Predicated region
    $region26: #{forward.1} parent=1 // pred_check
      _
    $region27: #{forward.1} parent=1 // pred_check_branch
      %80 = sbr.rel (0) target = $region29
    $region28: #{forward.1} parent=1 // pred_region
      _
    $region29: #{forward.1} parent=1 // pred_fallthru
      _
    // Predicated region
    $region30: #{forward.1} parent=1 // pred_check
      _
    $region31: #{forward.1} parent=1 // pred_check_branch
      %82 = sbr.rel (0) target = $region33
    $region32: #{forward.1} parent=1 // pred_region
      _
    $region33: #{forward.1} parent=1 // pred_fallthru
      _
    // Predicated region
    $region34: #{forward.1} parent=1 // pred_check
      _
    $region35: #{forward.1} parent=1 // pred_check_branch
      %84 = sbr.rel (0) target = $region37
    $region36: #{forward.1} parent=1 // pred_region
      _
    $region37: #{forward.1} parent=1 // pred_fallthru
      _
    // Predicated region
    $region38: #{forward.1} parent=1 // pred_check
      _
    $region39: #{forward.1} parent=1 // pred_check_branch
      %86 = sbr.rel (0) target = $region41
    $region40: #{forward.1} parent=1 // pred_region
      _
    $region41: #{forward.1} parent=1 // pred_fallthru
      _
    // Predicated region
    $region42: #{forward.1} parent=1 // pred_check
      _
    $region43: #{forward.1} parent=1 // pred_check_branch
      %88 = sbr.rel (0) target = $region45
    $region44: #{forward.1} parent=1 // pred_region
      _
    $region45: #{forward.1} parent=1 // pred_fallthru
      _
    // Predicated region
    $region46: #{forward.1} parent=1 // pred_check
      _
    $region47: #{forward.1} parent=1 // pred_check_branch
      %90 = sbr.rel (0) target = $region49
    $region48: #{forward.1} parent=1 // pred_region
      _
    $region49: #{forward.1} parent=1 // pred_fallthru
      _
    // Predicated region
    $region50: #{forward.1} parent=1 // pred_check
      _
    $region51: #{forward.1} parent=1 // pred_check_branch
      %92 = sbr.rel (0) target = $region53
    $region52: #{forward.1} parent=1 // pred_region
      _
    $region53: #{forward.1} parent=1 // pred_fallthru
      _
    // Predicated region
    $region54: #{forward.1} parent=1 // pred_check
      _
    $region55: #{forward.1} parent=1 // pred_check_branch
      %94 = sbr.rel (0) target = $region57
    $region56: #{forward.1} parent=1 // pred_region
      _
    $region57: #{forward.1} parent=1 // pred_fallthru
      _
    // Predicated region
    $region58: #{forward.1} parent=1 // pred_check
      _
    $region59: #{forward.1} parent=1 // pred_check_branch
      %96 = sbr.rel (0) target = $region61
    $region60: #{forward.1} parent=1 // pred_region
      _
    $region61: #{forward.1} parent=1 // pred_fallthru
      _
    // Predicated region
    $region62: #{forward.1} parent=1 // pred_check
      _
    $region63: #{forward.1} parent=1 // pred_check_branch
      %98 = sbr.rel (0) target = $region65
    $region64: #{forward.1} parent=1 // pred_region
      _
    $region65: #{forward.1} parent=1 // pred_fallthru
      _
    // Predicated region
    $region66: #{forward.1} parent=1 // pred_check
      _
    $region67: #{forward.1} parent=1 // pred_check_branch
      %100 = sbr.rel (0) target = $region69
    $region68: #{forward.1} parent=1 // pred_region
      _
    $region69: #{forward.1} parent=1 // pred_fallthru
      _
    // Predicated region
    $region70: #{forward.1} parent=1 // pred_check
      _
    $region71: #{forward.1} parent=1 // pred_check_branch
      %102 = sbr.rel (0) target = $region73
    $region72: #{forward.1} parent=1 // pred_region
      _
    $region73: #{forward.1} parent=1 // pred_fallthru
      _
    // Predicated region
    $region74: #{forward.1} parent=1 // pred_check
      _
    $region75: #{forward.1} parent=1 // pred_check_branch
      %104 = sbr.rel (0) target = $region77
    $region76: #{forward.1} parent=1 // pred_region
      _
    $region77: #{forward.1} parent=1 // pred_fallthru
      _
    // Predicated region
    $region78: #{forward.1} parent=1 // pred_check
      _
    $region79: #{forward.1} parent=1 // pred_check_branch
      %106 = sbr.rel (0) target = $region81
    $region80: #{forward.1} parent=1 // pred_region
      _
    $region81: #{forward.1} parent=1 // pred_fallthru
      _
    // Predicated region
    $region82: #{forward.1} parent=1 // pred_check
      _
    $region83: #{forward.1} parent=1 // pred_check_branch
      %108 = sbr.rel (0) target = $region85
    $region84: #{forward.1} parent=1 // pred_region
      _
    $region85: #{forward.1} parent=1 // pred_fallthru
      _
    // Predicated region
    $region86: #{forward.1} parent=1 // pred_check
      _
    $region87: #{forward.1} parent=1 // pred_check_branch
      %110 = sbr.rel (0) target = $region89
    $region88: #{forward.1} parent=1 // pred_region
      _
    $region89: #{forward.1} parent=1 // pred_fallthru
      _
    // Predicated region
    $region90: #{forward.1} parent=1 // pred_check
      _
    $region91: #{forward.1} parent=1 // pred_check_branch
      %112 = sbr.rel (0) target = $region93
    $region92: #{forward.1} parent=1 // pred_region
      _
    $region93: #{forward.1} parent=1 // pred_fallthru
      _
    // Predicated region
    $region94: #{forward.1} parent=1 // pred_check
      _
    $region95: #{forward.1} parent=1 // pred_check_branch
      %114 = sbr.rel (0) target = $region97
    $region96: #{forward.1} parent=1 // pred_region
      _
    $region97: #{forward.1} parent=1 // pred_fallthru
      _
    // Predicated region
    $region98: #{forward.1} parent=1 // pred_check
      _
    $region99: #{forward.1} parent=1 // pred_check_branch
      %116 = sbr.rel (0) target = $region101
    $region100: #{forward.1} parent=1 // pred_region
      _
    $region101: #{forward.1} parent=1 // pred_fallthru
      _
    // Predicated region
    $region102: #{forward.1} parent=1 // pred_check
      _
    $region103: #{forward.1} parent=1 // pred_check_branch
      %118 = sbr.rel (0) target = $region105
    $region104: #{forward.1} parent=1 // pred_region
      _
    $region105: #{forward.1} parent=1 // pred_fallthru
      _
    // Predicated region
    $region106: #{forward.1} parent=1 // pred_check
      _
    $region107: #{forward.1} parent=1 // pred_check_branch
      %120 = sbr.rel (0) target = $region109
    $region108: #{forward.1} parent=1 // pred_region
      _
    $region109: #{forward.1} parent=1 // pred_fallthru
      _
    // Predicated region
    $region110: #{forward.1} parent=1 // pred_check
      _
    $region111: #{forward.1} parent=1 // pred_check_branch
      %122 = sbr.rel (0) target = $region113
    $region112: #{forward.1} parent=1 // pred_region
      _
    $region113: #{forward.1} parent=1 // pred_fallthru
      _
    // Predicated region
    $region114: #{forward.1} parent=1 // pred_check
      _
    $region115: #{forward.1} parent=1 // pred_check_branch
      %124 = sbr.rel (0) target = $region117
    $region116: #{forward.1} parent=1 // pred_region
      %s126 = ssub.s32 2048, 2048
      %127 = vsyncadd [#allocation3], %s126
      %s128 = sshll.u32 [#allocation2], 4
      %s129 = int_to_ptr.vmem [resolvable:$true] %s128
      %134 = dma.hbm_to_vmem [thread:$0]  %s57, 2048, %s129, [#allocation3], 128, 128, 8
    $region117: #{forward.1} parent=1 // pred_fallthru
      _
    // Predicated region
    $region118: #{forward.1} parent=1 // pred_check
      _
    $region119: #{forward.1} parent=1 // pred_check_branch
      %136 = sbr.rel (0) target = $region121
    $region120: #{forward.1} parent=1 // pred_region
      _
    $region121: #{forward.1} parent=1 // pred_fallthru
      _
    // Predicated region
    $region122: #{forward.1} parent=1 // pred_check
      _
    $region123: #{forward.1} parent=1 // pred_check_branch
      %138 = sbr.rel (0) target = $region125
    $region124: #{forward.1} parent=1 // pred_region
      %139 = dma.done [#allocation3], 2048
    $region125: #{forward.1} parent=1 // pred_fallthru
      _
    %v141 = vld [vmem:[%s1] sm:$0xf]
    %v142 = vld [vmem:[%s3] sm:$0xf]
    %v143 = vld [vmem:[%s1 + $0x4] sm:$0x1]
    %v144 = vld [vmem:[%s3 + $0x4] sm:$0x1]
    %v145 = vld [vmem:[%s1] sm:$0xe]
    %v146 = vld [vmem:[%s3] sm:$0xe]
    %v147 = vld [vmem:[%s1 + $0x4] sm:$0x3]
    %v150 = vunpack.c.l.b16 %v141
    %v151 = vunpack.c.l.b16 %v143
    %v152 = vpack.c.b16 %v151, %v150
    %v154 = vshrl.u32 %v152, 16
    %v156 = vshll.u32 %v152, 16
    %v158 = vrot.slane %v156, 1
    %v159 = vor.u32 %v154, %v158
    %v163 = vunpack.c.l.b16 %v142
    %v164 = vunpack.c.l.b16 %v144
    %v165 = vpack.c.b16 %v164, %v163
    %v167 = vshrl.u32 %v165, 16
    %v169 = vshll.u32 %v165, 16
    %v171 = vrot.slane %v169, 1
    %v172 = vor.u32 %v167, %v171
    %v175 = vunpack.c.l.b16 %v145
    %v176 = vpack.c.b16 %v151, %v175
    %v177 = vrot.slane %v176, 1
    %v180 = vunpack.c.l.b16 %v146
    %v181 = vpack.c.b16 %v164, %v180
    %v182 = vrot.slane %v181, 1
    %v185 = vunpack.c.l.b16 %v147
    %v186 = vpack.c.b16 %v185, %v175
    %v188 = vshrl.u32 %v186, 16
    %v190 = vrot.slane %v188, 1
    %v191 = vshll.u32 %v186, 16
    %v193 = vrot.slane %v191, 2
    %v194 = vor.u32 %v190, %v193
    %v196 = vld [vmem:[%s5] sm:$0xf]
    %v197 = vld [vmem:[%s5 + $0x4] sm:$0xf]
    %v198 = vld [vmem:[%s5 + $0x8] sm:$0xf]
    %v199 = vld [vmem:[%s5 + $0xc] sm:$0xf]
    %v200 = vld [vmem:[%s5 + $0x10] sm:$0xf]
    %v201 = vld [vmem:[%s5 + $0x14] sm:$0xf]
    %v202 = vld [vmem:[%s5 + $0x18] sm:$0xf]
    %v203 = vld [vmem:[%s5 + $0x1c] sm:$0xf]
    %v204 = vld [vmem:[%s5 + $0x20] sm:$0xf]
    %v205 = vld [vmem:[%s5 + $0x24] sm:$0xf]
    %v206 = vld [vmem:[%s5 + $0x28] sm:$0xf]
    %v207 = vld [vmem:[%s5 + $0x2c] sm:$0xf]
    %v208 = vld [vmem:[%s5 + $0x30] sm:$0xf]
    %v209 = vld [vmem:[%s5 + $0x34] sm:$0xf]
    %v210 = vld [vmem:[%s5 + $0x38] sm:$0xf]
    %v211 = vld [vmem:[%s5 + $0x3c] sm:$0xf]
    %v212 = vld [vmem:[%s5 + $0x40] sm:$0xf]
    %v213 = vld [vmem:[%s5 + $0x44] sm:$0xf]
    %v214 = vld [vmem:[%s5 + $0x48] sm:$0xf]
    %v215 = vld [vmem:[%s5 + $0x4c] sm:$0xf]
    %v216 = vld [vmem:[%s5 + $0x50] sm:$0xf]
    %v217 = vld [vmem:[%s5 + $0x54] sm:$0xf]
    %v218 = vld [vmem:[%s5 + $0x58] sm:$0xf]
    %v219 = vld [vmem:[%s5 + $0x5c] sm:$0xf]
    %v220 = vld [vmem:[%s5 + $0x60] sm:$0xf]
    %v221 = vld [vmem:[%s5 + $0x64] sm:$0xf]
    %v222 = vld [vmem:[%s5 + $0x68] sm:$0xf]
    %v223 = vld [vmem:[%s5 + $0x6c] sm:$0xf]
    %v224 = vld [vmem:[%s5 + $0x70] sm:$0xf]
    %v225 = vld [vmem:[%s5 + $0x74] sm:$0xf]
    %v226 = vld [vmem:[%s5 + $0x78] sm:$0xf]
    %v227 = vld [vmem:[%s5 + $0x7c] sm:$0xf]
    %v228 = vld [vmem:[%s5 + $0x80] sm:$0xf]
    %v229 = vld [vmem:[%s5 + $0x84] sm:$0xf]
    %v230 = vld [vmem:[%s5 + $0x88] sm:$0xf]
    %v231 = vld [vmem:[%s5 + $0x8c] sm:$0xf]
    %v232 = vld [vmem:[%s5 + $0x90] sm:$0xf]
    %v233 = vld [vmem:[%s5 + $0x94] sm:$0xf]
    %v234 = vld [vmem:[%s5 + $0x98] sm:$0xf]
    %v235 = vld [vmem:[%s5 + $0x9c] sm:$0xf]
    %v236 = vld [vmem:[%s5 + $0xa0] sm:$0xf]
    %v237 = vld [vmem:[%s5 + $0xa4] sm:$0xf]
    %v238 = vld [vmem:[%s5 + $0xa8] sm:$0xf]
    %v239 = vld [vmem:[%s5 + $0xac] sm:$0xf]
    %v240 = vld [vmem:[%s5 + $0xb0] sm:$0xf]
    %v241 = vld [vmem:[%s5 + $0xb4] sm:$0xf]
    %v242 = vld [vmem:[%s5 + $0xb8] sm:$0xf]
    %v243 = vld [vmem:[%s5 + $0xbc] sm:$0xf]
    %v244 = vld [vmem:[%s5 + $0xc0] sm:$0xf]
    %v245 = vld [vmem:[%s5 + $0xc4] sm:$0xf]
    %v246 = vld [vmem:[%s5 + $0xc8] sm:$0xf]
    %v247 = vld [vmem:[%s5 + $0xcc] sm:$0xf]
    %v248 = vld [vmem:[%s5 + $0xd0] sm:$0xf]
    %v249 = vld [vmem:[%s5 + $0xd4] sm:$0xf]
    %v250 = vld [vmem:[%s5 + $0xd8] sm:$0xf]
    %v251 = vld [vmem:[%s5 + $0xdc] sm:$0xf]
    %v252 = vld [vmem:[%s5 + $0xe0] sm:$0xf]
    %v253 = vld [vmem:[%s5 + $0xe4] sm:$0xf]
    %v254 = vld [vmem:[%s5 + $0xe8] sm:$0xf]
    %v255 = vld [vmem:[%s5 + $0xec] sm:$0xf]
    %v256 = vld [vmem:[%s5 + $0xf0] sm:$0xf]
    %v257 = vld [vmem:[%s5 + $0xf4] sm:$0xf]
    %v258 = vld [vmem:[%s5 + $0xf8] sm:$0xf]
    %v259 = vld [vmem:[%s5 + $0xfc] sm:$0xf]
    %v260 = vld [vmem:[%s5 + $0x100] sm:$0xf]
    %v261 = vld [vmem:[%s5 + $0x104] sm:$0xf]
    %v262 = vld [vmem:[%s5 + $0x108] sm:$0xf]
    %v263 = vld [vmem:[%s5 + $0x10c] sm:$0xf]
    %v264 = vld [vmem:[%s5 + $0x110] sm:$0xf]
    %v265 = vld [vmem:[%s5 + $0x114] sm:$0xf]
    %v266 = vld [vmem:[%s5 + $0x118] sm:$0xf]
    %v267 = vld [vmem:[%s5 + $0x11c] sm:$0xf]
    %v268 = vld [vmem:[%s5 + $0x120] sm:$0xf]
    %v269 = vld [vmem:[%s5 + $0x124] sm:$0xf]
    %v270 = vld [vmem:[%s5 + $0x128] sm:$0xf]
    %v271 = vld [vmem:[%s5 + $0x12c] sm:$0xf]
    %v272 = vld [vmem:[%s5 + $0x130] sm:$0xf]
    %v273 = vld [vmem:[%s5 + $0x134] sm:$0xf]
    %v274 = vld [vmem:[%s5 + $0x138] sm:$0xf]
    %v275 = vld [vmem:[%s5 + $0x13c] sm:$0xf]
    %v276 = vld [vmem:[%s5 + $0x140] sm:$0xf]
    %v277 = vld [vmem:[%s5 + $0x144] sm:$0xf]
    %v278 = vld [vmem:[%s5 + $0x148] sm:$0xf]
    %v279 = vld [vmem:[%s5 + $0x14c] sm:$0xf]
    %v280 = vld [vmem:[%s5 + $0x150] sm:$0xf]
    %v281 = vld [vmem:[%s5 + $0x154] sm:$0xf]
    %v282 = vld [vmem:[%s5 + $0x158] sm:$0xf]
    %v283 = vld [vmem:[%s5 + $0x15c] sm:$0xf]
    %v284 = vld [vmem:[%s5 + $0x160] sm:$0xf]
    %v285 = vld [vmem:[%s5 + $0x164] sm:$0xf]
    %v286 = vld [vmem:[%s5 + $0x168] sm:$0xf]
    %v287 = vld [vmem:[%s5 + $0x16c] sm:$0xf]
    %v288 = vld [vmem:[%s5 + $0x170] sm:$0xf]
    %v289 = vld [vmem:[%s5 + $0x174] sm:$0xf]
    %v290 = vld [vmem:[%s5 + $0x178] sm:$0xf]
    %v291 = vld [vmem:[%s5 + $0x17c] sm:$0xf]
    %v292 = vld [vmem:[%s5 + $0x180] sm:$0xf]
    %v293 = vld [vmem:[%s5 + $0x184] sm:$0xf]
    %v294 = vld [vmem:[%s5 + $0x188] sm:$0xf]
    %v295 = vld [vmem:[%s5 + $0x18c] sm:$0xf]
    %v296 = vld [vmem:[%s5 + $0x190] sm:$0xf]
    %v297 = vld [vmem:[%s5 + $0x194] sm:$0xf]
    %v298 = vld [vmem:[%s5 + $0x198] sm:$0xf]
    %v299 = vld [vmem:[%s5 + $0x19c] sm:$0xf]
    %v300 = vld [vmem:[%s5 + $0x1a0] sm:$0xf]
    %v301 = vld [vmem:[%s5 + $0x1a4] sm:$0xf]
    %v302 = vld [vmem:[%s5 + $0x1a8] sm:$0xf]
    %v303 = vld [vmem:[%s5 + $0x1ac] sm:$0xf]
    %v304 = vld [vmem:[%s5 + $0x1b0] sm:$0xf]
    %v305 = vld [vmem:[%s5 + $0x1b4] sm:$0xf]
    %v306 = vld [vmem:[%s5 + $0x1b8] sm:$0xf]
    %v307 = vld [vmem:[%s5 + $0x1bc] sm:$0xf]
    %v308 = vld [vmem:[%s7] sm:$0x1]
    %v310 = vlaneseq
    %v311 = vshrl.u32 %v310, 7
    %v312 = vsub.s32 0, %v311
    %v313 = vrot.slane %v308, %v312
    %v427 = vunpack.c.l.b16 %v196
    %v428 = vunpack.c.l.b16 %v197
    %v429 = vunpack.c.l.b16 %v198
    %v430 = vunpack.c.l.b16 %v199
    %v431 = vunpack.c.l.b16 %v200
    %v432 = vunpack.c.l.b16 %v201
    %v433 = vunpack.c.l.b16 %v202
    %v434 = vunpack.c.l.b16 %v203
    %v435 = vunpack.c.l.b16 %v204
    %v436 = vunpack.c.l.b16 %v205
    %v437 = vunpack.c.l.b16 %v206
    %v438 = vunpack.c.l.b16 %v207
    %v439 = vunpack.c.l.b16 %v208
    %v440 = vunpack.c.l.b16 %v209
    %v441 = vunpack.c.l.b16 %v210
    %v442 = vunpack.c.l.b16 %v211
    %v443 = vunpack.c.l.b16 %v212
    %v444 = vunpack.c.l.b16 %v213
    %v445 = vunpack.c.l.b16 %v214
    %v446 = vunpack.c.l.b16 %v215
    %v447 = vunpack.c.l.b16 %v216
    %v448 = vunpack.c.l.b16 %v217
    %v449 = vunpack.c.l.b16 %v218
    %v450 = vunpack.c.l.b16 %v219
    %v451 = vunpack.c.l.b16 %v220
    %v452 = vunpack.c.l.b16 %v221
    %v453 = vunpack.c.l.b16 %v222
    %v454 = vunpack.c.l.b16 %v223
    %v455 = vunpack.c.l.b16 %v224
    %v456 = vunpack.c.l.b16 %v225
    %v457 = vunpack.c.l.b16 %v226
    %v458 = vunpack.c.l.b16 %v227
    %v459 = vunpack.c.l.b16 %v228
    %v460 = vunpack.c.l.b16 %v229
    %v461 = vunpack.c.l.b16 %v230
    %v462 = vunpack.c.l.b16 %v231
    %v463 = vunpack.c.l.b16 %v232
    %v464 = vunpack.c.l.b16 %v233
    %v465 = vunpack.c.l.b16 %v234
    %v466 = vunpack.c.l.b16 %v235
    %v467 = vunpack.c.l.b16 %v236
    %v468 = vunpack.c.l.b16 %v237
    %v469 = vunpack.c.l.b16 %v238
    %v470 = vunpack.c.l.b16 %v239
    %v471 = vunpack.c.l.b16 %v240
    %v472 = vunpack.c.l.b16 %v241
    %v473 = vunpack.c.l.b16 %v242
    %v474 = vunpack.c.l.b16 %v243
    %v475 = vunpack.c.l.b16 %v244
    %v476 = vunpack.c.l.b16 %v245
    %v477 = vunpack.c.l.b16 %v246
    %v478 = vunpack.c.l.b16 %v247
    %v479 = vunpack.c.l.b16 %v248
    %v480 = vunpack.c.l.b16 %v249
    %v481 = vunpack.c.l.b16 %v250
    %v482 = vunpack.c.l.b16 %v251
    %v483 = vunpack.c.l.b16 %v252
    %v484 = vunpack.c.l.b16 %v253
    %v485 = vunpack.c.l.b16 %v254
    %v486 = vunpack.c.l.b16 %v255
    %v487 = vunpack.c.l.b16 %v256
    %v488 = vunpack.c.l.b16 %v257
    %v489 = vunpack.c.l.b16 %v258
    %v490 = vunpack.c.l.b16 %v259
    %v491 = vunpack.c.l.b16 %v260
    %v492 = vunpack.c.l.b16 %v261
    %v493 = vunpack.c.l.b16 %v262
    %v494 = vunpack.c.l.b16 %v263
    %v495 = vunpack.c.l.b16 %v264
    %v496 = vunpack.c.l.b16 %v265
    %v497 = vunpack.c.l.b16 %v266
    %v498 = vunpack.c.l.b16 %v267
    %v499 = vunpack.c.l.b16 %v268
    %v500 = vunpack.c.l.b16 %v269
    %v501 = vunpack.c.l.b16 %v270
    %v502 = vunpack.c.l.b16 %v271
    %v503 = vunpack.c.l.b16 %v272
    %v504 = vunpack.c.l.b16 %v273
    %v505 = vunpack.c.l.b16 %v274
    %v506 = vunpack.c.l.b16 %v275
    %v507 = vunpack.c.l.b16 %v276
    %v508 = vunpack.c.l.b16 %v277
    %v509 = vunpack.c.l.b16 %v278
    %v510 = vunpack.c.l.b16 %v279
    %v511 = vunpack.c.l.b16 %v280
    %v512 = vunpack.c.l.b16 %v281
    %v513 = vunpack.c.l.b16 %v282
    %v514 = vunpack.c.l.b16 %v283
    %v515 = vunpack.c.l.b16 %v284
    %v516 = vunpack.c.l.b16 %v285
    %v517 = vunpack.c.l.b16 %v286
    %v518 = vunpack.c.l.b16 %v287
    %v519 = vunpack.c.l.b16 %v288
    %v520 = vunpack.c.l.b16 %v289
    %v521 = vunpack.c.l.b16 %v290
    %v522 = vunpack.c.l.b16 %v291
    %v523 = vunpack.c.l.b16 %v292
    %v524 = vunpack.c.l.b16 %v293
    %v525 = vunpack.c.l.b16 %v294
    %v526 = vunpack.c.l.b16 %v295
    %v527 = vunpack.c.l.b16 %v296
    %v528 = vunpack.c.l.b16 %v297
    %v529 = vunpack.c.l.b16 %v298
    %v530 = vunpack.c.l.b16 %v299
    %v531 = vunpack.c.l.b16 %v300
    %v532 = vunpack.c.l.b16 %v301
    %v533 = vunpack.c.l.b16 %v302
    %v534 = vunpack.c.l.b16 %v303
    %v535 = vunpack.c.l.b16 %v304
    %v536 = vunpack.c.l.b16 %v305
    %v537 = vunpack.c.l.b16 %v306
    %v538 = vunpack.c.l.b16 %v307
    %v539 = vpack.c.b16 %v428, %v427
    %v540 = vpack.c.b16 %v430, %v429
    %v541 = vpack.c.b16 %v432, %v431
    %v542 = vpack.c.b16 %v434, %v433
    %v543 = vpack.c.b16 %v436, %v435
    %v544 = vpack.c.b16 %v438, %v437
    %v545 = vpack.c.b16 %v440, %v439
    %v546 = vpack.c.b16 %v442, %v441
    %v547 = vpack.c.b16 %v444, %v443
    %v548 = vpack.c.b16 %v446, %v445
    %v549 = vpack.c.b16 %v448, %v447
    %v550 = vpack.c.b16 %v450, %v449
    %v551 = vpack.c.b16 %v452, %v451
    %v552 = vpack.c.b16 %v454, %v453
    %v553 = vpack.c.b16 %v456, %v455
    %v554 = vpack.c.b16 %v458, %v457
    %v555 = vpack.c.b16 %v460, %v459
    %v556 = vpack.c.b16 %v462, %v461
    %v557 = vpack.c.b16 %v464, %v463
    %v558 = vpack.c.b16 %v466, %v465
    %v559 = vpack.c.b16 %v468, %v467
    %v560 = vpack.c.b16 %v470, %v469
    %v561 = vpack.c.b16 %v472, %v471
    %v562 = vpack.c.b16 %v474, %v473
    %v563 = vpack.c.b16 %v476, %v475
    %v564 = vpack.c.b16 %v478, %v477
    %v565 = vpack.c.b16 %v480, %v479
    %v566 = vpack.c.b16 %v482, %v481
    %v567 = vpack.c.b16 %v484, %v483
    %v568 = vpack.c.b16 %v486, %v485
    %v569 = vpack.c.b16 %v488, %v487
    %v570 = vpack.c.b16 %v490, %v489
    %v571 = vpack.c.b16 %v492, %v491
    %v572 = vpack.c.b16 %v494, %v493
    %v573 = vpack.c.b16 %v496, %v495
    %v574 = vpack.c.b16 %v498, %v497
    %v575 = vpack.c.b16 %v500, %v499
    %v576 = vpack.c.b16 %v502, %v501
    %v577 = vpack.c.b16 %v504, %v503
    %v578 = vpack.c.b16 %v506, %v505
    %v579 = vpack.c.b16 %v508, %v507
    %v580 = vpack.c.b16 %v510, %v509
    %v581 = vpack.c.b16 %v512, %v511
    %v582 = vpack.c.b16 %v514, %v513
    %v583 = vpack.c.b16 %v516, %v515
    %v584 = vpack.c.b16 %v518, %v517
    %v585 = vpack.c.b16 %v520, %v519
    %v586 = vpack.c.b16 %v522, %v521
    %v587 = vpack.c.b16 %v524, %v523
    %v588 = vpack.c.b16 %v526, %v525
    %v589 = vpack.c.b16 %v528, %v527
    %v590 = vpack.c.b16 %v530, %v529
    %v591 = vpack.c.b16 %v532, %v531
    %v592 = vpack.c.b16 %v534, %v533
    %v593 = vpack.c.b16 %v536, %v535
    %v594 = vpack.c.b16 %v538, %v537
    %651 = vmatprep.subr.bf16.mxu0 0
    %652 = vmatpush1.bf16.msra.mxu0 %v539
    %653 = vmatprep.subr.bf16.mxu0 0
    %654 = vmatpush1.bf16.msra.mxu0 %v540
    %655 = vmatprep.subr.bf16.mxu0 0
    %656 = vmatpush1.bf16.msra.mxu0 %v541
    %657 = vmatprep.subr.bf16.mxu0 0
    %658 = vmatpush1.bf16.msra.mxu0 %v542
    %659 = vmatprep.subr.bf16.mxu0 0
    %660 = vmatpush1.bf16.msra.mxu0 %v543
    %661 = vmatprep.subr.bf16.mxu0 0
    %662 = vmatpush1.bf16.msra.mxu0 %v544
    %663 = vmatprep.subr.bf16.mxu0 0
    %664 = vmatpush1.bf16.msra.mxu0 %v545
    %665 = vmatprep.subr.bf16.mxu0 0
    %666 = vmatpush1.bf16.msra.mxu0 %v546
    %667 = vmatprep.subr.bf16.mxu0 0
    %668 = vmatpush1.bf16.msra.mxu0 %v547
    %669 = vmatprep.subr.bf16.mxu0 0
    %670 = vmatpush1.bf16.msra.mxu0 %v548
    %671 = vmatprep.subr.bf16.mxu0 0
    %672 = vmatpush1.bf16.msra.mxu0 %v549
    %673 = vmatprep.subr.bf16.mxu0 0
    %674 = vmatpush1.bf16.msra.mxu0 %v550
    %675 = vmatprep.subr.bf16.mxu0 0
    %676 = vmatpush1.bf16.msra.mxu0 %v551
    %677 = vmatprep.subr.bf16.mxu0 0
    %678 = vmatpush1.bf16.msra.mxu0 %v552
    %679 = vmatprep.subr.bf16.mxu0 0
    %680 = vmatpush1.bf16.msra.mxu0 %v553
    %681 = vmatprep.subr.bf16.mxu0 0
    %682 = vmatpush1.bf16.msra.mxu0 %v554
    %683 = vmatprep.mubr.bf16.mxu0 %v142
    %684 = vmatmul.mubr.bf16.gmra.mrb[0].mxu0 %v141
    %v685 = vpop.f32.mrb[0].mxu0
    %v686 = vadd.f32 %v313, %v685
    %v687 = vpop.f32.mrb[0].mxu0
    %v688 = vpop.f32.mrb[0].mxu0
    %v689 = vpop.f32.mrb[0].mxu0
    %690 = vdwg.mxu0
    %691 = vmatprep.subr.bf16.mxu0 0
    %692 = vmatpush1.bf16.msra.mxu0 %v555
    %693 = vmatprep.subr.bf16.mxu0 0
    %694 = vmatpush1.bf16.msra.mxu0 %v556
    %695 = vmatprep.subr.bf16.mxu0 0
    %696 = vmatpush1.bf16.msra.mxu0 %v557
    %697 = vmatprep.subr.bf16.mxu0 0
    %698 = vmatpush1.bf16.msra.mxu0 %v558
    %699 = vmatprep.subr.bf16.mxu0 0
    %700 = vmatpush1.bf16.msra.mxu0 %v559
    %701 = vmatprep.subr.bf16.mxu0 0
    %702 = vmatpush1.bf16.msra.mxu0 %v560
    %703 = vmatprep.subr.bf16.mxu0 0
    %704 = vmatpush1.bf16.msra.mxu0 %v561
    %705 = vmatprep.subr.bf16.mxu0 0
    %706 = vmatpush1.bf16.msra.mxu0 %v562
    %707 = vmatprep.subr.bf16.mxu0 0
    %708 = vmatpush1.bf16.msra.mxu0 %v563
    %709 = vmatprep.subr.bf16.mxu0 0
    %710 = vmatpush1.bf16.msra.mxu0 %v564
    %711 = vmatprep.subr.bf16.mxu0 0
    %712 = vmatpush1.bf16.msra.mxu0 %v565
    %713 = vmatprep.subr.bf16.mxu0 0
    %714 = vmatpush1.bf16.msra.mxu0 %v566
    %715 = vmatprep.subr.bf16.mxu0 0
    %716 = vmatpush1.bf16.msra.mxu0 %v567
    %717 = vmatprep.subr.bf16.mxu0 0
    %718 = vmatpush1.bf16.msra.mxu0 %v568
    %719 = vmatprep.subr.bf16.mxu0 0
    %720 = vmatpush1.bf16.msra.mxu0 %v569
    %721 = vmatprep.subr.bf16.mxu0 0
    %722 = vmatpush1.bf16.msra.mxu0 %v570
    %723 = vmatprep.mubr.bf16.mxu0 %v172
    %724 = vmatmul.mubr.bf16.gmra.mrb[0].mxu0 %v159
    %v725 = vpop.f32.mrb[0].mxu0
    %v726 = vadd.f32 %v686, %v725
    %v727 = vpop.f32.mrb[0].mxu0
    %v728 = vpop.f32.mrb[0].mxu0
    %v729 = vpop.f32.mrb[0].mxu0
    %730 = vdwg.mxu0
    %731 = vmatprep.subr.bf16.mxu0 0
    %732 = vmatpush1.bf16.msra.mxu0 %v571
    %733 = vmatprep.subr.bf16.mxu0 0
    %734 = vmatpush1.bf16.msra.mxu0 %v572
    %735 = vmatprep.subr.bf16.mxu0 0
    %736 = vmatpush1.bf16.msra.mxu0 %v573
    %737 = vmatprep.subr.bf16.mxu0 0
    %738 = vmatpush1.bf16.msra.mxu0 %v574
    %739 = vmatprep.subr.bf16.mxu0 0
    %740 = vmatpush1.bf16.msra.mxu0 %v575
    %741 = vmatprep.subr.bf16.mxu0 0
    %742 = vmatpush1.bf16.msra.mxu0 %v576
    %743 = vmatprep.subr.bf16.mxu0 0
    %744 = vmatpush1.bf16.msra.mxu0 %v577
    %745 = vmatprep.subr.bf16.mxu0 0
    %746 = vmatpush1.bf16.msra.mxu0 %v578
    %747 = vmatprep.subr.bf16.mxu0 0
    %748 = vmatpush1.bf16.msra.mxu0 %v579
    %749 = vmatprep.subr.bf16.mxu0 0
    %750 = vmatpush1.bf16.msra.mxu0 %v580
    %751 = vmatprep.subr.bf16.mxu0 0
    %752 = vmatpush1.bf16.msra.mxu0 %v581
    %753 = vmatprep.subr.bf16.mxu0 0
    %754 = vmatpush1.bf16.msra.mxu0 %v582
    %755 = vmatprep.subr.bf16.mxu0 0
    %756 = vmatpush1.bf16.msra.mxu0 %v583
    %757 = vmatprep.subr.bf16.mxu0 0
    %758 = vmatpush1.bf16.msra.mxu0 %v584
    %759 = vmatprep.subr.bf16.mxu0 0
    %760 = vmatpush1.bf16.msra.mxu0 %v585
    %761 = vmatprep.subr.bf16.mxu0 0
    %762 = vmatpush1.bf16.msra.mxu0 %v586
    %763 = vmatprep.mubr.bf16.mxu0 %v182
    %764 = vmatmul.mubr.bf16.gmra.mrb[0].mxu0 %v177
    %v765 = vpop.f32.mrb[0].mxu0
    %v766 = vadd.f32 %v726, %v765
    %v767 = vpop.f32.mrb[0].mxu0
    %v768 = vpop.f32.mrb[0].mxu0
    %v769 = vpop.f32.mrb[0].mxu0
    %770 = vdwg.mxu0
    %771 = vmatprep.subr.bf16.mxu0 0
    %772 = vmatpush1.bf16.msra.mxu0 %v587
    %773 = vmatprep.subr.bf16.mxu0 0
    %774 = vmatpush1.bf16.msra.mxu0 %v588
    %775 = vmatprep.subr.bf16.mxu0 0
    %776 = vmatpush1.bf16.msra.mxu0 %v589
    %777 = vmatprep.subr.bf16.mxu0 0
    %778 = vmatpush1.bf16.msra.mxu0 %v590
    %779 = vmatprep.subr.bf16.mxu0 0
    %780 = vmatpush1.bf16.msra.mxu0 %v591
    %781 = vmatprep.subr.bf16.mxu0 0
    %782 = vmatpush1.bf16.msra.mxu0 %v592
    %783 = vmatprep.subr.bf16.mxu0 0
    %784 = vmatpush1.bf16.msra.mxu0 %v593
    %785 = vmatprep.subr.bf16.mxu0 0
    %786 = vmatpush1.bf16.msra.mxu0 %v594
    %787 = vmatprep.subr.bf16.mxu0 0
    %788 = vmatpush1.bf16.msra.mxu0 0
    %789 = vmatprep.subr.bf16.mxu0 0
    %790 = vmatpush1.bf16.msra.mxu0 0
    %791 = vmatprep.subr.bf16.mxu0 0
    %792 = vmatpush1.bf16.msra.mxu0 0
    %793 = vmatprep.subr.bf16.mxu0 0
    %794 = vmatpush1.bf16.msra.mxu0 0
    %795 = vmatprep.subr.bf16.mxu0 0
    %796 = vmatpush1.bf16.msra.mxu0 0
    %797 = vmatprep.subr.bf16.mxu0 0
    %798 = vmatpush1.bf16.msra.mxu0 0
    %799 = vmatprep.subr.bf16.mxu0 0
    %800 = vmatpush1.bf16.msra.mxu0 0
    %801 = vmatprep.subr.bf16.mxu0 0
    %802 = vmatpush1.bf16.msra.mxu0 0
    %803 = vmatprep.mubr.bf16.mxu0 0
    %804 = vmatmul.mubr.bf16.gmra.mrb[0].mxu0 %v194
    %v805 = vpop.f32.mrb[0].mxu0
    %v806 = vadd.f32 %v766, %v805
    %v807 = vpop.f32.mrb[0].mxu0
    %v808 = vpop.f32.mrb[0].mxu0
    %v809 = vpop.f32.mrb[0].mxu0
    %810 = vdwg.mxu0
    %v811 = vmax.f32 %v806, 0.0
    %v812 = vlaneseq
    %v813 = vand.u32 %v812, 127
    %vm814 = vcmp.lt.s32.totalorder %v813, 112
    %815 = vrot.lane.b32.xlu0 %v811, 112
    %v816 = vpop.permute.xlu0 %815
    %v817 = vsel %vm814, %v816, 0.0
    %vm818 = vcmp.ge.s32.totalorder %v813, 16
    %819 = vrot.lane.b32.xlu0 %v811, 16
    %v820 = vpop.permute.xlu0 %819
    %v821 = vsel %vm818, %v820, 0.0
    %v822 = vmax.f32 %v817, %v821
    %v823 = vmax.f32 %v811, %v822
    %v825 = vrot.slane %v823, 7
    %vm827 = vcmask 1040384
    %v828 = vsel %vm827, 0.0, %v825
    %v829 = vrot.slane %v823, 1
    %vm831 = vcmask 1046528
    %v832 = vsel %vm831, %v829, 0.0
    %v833 = vmax.f32 %v828, %v832
    %v834 = vmax.f32 %v823, %v833
    %v836 = vrot.slane %v834, 1
    %v838 = vrot.slane %v834, 2
    %v840 = vrot.slane %v834, 3
    %v842 = vsel %vm827, %v834, %v836
    %vm843 = vcmask 1041408
    %v844 = vsel %vm843, %v842, %v838
    %vm845 = vcmask 1042432
    %v846 = vsel %vm845, %v844, %v840
    %v847 = vpack.c.bf16 %v846, %v846
    %v849 = vshrl.u32 %v847, 16
    %v851 = vrot.slane %v849, 7
    %v852 = vshll.u32 %v847, 16
    %v854 = vor.u32 %v851, %v852
    %vm856 = vcmask 1040384
    %vm857 = vsmask.f32 256
    %vm858 = vmand %vm856, %vm857
    %v859 = vsel %vm858, 0, %v854
    %vm860 = vcmask 1042432
    %vm861 = vsmask.f32 2304
    %vm862 = vmand %vm860, %vm861
    %v863 = vsel %vm862, %v859, 0
    %v865 = vshrl.u32 %v863, 16
    %v867 = vshll.u32 %v863, 16
    %v869 = vrot.slane %v867, 1
    %v870 = vor.u32 %v865, %v869
    %v873 = vrot.slane %v863, 1
    %v875 = vld [vmem:[%s9] sm:$0xf]
    %v876 = vld [vmem:[%s9 + $0x4] sm:$0xf]
    %v877 = vld [vmem:[%s9 + $0x8] sm:$0xf]
    %v878 = vld [vmem:[%s9 + $0xc] sm:$0xf]
    %v879 = vld [vmem:[%s9 + $0x10] sm:$0xf]
    %v880 = vld [vmem:[%s9 + $0x14] sm:$0xf]
    %v881 = vld [vmem:[%s9 + $0x18] sm:$0xf]
    %v882 = vld [vmem:[%s9 + $0x1c] sm:$0xf]
    %v883 = vld [vmem:[%s9 + $0x20] sm:$0xf]
    %v884 = vld [vmem:[%s9 + $0x24] sm:$0xf]
    %v885 = vld [vmem:[%s9 + $0x28] sm:$0xf]
    %v886 = vld [vmem:[%s9 + $0x2c] sm:$0xf]
    %v887 = vld [vmem:[%s9 + $0x30] sm:$0xf]
    %v888 = vld [vmem:[%s9 + $0x34] sm:$0xf]
    %v889 = vld [vmem:[%s9 + $0x38] sm:$0xf]
    %v890 = vld [vmem:[%s9 + $0x3c] sm:$0xf]
    %v891 = vld [vmem:[%s9 + $0x40] sm:$0xf]
    %v892 = vld [vmem:[%s9 + $0x44] sm:$0xf]
    %v893 = vld [vmem:[%s9 + $0x48] sm:$0xf]
    %v894 = vld [vmem:[%s9 + $0x4c] sm:$0xf]
    %v895 = vld [vmem:[%s9 + $0x50] sm:$0xf]
    %v896 = vld [vmem:[%s9 + $0x54] sm:$0xf]
    %v897 = vld [vmem:[%s9 + $0x58] sm:$0xf]
    %v898 = vld [vmem:[%s9 + $0x5c] sm:$0xf]
    %v899 = vld [vmem:[%s9 + $0x60] sm:$0xf]
    %v900 = vld [vmem:[%s9 + $0x64] sm:$0xf]
    %v901 = vld [vmem:[%s9 + $0x68] sm:$0xf]
    %v902 = vld [vmem:[%s9 + $0x6c] sm:$0xf]
    %v903 = vld [vmem:[%s9 + $0x70] sm:$0xf]
    %v904 = vld [vmem:[%s9 + $0x74] sm:$0xf]
    %v905 = vld [vmem:[%s9 + $0x78] sm:$0xf]
    %v906 = vld [vmem:[%s9 + $0x7c] sm:$0xf]
    %v907 = vld [vmem:[%s9 + $0x80] sm:$0xf]
    %v908 = vld [vmem:[%s9 + $0x84] sm:$0xf]
    %v909 = vld [vmem:[%s9 + $0x88] sm:$0xf]
    %v910 = vld [vmem:[%s9 + $0x8c] sm:$0xf]
    %v911 = vld [vmem:[%s9 + $0x90] sm:$0xf]
    %v912 = vld [vmem:[%s9 + $0x94] sm:$0xf]
    %v913 = vld [vmem:[%s9 + $0x98] sm:$0xf]
    %v914 = vld [vmem:[%s9 + $0x9c] sm:$0xf]
    %v915 = vld [vmem:[%s9 + $0xa0] sm:$0xf]
    %v916 = vld [vmem:[%s9 + $0xa4] sm:$0xf]
    %v917 = vld [vmem:[%s9 + $0xa8] sm:$0xf]
    %v918 = vld [vmem:[%s9 + $0xac] sm:$0xf]
    %v919 = vld [vmem:[%s9 + $0xb0] sm:$0xf]
    %v920 = vld [vmem:[%s9 + $0xb4] sm:$0xf]
    %v921 = vld [vmem:[%s9 + $0xb8] sm:$0xf]
    %v922 = vld [vmem:[%s9 + $0xbc] sm:$0xf]
    %v923 = vld [vmem:[%s11] sm:$0x1]
    %v925 = vlaneseq
    %v926 = vshrl.u32 %v925, 7
    %v927 = vsub.s32 0, %v926
    %v928 = vrot.slane %v923, %v927
    %v978 = vunpack.c.l.b16 %v875
    %v979 = vunpack.c.l.b16 %v876
    %v980 = vunpack.c.l.b16 %v877
    %v981 = vunpack.c.l.b16 %v878
    %v982 = vunpack.c.l.b16 %v879
    %v983 = vunpack.c.l.b16 %v880
    %v984 = vunpack.c.l.b16 %v881
    %v985 = vunpack.c.l.b16 %v882
    %v986 = vunpack.c.l.b16 %v883
    %v987 = vunpack.c.l.b16 %v884
    %v988 = vunpack.c.l.b16 %v885
    %v989 = vunpack.c.l.b16 %v886
    %v990 = vunpack.c.l.b16 %v887
    %v991 = vunpack.c.l.b16 %v888
    %v992 = vunpack.c.l.b16 %v889
    %v993 = vunpack.c.l.b16 %v890
    %v994 = vunpack.c.l.b16 %v891
    %v995 = vunpack.c.l.b16 %v892
    %v996 = vunpack.c.l.b16 %v893
    %v997 = vunpack.c.l.b16 %v894
    %v998 = vunpack.c.l.b16 %v895
    %v999 = vunpack.c.l.b16 %v896
    %v1000 = vunpack.c.l.b16 %v897
    %v1001 = vunpack.c.l.b16 %v898
    %v1002 = vunpack.c.l.b16 %v899
    %v1003 = vunpack.c.l.b16 %v900
    %v1004 = vunpack.c.l.b16 %v901
    %v1005 = vunpack.c.l.b16 %v902
    %v1006 = vunpack.c.l.b16 %v903
    %v1007 = vunpack.c.l.b16 %v904
    %v1008 = vunpack.c.l.b16 %v905
    %v1009 = vunpack.c.l.b16 %v906
    %v1010 = vunpack.c.l.b16 %v907
    %v1011 = vunpack.c.l.b16 %v908
    %v1012 = vunpack.c.l.b16 %v909
    %v1013 = vunpack.c.l.b16 %v910
    %v1014 = vunpack.c.l.b16 %v911
    %v1015 = vunpack.c.l.b16 %v912
    %v1016 = vunpack.c.l.b16 %v913
    %v1017 = vunpack.c.l.b16 %v914
    %v1018 = vunpack.c.l.b16 %v915
    %v1019 = vunpack.c.l.b16 %v916
    %v1020 = vunpack.c.l.b16 %v917
    %v1021 = vunpack.c.l.b16 %v918
    %v1022 = vunpack.c.l.b16 %v919
    %v1023 = vunpack.c.l.b16 %v920
    %v1024 = vunpack.c.l.b16 %v921
    %v1025 = vunpack.c.l.b16 %v922
    %v1026 = vpack.c.b16 %v979, %v978
    %v1027 = vpack.c.b16 %v981, %v980
    %v1028 = vpack.c.b16 %v983, %v982
    %v1029 = vpack.c.b16 %v985, %v984
    %v1030 = vpack.c.b16 %v987, %v986
    %v1031 = vpack.c.b16 %v989, %v988
    %v1032 = vpack.c.b16 %v991, %v990
    %v1033 = vpack.c.b16 %v993, %v992
    %v1034 = vpack.c.b16 %v995, %v994
    %v1035 = vpack.c.b16 %v997, %v996
    %v1036 = vpack.c.b16 %v999, %v998
    %v1037 = vpack.c.b16 %v1001, %v1000
    %v1038 = vpack.c.b16 %v1003, %v1002
    %v1039 = vpack.c.b16 %v1005, %v1004
    %v1040 = vpack.c.b16 %v1007, %v1006
    %v1041 = vpack.c.b16 %v1009, %v1008
    %v1042 = vpack.c.b16 %v1011, %v1010
    %v1043 = vpack.c.b16 %v1013, %v1012
    %v1044 = vpack.c.b16 %v1015, %v1014
    %v1045 = vpack.c.b16 %v1017, %v1016
    %v1046 = vpack.c.b16 %v1019, %v1018
    %v1047 = vpack.c.b16 %v1021, %v1020
    %v1048 = vpack.c.b16 %v1023, %v1022
    %v1049 = vpack.c.b16 %v1025, %v1024
    %1074 = vmatprep.subr.bf16.mxu0 0
    %1075 = vmatpush1.bf16.msra.mxu0 %v1026
    %1076 = vmatprep.subr.bf16.mxu0 0
    %1077 = vmatpush1.bf16.msra.mxu0 %v1027
    %1078 = vmatprep.subr.bf16.mxu0 0
    %1079 = vmatpush1.bf16.msra.mxu0 %v1028
    %1080 = vmatprep.subr.bf16.mxu0 0
    %1081 = vmatpush1.bf16.msra.mxu0 %v1029
    %1082 = vmatprep.subr.bf16.mxu0 0
    %1083 = vmatpush1.bf16.msra.mxu0 %v1030
    %1084 = vmatprep.subr.bf16.mxu0 0
    %1085 = vmatpush1.bf16.msra.mxu0 %v1031
    %1086 = vmatprep.subr.bf16.mxu0 0
    %1087 = vmatpush1.bf16.msra.mxu0 %v1032
    %1088 = vmatprep.subr.bf16.mxu0 0
    %1089 = vmatpush1.bf16.msra.mxu0 %v1033
    %1090 = vmatprep.subr.bf16.mxu0 0
    %1091 = vmatpush1.bf16.msra.mxu0 %v1034
    %1092 = vmatprep.subr.bf16.mxu0 0
    %1093 = vmatpush1.bf16.msra.mxu0 %v1035
    %1094 = vmatprep.subr.bf16.mxu0 0
    %1095 = vmatpush1.bf16.msra.mxu0 %v1036
    %1096 = vmatprep.subr.bf16.mxu0 0
    %1097 = vmatpush1.bf16.msra.mxu0 %v1037
    %1098 = vmatprep.subr.bf16.mxu0 0
    %1099 = vmatpush1.bf16.msra.mxu0 %v1038
    %1100 = vmatprep.subr.bf16.mxu0 0
    %1101 = vmatpush1.bf16.msra.mxu0 %v1039
    %1102 = vmatprep.subr.bf16.mxu0 0
    %1103 = vmatpush1.bf16.msra.mxu0 %v1040
    %1104 = vmatprep.subr.bf16.mxu0 0
    %1105 = vmatpush1.bf16.msra.mxu0 %v1041
    %1106 = vmatprep.mubr.bf16.mxu0 %v870
    %1107 = vmatmul.mubr.bf16.gmra.mrb[0].mxu0 %v863
    %v1108 = vpop.f32.mrb[0].mxu0
    %v1109 = vadd.f32 %v928, %v1108
    %v1110 = vpop.f32.mrb[0].mxu0
    %v1111 = vpop.f32.mrb[0].mxu0
    %v1112 = vpop.f32.mrb[0].mxu0
    %1113 = vdwg.mxu0
    %1114 = vmatprep.subr.bf16.mxu0 0
    %1115 = vmatpush1.bf16.msra.mxu0 %v1042
    %1116 = vmatprep.subr.bf16.mxu0 0
    %1117 = vmatpush1.bf16.msra.mxu0 %v1043
    %1118 = vmatprep.subr.bf16.mxu0 0
    %1119 = vmatpush1.bf16.msra.mxu0 %v1044
    %1120 = vmatprep.subr.bf16.mxu0 0
    %1121 = vmatpush1.bf16.msra.mxu0 %v1045
    %1122 = vmatprep.subr.bf16.mxu0 0
    %1123 = vmatpush1.bf16.msra.mxu0 %v1046
    %1124 = vmatprep.subr.bf16.mxu0 0
    %1125 = vmatpush1.bf16.msra.mxu0 %v1047
    %1126 = vmatprep.subr.bf16.mxu0 0
    %1127 = vmatpush1.bf16.msra.mxu0 %v1048
    %1128 = vmatprep.subr.bf16.mxu0 0
    %1129 = vmatpush1.bf16.msra.mxu0 %v1049
    %1130 = vmatprep.subr.bf16.mxu0 0
    %1131 = vmatpush1.bf16.msra.mxu0 0
    %1132 = vmatprep.subr.bf16.mxu0 0
    %1133 = vmatpush1.bf16.msra.mxu0 0
    %1134 = vmatprep.subr.bf16.mxu0 0
    %1135 = vmatpush1.bf16.msra.mxu0 0
    %1136 = vmatprep.subr.bf16.mxu0 0
    %1137 = vmatpush1.bf16.msra.mxu0 0
    %1138 = vmatprep.subr.bf16.mxu0 0
    %1139 = vmatpush1.bf16.msra.mxu0 0
    %1140 = vmatprep.subr.bf16.mxu0 0
    %1141 = vmatpush1.bf16.msra.mxu0 0
    %1142 = vmatprep.subr.bf16.mxu0 0
    %1143 = vmatpush1.bf16.msra.mxu0 0
    %1144 = vmatprep.subr.bf16.mxu0 0
    %1145 = vmatpush1.bf16.msra.mxu0 0
    %1146 = vmatprep.mubr.bf16.mxu0 0
    %1147 = vmatmul.mubr.bf16.gmra.mrb[0].mxu0 %v873
    %v1148 = vpop.f32.mrb[0].mxu0
    %v1149 = vadd.f32 %v1109, %v1148
    %v1150 = vpop.f32.mrb[0].mxu0
    %v1151 = vpop.f32.mrb[0].mxu0
    %v1152 = vpop.f32.mrb[0].mxu0
    %1153 = vdwg.mxu0
    %v1154 = vmax.f32 %v1149, 0.0
    %v1155 = vpack.c.bf16 %v1154, %v1154
    %v1157 = vshrl.u32 %v1155, 16
    %v1159 = vrot.slane %v1157, 7
    %v1160 = vshll.u32 %v1155, 16
    %v1162 = vor.u32 %v1159, %v1160
    %v1164 = vsel %vm858, 0, %v1162
    %v1165 = vsel %vm862, %v1164, 0
    %v1167 = vshrl.u32 %v1165, 16
    %v1169 = vshll.u32 %v1165, 16
    %v1171 = vrot.slane %v1169, 1
    %v1172 = vor.u32 %v1167, %v1171
    %v1175 = vrot.slane %v1165, 1
    %v1177 = vld [vmem:[%s13] sm:$0xf]
    %v1178 = vld [vmem:[%s13 + $0x4] sm:$0xf]
    %v1179 = vld [vmem:[%s13 + $0x8] sm:$0xf]
    %v1180 = vld [vmem:[%s13 + $0xc] sm:$0xf]
    %v1181 = vld [vmem:[%s13 + $0x10] sm:$0xf]
    %v1182 = vld [vmem:[%s13 + $0x14] sm:$0xf]
    %v1183 = vld [vmem:[%s13 + $0x18] sm:$0xf]
    %v1184 = vld [vmem:[%s13 + $0x1c] sm:$0xf]
    %v1185 = vld [vmem:[%s13 + $0x20] sm:$0xf]
    %v1186 = vld [vmem:[%s13 + $0x24] sm:$0xf]
    %v1187 = vld [vmem:[%s13 + $0x28] sm:$0xf]
    %v1188 = vld [vmem:[%s13 + $0x2c] sm:$0xf]
    %v1189 = vld [vmem:[%s13 + $0x30] sm:$0xf]
    %v1190 = vld [vmem:[%s13 + $0x34] sm:$0xf]
    %v1191 = vld [vmem:[%s13 + $0x38] sm:$0xf]
    %v1192 = vld [vmem:[%s13 + $0x3c] sm:$0xf]
    %v1193 = vld [vmem:[%s13 + $0x40] sm:$0xf]
    %v1194 = vld [vmem:[%s13 + $0x44] sm:$0xf]
    %v1195 = vld [vmem:[%s13 + $0x48] sm:$0xf]
    %v1196 = vld [vmem:[%s13 + $0x4c] sm:$0xf]
    %v1197 = vld [vmem:[%s13 + $0x50] sm:$0xf]
    %v1198 = vld [vmem:[%s13 + $0x54] sm:$0xf]
    %v1199 = vld [vmem:[%s13 + $0x58] sm:$0xf]
    %v1200 = vld [vmem:[%s13 + $0x5c] sm:$0xf]
    %v1201 = vld [vmem:[%s13 + $0x60] sm:$0xf]
    %v1202 = vld [vmem:[%s13 + $0x64] sm:$0xf]
    %v1203 = vld [vmem:[%s13 + $0x68] sm:$0xf]
    %v1204 = vld [vmem:[%s13 + $0x6c] sm:$0xf]
    %v1205 = vld [vmem:[%s13 + $0x70] sm:$0xf]
    %v1206 = vld [vmem:[%s13 + $0x74] sm:$0xf]
    %v1207 = vld [vmem:[%s13 + $0x78] sm:$0xf]
    %v1208 = vld [vmem:[%s13 + $0x7c] sm:$0xf]
    %v1209 = vld [vmem:[%s13 + $0x80] sm:$0xf]
    %v1210 = vld [vmem:[%s13 + $0x84] sm:$0xf]
    %v1211 = vld [vmem:[%s13 + $0x88] sm:$0xf]
    %v1212 = vld [vmem:[%s13 + $0x8c] sm:$0xf]
    %v1213 = vld [vmem:[%s13 + $0x90] sm:$0xf]
    %v1214 = vld [vmem:[%s13 + $0x94] sm:$0xf]
    %v1215 = vld [vmem:[%s13 + $0x98] sm:$0xf]
    %v1216 = vld [vmem:[%s13 + $0x9c] sm:$0xf]
    %v1217 = vld [vmem:[%s13 + $0xa0] sm:$0xf]
    %v1218 = vld [vmem:[%s13 + $0xa4] sm:$0xf]
    %v1219 = vld [vmem:[%s13 + $0xa8] sm:$0xf]
    %v1220 = vld [vmem:[%s13 + $0xac] sm:$0xf]
    %v1221 = vld [vmem:[%s13 + $0xb0] sm:$0xf]
    %v1222 = vld [vmem:[%s13 + $0xb4] sm:$0xf]
    %v1223 = vld [vmem:[%s13 + $0xb8] sm:$0xf]
    %v1224 = vld [vmem:[%s13 + $0xbc] sm:$0xf]
    %v1225 = vld [vmem:[%s15] sm:$0x1]
    %v1227 = vlaneseq
    %v1228 = vshrl.u32 %v1227, 7
    %v1229 = vsub.s32 0, %v1228
    %v1230 = vrot.slane %v1225, %v1229
    %v1280 = vunpack.c.l.b16 %v1177
    %v1281 = vunpack.c.l.b16 %v1178
    %v1282 = vunpack.c.l.b16 %v1179
    %v1283 = vunpack.c.l.b16 %v1180
    %v1284 = vunpack.c.l.b16 %v1181
    %v1285 = vunpack.c.l.b16 %v1182
    %v1286 = vunpack.c.l.b16 %v1183
    %v1287 = vunpack.c.l.b16 %v1184
    %v1288 = vunpack.c.l.b16 %v1185
    %v1289 = vunpack.c.l.b16 %v1186
    %v1290 = vunpack.c.l.b16 %v1187
    %v1291 = vunpack.c.l.b16 %v1188
    %v1292 = vunpack.c.l.b16 %v1189
    %v1293 = vunpack.c.l.b16 %v1190
    %v1294 = vunpack.c.l.b16 %v1191
    %v1295 = vunpack.c.l.b16 %v1192
    %v1296 = vunpack.c.l.b16 %v1193
    %v1297 = vunpack.c.l.b16 %v1194
    %v1298 = vunpack.c.l.b16 %v1195
    %v1299 = vunpack.c.l.b16 %v1196
    %v1300 = vunpack.c.l.b16 %v1197
    %v1301 = vunpack.c.l.b16 %v1198
    %v1302 = vunpack.c.l.b16 %v1199
    %v1303 = vunpack.c.l.b16 %v1200
    %v1304 = vunpack.c.l.b16 %v1201
    %v1305 = vunpack.c.l.b16 %v1202
    %v1306 = vunpack.c.l.b16 %v1203
    %v1307 = vunpack.c.l.b16 %v1204
    %v1308 = vunpack.c.l.b16 %v1205
    %v1309 = vunpack.c.l.b16 %v1206
    %v1310 = vunpack.c.l.b16 %v1207
    %v1311 = vunpack.c.l.b16 %v1208
    %v1312 = vunpack.c.l.b16 %v1209
    %v1313 = vunpack.c.l.b16 %v1210
    %v1314 = vunpack.c.l.b16 %v1211
    %v1315 = vunpack.c.l.b16 %v1212
    %v1316 = vunpack.c.l.b16 %v1213
    %v1317 = vunpack.c.l.b16 %v1214
    %v1318 = vunpack.c.l.b16 %v1215
    %v1319 = vunpack.c.l.b16 %v1216
    %v1320 = vunpack.c.l.b16 %v1217
    %v1321 = vunpack.c.l.b16 %v1218
    %v1322 = vunpack.c.l.b16 %v1219
    %v1323 = vunpack.c.l.b16 %v1220
    %v1324 = vunpack.c.l.b16 %v1221
    %v1325 = vunpack.c.l.b16 %v1222
    %v1326 = vunpack.c.l.b16 %v1223
    %v1327 = vunpack.c.l.b16 %v1224
    %v1328 = vpack.c.b16 %v1281, %v1280
    %v1329 = vpack.c.b16 %v1283, %v1282
    %v1330 = vpack.c.b16 %v1285, %v1284
    %v1331 = vpack.c.b16 %v1287, %v1286
    %v1332 = vpack.c.b16 %v1289, %v1288
    %v1333 = vpack.c.b16 %v1291, %v1290
    %v1334 = vpack.c.b16 %v1293, %v1292
    %v1335 = vpack.c.b16 %v1295, %v1294
    %v1336 = vpack.c.b16 %v1297, %v1296
    %v1337 = vpack.c.b16 %v1299, %v1298
    %v1338 = vpack.c.b16 %v1301, %v1300
    %v1339 = vpack.c.b16 %v1303, %v1302
    %v1340 = vpack.c.b16 %v1305, %v1304
    %v1341 = vpack.c.b16 %v1307, %v1306
    %v1342 = vpack.c.b16 %v1309, %v1308
    %v1343 = vpack.c.b16 %v1311, %v1310
    %v1344 = vpack.c.b16 %v1313, %v1312
    %v1345 = vpack.c.b16 %v1315, %v1314
    %v1346 = vpack.c.b16 %v1317, %v1316
    %v1347 = vpack.c.b16 %v1319, %v1318
    %v1348 = vpack.c.b16 %v1321, %v1320
    %v1349 = vpack.c.b16 %v1323, %v1322
    %v1350 = vpack.c.b16 %v1325, %v1324
    %v1351 = vpack.c.b16 %v1327, %v1326
    %1376 = vmatprep.subr.bf16.mxu0 0
    %1377 = vmatpush1.bf16.msra.mxu0 %v1328
    %1378 = vmatprep.subr.bf16.mxu0 0
    %1379 = vmatpush1.bf16.msra.mxu0 %v1329
    %1380 = vmatprep.subr.bf16.mxu0 0
    %1381 = vmatpush1.bf16.msra.mxu0 %v1330
    %1382 = vmatprep.subr.bf16.mxu0 0
    %1383 = vmatpush1.bf16.msra.mxu0 %v1331
    %1384 = vmatprep.subr.bf16.mxu0 0
    %1385 = vmatpush1.bf16.msra.mxu0 %v1332
    %1386 = vmatprep.subr.bf16.mxu0 0
    %1387 = vmatpush1.bf16.msra.mxu0 %v1333
    %1388 = vmatprep.subr.bf16.mxu0 0
    %1389 = vmatpush1.bf16.msra.mxu0 %v1334
    %1390 = vmatprep.subr.bf16.mxu0 0
    %1391 = vmatpush1.bf16.msra.mxu0 %v1335
    %1392 = vmatprep.subr.bf16.mxu0 0
    %1393 = vmatpush1.bf16.msra.mxu0 %v1336
    %1394 = vmatprep.subr.bf16.mxu0 0
    %1395 = vmatpush1.bf16.msra.mxu0 %v1337
    %1396 = vmatprep.subr.bf16.mxu0 0
    %1397 = vmatpush1.bf16.msra.mxu0 %v1338
    %1398 = vmatprep.subr.bf16.mxu0 0
    %1399 = vmatpush1.bf16.msra.mxu0 %v1339
    %1400 = vmatprep.subr.bf16.mxu0 0
    %1401 = vmatpush1.bf16.msra.mxu0 %v1340
    %1402 = vmatprep.subr.bf16.mxu0 0
    %1403 = vmatpush1.bf16.msra.mxu0 %v1341
    %1404 = vmatprep.subr.bf16.mxu0 0
    %1405 = vmatpush1.bf16.msra.mxu0 %v1342
    %1406 = vmatprep.subr.bf16.mxu0 0
    %1407 = vmatpush1.bf16.msra.mxu0 %v1343
    %1408 = vmatprep.mubr.bf16.mxu0 %v1172
    %1409 = vmatmul.mubr.bf16.gmra.mrb[0].mxu0 %v1165
    %v1410 = vpop.f32.mrb[0].mxu0
    %v1411 = vadd.f32 %v1230, %v1410
    %v1412 = vpop.f32.mrb[0].mxu0
    %v1413 = vpop.f32.mrb[0].mxu0
    %v1414 = vpop.f32.mrb[0].mxu0
    %1415 = vdwg.mxu0
    %1416 = vmatprep.subr.bf16.mxu0 0
    %1417 = vmatpush1.bf16.msra.mxu0 %v1344
    %1418 = vmatprep.subr.bf16.mxu0 0
    %1419 = vmatpush1.bf16.msra.mxu0 %v1345
    %1420 = vmatprep.subr.bf16.mxu0 0
    %1421 = vmatpush1.bf16.msra.mxu0 %v1346
    %1422 = vmatprep.subr.bf16.mxu0 0
    %1423 = vmatpush1.bf16.msra.mxu0 %v1347
    %1424 = vmatprep.subr.bf16.mxu0 0
    %1425 = vmatpush1.bf16.msra.mxu0 %v1348
    %1426 = vmatprep.subr.bf16.mxu0 0
    %1427 = vmatpush1.bf16.msra.mxu0 %v1349
    %1428 = vmatprep.subr.bf16.mxu0 0
    %1429 = vmatpush1.bf16.msra.mxu0 %v1350
    %1430 = vmatprep.subr.bf16.mxu0 0
    %1431 = vmatpush1.bf16.msra.mxu0 %v1351
    %1432 = vmatprep.subr.bf16.mxu0 0
    %1433 = vmatpush1.bf16.msra.mxu0 0
    %1434 = vmatprep.subr.bf16.mxu0 0
    %1435 = vmatpush1.bf16.msra.mxu0 0
    %1436 = vmatprep.subr.bf16.mxu0 0
    %1437 = vmatpush1.bf16.msra.mxu0 0
    %1438 = vmatprep.subr.bf16.mxu0 0
    %1439 = vmatpush1.bf16.msra.mxu0 0
    %1440 = vmatprep.subr.bf16.mxu0 0
    %1441 = vmatpush1.bf16.msra.mxu0 0
    %1442 = vmatprep.subr.bf16.mxu0 0
    %1443 = vmatpush1.bf16.msra.mxu0 0
    %1444 = vmatprep.subr.bf16.mxu0 0
    %1445 = vmatpush1.bf16.msra.mxu0 0
    %1446 = vmatprep.subr.bf16.mxu0 0
    %1447 = vmatpush1.bf16.msra.mxu0 0
    %1448 = vmatprep.mubr.bf16.mxu0 0
    %1449 = vmatmul.mubr.bf16.gmra.mrb[0].mxu0 %v1175
    %v1450 = vpop.f32.mrb[0].mxu0
    %v1451 = vadd.f32 %v1411, %v1450
    %v1452 = vpop.f32.mrb[0].mxu0
    %v1453 = vpop.f32.mrb[0].mxu0
    %v1454 = vpop.f32.mrb[0].mxu0
    %1455 = vdwg.mxu0
    %v1456 = vadd.f32 %v1451, %v846
    %v1457 = vmax.f32 %v1456, 0.0
    %v1458 = vpack.c.bf16 %v1457, %v1457
    %v1459 = vld [vmem:[%s25] sm:$0xff]
    %v1460 = vld [vmem:[%s25 + $0x8] sm:$0xff]
    %v1461 = vld [vmem:[%s25 + $0x10] sm:$0xff]
    %v1462 = vld [vmem:[%s25 + $0x18] sm:$0xff]
    %v1463 = vld [vmem:[%s25 + $0x20] sm:$0xff]
    %v1464 = vld [vmem:[%s25 + $0x28] sm:$0xff]
    %v1465 = vld [vmem:[%s25 + $0x30] sm:$0xff]
    %v1466 = vld [vmem:[%s25 + $0x38] sm:$0xff]
    %v1467 = vld [vmem:[%s25 + $0x40] sm:$0xff]
    %v1468 = vld [vmem:[%s25 + $0x48] sm:$0xff]
    %v1469 = vld [vmem:[%s25 + $0x50] sm:$0xff]
    %v1470 = vld [vmem:[%s25 + $0x58] sm:$0xff]
    %v1471 = vld [vmem:[%s25 + $0x60] sm:$0xff]
    %v1472 = vld [vmem:[%s25 + $0x68] sm:$0xff]
    %v1473 = vld [vmem:[%s25 + $0x70] sm:$0xff]
    %v1474 = vld [vmem:[%s25 + $0x78] sm:$0xff]
    %v1491 = vunpack.c.l.b16 %v1459
    %v1492 = vunpack.c.h.b16 %v1459
    %v1493 = vunpack.c.l.b16 %v1460
    %v1494 = vunpack.c.h.b16 %v1460
    %v1495 = vunpack.c.l.b16 %v1461
    %v1496 = vunpack.c.h.b16 %v1461
    %v1497 = vunpack.c.l.b16 %v1462
    %v1498 = vunpack.c.h.b16 %v1462
    %v1499 = vunpack.c.l.b16 %v1463
    %v1500 = vunpack.c.h.b16 %v1463
    %v1501 = vunpack.c.l.b16 %v1464
    %v1502 = vunpack.c.h.b16 %v1464
    %v1503 = vunpack.c.l.b16 %v1465
    %v1504 = vunpack.c.h.b16 %v1465
    %v1505 = vunpack.c.l.b16 %v1466
    %v1506 = vunpack.c.h.b16 %v1466
    %v1507 = vunpack.c.l.b16 %v1467
    %v1508 = vunpack.c.h.b16 %v1467
    %v1509 = vunpack.c.l.b16 %v1468
    %v1510 = vunpack.c.h.b16 %v1468
    %v1511 = vunpack.c.l.b16 %v1469
    %v1512 = vunpack.c.h.b16 %v1469
    %v1513 = vunpack.c.l.b16 %v1470
    %v1514 = vunpack.c.h.b16 %v1470
    %v1515 = vunpack.c.l.b16 %v1471
    %v1516 = vunpack.c.h.b16 %v1471
    %v1517 = vunpack.c.l.b16 %v1472
    %v1518 = vunpack.c.h.b16 %v1472
    %v1519 = vunpack.c.l.b16 %v1473
    %v1520 = vunpack.c.h.b16 %v1473
    %v1521 = vunpack.c.l.b16 %v1474
    %v1522 = vunpack.c.h.b16 %v1474
    %v1523 = vpack.c.b16 %v1493, %v1491
    %v1524 = vpack.c.b16 %v1494, %v1492
    %v1525 = vpack.c.b16 %v1497, %v1495
    %v1526 = vpack.c.b16 %v1498, %v1496
    %v1527 = vpack.c.b16 %v1501, %v1499
    %v1528 = vpack.c.b16 %v1502, %v1500
    %v1529 = vpack.c.b16 %v1505, %v1503
    %v1530 = vpack.c.b16 %v1506, %v1504
    %v1531 = vpack.c.b16 %v1509, %v1507
    %v1532 = vpack.c.b16 %v1510, %v1508
    %v1533 = vpack.c.b16 %v1513, %v1511
    %v1534 = vpack.c.b16 %v1514, %v1512
    %v1535 = vpack.c.b16 %v1517, %v1515
    %v1536 = vpack.c.b16 %v1518, %v1516
    %v1537 = vpack.c.b16 %v1521, %v1519
    %v1538 = vpack.c.b16 %v1522, %v1520
    %1555 = vmatprep.subr.bf16.mxu0 %v1524
    %1556 = vmatpush1.bf16.msra.mxu0 %v1523
    %1557 = vmatprep.subr.bf16.mxu0 %v1526
    %1558 = vmatpush1.bf16.msra.mxu0 %v1525
    %1559 = vmatprep.subr.bf16.mxu0 %v1528
    %1560 = vmatpush1.bf16.msra.mxu0 %v1527
    %1561 = vmatprep.subr.bf16.mxu0 %v1530
    %1562 = vmatpush1.bf16.msra.mxu0 %v1529
    %1563 = vmatprep.subr.bf16.mxu0 %v1532
    %1564 = vmatpush1.bf16.msra.mxu0 %v1531
    %1565 = vmatprep.subr.bf16.mxu0 %v1534
    %1566 = vmatpush1.bf16.msra.mxu0 %v1533
    %1567 = vmatprep.subr.bf16.mxu0 %v1536
    %1568 = vmatpush1.bf16.msra.mxu0 %v1535
    %1569 = vmatprep.subr.bf16.mxu0 %v1538
    %1570 = vmatpush1.bf16.msra.mxu0 %v1537
    %1571 = vmatprep.subr.bf16.mxu0 0
    %1572 = vmatpush1.bf16.msra.mxu0 0
    %1573 = vmatprep.subr.bf16.mxu0 0
    %1574 = vmatpush1.bf16.msra.mxu0 0
    %1575 = vmatprep.subr.bf16.mxu0 0
    %1576 = vmatpush1.bf16.msra.mxu0 0
    %1577 = vmatprep.subr.bf16.mxu0 0
    %1578 = vmatpush1.bf16.msra.mxu0 0
    %1579 = vmatprep.subr.bf16.mxu0 0
    %1580 = vmatpush1.bf16.msra.mxu0 0
    %1581 = vmatprep.subr.bf16.mxu0 0
    %1582 = vmatpush1.bf16.msra.mxu0 0
    %1583 = vmatprep.subr.bf16.mxu0 0
    %1584 = vmatpush1.bf16.msra.mxu0 0
    %1585 = vmatprep.subr.bf16.mxu0 0
    %1586 = vmatpush1.bf16.msra.mxu0 0
    %1587 = vmatprep.mubr.bf16.mxu0 0
    %1588 = vmatmul.mubr.bf16.gmra.mrb[0].mxu0 %v1458
    %v1589 = vpop.f32.mrb[0].mxu0
    %v1590 = vadd.f32 0.0, %v1589
    %v1591 = vpop.f32.mrb[0].mxu0
    %v1592 = vadd.f32 0.0, %v1591
    %v1593 = vpop.f32.mrb[0].mxu0
    %v1594 = vpop.f32.mrb[0].mxu0
    %1595 = vdwg.mxu0
    %v1596 = vld [vmem:[%s27] sm:$0x3]
    %v1598 = vshrl.u32 %v1458, 16
    %v1600 = vrot.slane %v1598, 7
    %v1601 = vshll.u32 %v1458, 16
    %v1603 = vor.u32 %v1600, %v1601
    %v1605 = vsel %vm858, 0, %v1603
    %v1606 = vsel %vm862, %v1605, 0
    %v1608 = vshrl.u32 %v1606, 16
    %v1610 = vshll.u32 %v1606, 16
    %v1612 = vrot.slane %v1610, 1
    %v1613 = vor.u32 %v1608, %v1612
    %v1616 = vrot.slane %v1606, 1
    %v1618 = vld [vmem:[%s17] sm:$0xff]
    %v1619 = vld [vmem:[%s17 + $0x8] sm:$0xff]
    %v1620 = vld [vmem:[%s17 + $0x10] sm:$0xff]
    %v1621 = vld [vmem:[%s17 + $0x18] sm:$0xff]
    %v1622 = vld [vmem:[%s17 + $0x20] sm:$0xff]
    %v1623 = vld [vmem:[%s17 + $0x28] sm:$0xff]
    %v1624 = vld [vmem:[%s17 + $0x30] sm:$0xff]
    %v1625 = vld [vmem:[%s17 + $0x38] sm:$0xff]
    %v1626 = vld [vmem:[%s17 + $0x40] sm:$0xff]
    %v1627 = vld [vmem:[%s17 + $0x48] sm:$0xff]
    %v1628 = vld [vmem:[%s17 + $0x50] sm:$0xff]
    %v1629 = vld [vmem:[%s17 + $0x58] sm:$0xff]
    %v1630 = vld [vmem:[%s17 + $0x60] sm:$0xff]
    %v1631 = vld [vmem:[%s17 + $0x68] sm:$0xff]
    %v1632 = vld [vmem:[%s17 + $0x70] sm:$0xff]
    %v1633 = vld [vmem:[%s17 + $0x78] sm:$0xff]
    %v1634 = vld [vmem:[%s17 + $0x80] sm:$0xff]
    %v1635 = vld [vmem:[%s17 + $0x88] sm:$0xff]
    %v1636 = vld [vmem:[%s17 + $0x90] sm:$0xff]
    %v1637 = vld [vmem:[%s17 + $0x98] sm:$0xff]
    %v1638 = vld [vmem:[%s17 + $0xa0] sm:$0xff]
    %v1639 = vld [vmem:[%s17 + $0xa8] sm:$0xff]
    %v1640 = vld [vmem:[%s17 + $0xb0] sm:$0xff]
    %v1641 = vld [vmem:[%s17 + $0xb8] sm:$0xff]
    %v1642 = vld [vmem:[%s17 + $0xc0] sm:$0xff]
    %v1643 = vld [vmem:[%s17 + $0xc8] sm:$0xff]
    %v1644 = vld [vmem:[%s17 + $0xd0] sm:$0xff]
    %v1645 = vld [vmem:[%s17 + $0xd8] sm:$0xff]
    %v1646 = vld [vmem:[%s17 + $0xe0] sm:$0xff]
    %v1647 = vld [vmem:[%s17 + $0xe8] sm:$0xff]
    %v1648 = vld [vmem:[%s17 + $0xf0] sm:$0xff]
    %v1649 = vld [vmem:[%s17 + $0xf8] sm:$0xff]
    %v1650 = vld [vmem:[%s17 + $0x100] sm:$0xff]
    %v1651 = vld [vmem:[%s17 + $0x108] sm:$0xff]
    %v1652 = vld [vmem:[%s17 + $0x110] sm:$0xff]
    %v1653 = vld [vmem:[%s17 + $0x118] sm:$0xff]
    %v1654 = vld [vmem:[%s17 + $0x120] sm:$0xff]
    %v1655 = vld [vmem:[%s17 + $0x128] sm:$0xff]
    %v1656 = vld [vmem:[%s17 + $0x130] sm:$0xff]
    %v1657 = vld [vmem:[%s17 + $0x138] sm:$0xff]
    %v1658 = vld [vmem:[%s17 + $0x140] sm:$0xff]
    %v1659 = vld [vmem:[%s17 + $0x148] sm:$0xff]
    %v1660 = vld [vmem:[%s17 + $0x150] sm:$0xff]
    %v1661 = vld [vmem:[%s17 + $0x158] sm:$0xff]
    %v1662 = vld [vmem:[%s17 + $0x160] sm:$0xff]
    %v1663 = vld [vmem:[%s17 + $0x168] sm:$0xff]
    %v1664 = vld [vmem:[%s17 + $0x170] sm:$0xff]
    %v1665 = vld [vmem:[%s17 + $0x178] sm:$0xff]
    %v1666 = vld [vmem:[%s19] sm:$0x3]
    %v1668 = vlaneseq
    %v1669 = vshrl.u32 %v1668, 7
    %v1670 = vsub.s32 0, %v1669
    %v1671 = vrot.slane %v1666, %v1670
    %v1672 = vlaneseq
    %v1673 = vshrl.u32 %v1672, 7
    %v1674 = vsub.s32 1, %v1673
    %v1675 = vrot.slane %v1666, %v1674
    %v1726 = vunpack.c.l.b16 %v1618
    %v1727 = vunpack.c.h.b16 %v1618
    %v1728 = vunpack.c.l.b16 %v1619
    %v1729 = vunpack.c.h.b16 %v1619
    %v1730 = vunpack.c.l.b16 %v1620
    %v1731 = vunpack.c.h.b16 %v1620
    %v1732 = vunpack.c.l.b16 %v1621
    %v1733 = vunpack.c.h.b16 %v1621
    %v1734 = vunpack.c.l.b16 %v1622
    %v1735 = vunpack.c.h.b16 %v1622
    %v1736 = vunpack.c.l.b16 %v1623
    %v1737 = vunpack.c.h.b16 %v1623
    %v1738 = vunpack.c.l.b16 %v1624
    %v1739 = vunpack.c.h.b16 %v1624
    %v1740 = vunpack.c.l.b16 %v1625
    %v1741 = vunpack.c.h.b16 %v1625
    %v1742 = vunpack.c.l.b16 %v1626
    %v1743 = vunpack.c.h.b16 %v1626
    %v1744 = vunpack.c.l.b16 %v1627
    %v1745 = vunpack.c.h.b16 %v1627
    %v1746 = vunpack.c.l.b16 %v1628
    %v1747 = vunpack.c.h.b16 %v1628
    %v1748 = vunpack.c.l.b16 %v1629
    %v1749 = vunpack.c.h.b16 %v1629
    %v1750 = vunpack.c.l.b16 %v1630
    %v1751 = vunpack.c.h.b16 %v1630
    %v1752 = vunpack.c.l.b16 %v1631
    %v1753 = vunpack.c.h.b16 %v1631
    %v1754 = vunpack.c.l.b16 %v1632
    %v1755 = vunpack.c.h.b16 %v1632
    %v1756 = vunpack.c.l.b16 %v1633
    %v1757 = vunpack.c.h.b16 %v1633
    %v1758 = vunpack.c.l.b16 %v1634
    %v1759 = vunpack.c.h.b16 %v1634
    %v1760 = vunpack.c.l.b16 %v1635
    %v1761 = vunpack.c.h.b16 %v1635
    %v1762 = vunpack.c.l.b16 %v1636
    %v1763 = vunpack.c.h.b16 %v1636
    %v1764 = vunpack.c.l.b16 %v1637
    %v1765 = vunpack.c.h.b16 %v1637
    %v1766 = vunpack.c.l.b16 %v1638
    %v1767 = vunpack.c.h.b16 %v1638
    %v1768 = vunpack.c.l.b16 %v1639
    %v1769 = vunpack.c.h.b16 %v1639
    %v1770 = vunpack.c.l.b16 %v1640
    %v1771 = vunpack.c.h.b16 %v1640
    %v1772 = vunpack.c.l.b16 %v1641
    %v1773 = vunpack.c.h.b16 %v1641
    %v1774 = vunpack.c.l.b16 %v1642
    %v1775 = vunpack.c.h.b16 %v1642
    %v1776 = vunpack.c.l.b16 %v1643
    %v1777 = vunpack.c.h.b16 %v1643
    %v1778 = vunpack.c.l.b16 %v1644
    %v1779 = vunpack.c.h.b16 %v1644
    %v1780 = vunpack.c.l.b16 %v1645
    %v1781 = vunpack.c.h.b16 %v1645
    %v1782 = vunpack.c.l.b16 %v1646
    %v1783 = vunpack.c.h.b16 %v1646
    %v1784 = vunpack.c.l.b16 %v1647
    %v1785 = vunpack.c.h.b16 %v1647
    %v1786 = vunpack.c.l.b16 %v1648
    %v1787 = vunpack.c.h.b16 %v1648
    %v1788 = vunpack.c.l.b16 %v1649
    %v1789 = vunpack.c.h.b16 %v1649
    %v1790 = vunpack.c.l.b16 %v1650
    %v1791 = vunpack.c.h.b16 %v1650
    %v1792 = vunpack.c.l.b16 %v1651
    %v1793 = vunpack.c.h.b16 %v1651
    %v1794 = vunpack.c.l.b16 %v1652
    %v1795 = vunpack.c.h.b16 %v1652
    %v1796 = vunpack.c.l.b16 %v1653
    %v1797 = vunpack.c.h.b16 %v1653
    %v1798 = vunpack.c.l.b16 %v1654
    %v1799 = vunpack.c.h.b16 %v1654
    %v1800 = vunpack.c.l.b16 %v1655
    %v1801 = vunpack.c.h.b16 %v1655
    %v1802 = vunpack.c.l.b16 %v1656
    %v1803 = vunpack.c.h.b16 %v1656
    %v1804 = vunpack.c.l.b16 %v1657
    %v1805 = vunpack.c.h.b16 %v1657
    %v1806 = vunpack.c.l.b16 %v1658
    %v1807 = vunpack.c.h.b16 %v1658
    %v1808 = vunpack.c.l.b16 %v1659
    %v1809 = vunpack.c.h.b16 %v1659
    %v1810 = vunpack.c.l.b16 %v1660
    %v1811 = vunpack.c.h.b16 %v1660
    %v1812 = vunpack.c.l.b16 %v1661
    %v1813 = vunpack.c.h.b16 %v1661
    %v1814 = vunpack.c.l.b16 %v1662
    %v1815 = vunpack.c.h.b16 %v1662
    %v1816 = vunpack.c.l.b16 %v1663
    %v1817 = vunpack.c.h.b16 %v1663
    %v1818 = vunpack.c.l.b16 %v1664
    %v1819 = vunpack.c.h.b16 %v1664
    %v1820 = vunpack.c.l.b16 %v1665
    %v1821 = vunpack.c.h.b16 %v1665
    %v1822 = vpack.c.b16 %v1728, %v1726
    %v1823 = vpack.c.b16 %v1729, %v1727
    %v1824 = vpack.c.b16 %v1732, %v1730
    %v1825 = vpack.c.b16 %v1733, %v1731
    %v1826 = vpack.c.b16 %v1736, %v1734
    %v1827 = vpack.c.b16 %v1737, %v1735
    %v1828 = vpack.c.b16 %v1740, %v1738
    %v1829 = vpack.c.b16 %v1741, %v1739
    %v1830 = vpack.c.b16 %v1744, %v1742
    %v1831 = vpack.c.b16 %v1745, %v1743
    %v1832 = vpack.c.b16 %v1748, %v1746
    %v1833 = vpack.c.b16 %v1749, %v1747
    %v1834 = vpack.c.b16 %v1752, %v1750
    %v1835 = vpack.c.b16 %v1753, %v1751
    %v1836 = vpack.c.b16 %v1756, %v1754
    %v1837 = vpack.c.b16 %v1757, %v1755
    %v1838 = vpack.c.b16 %v1760, %v1758
    %v1839 = vpack.c.b16 %v1761, %v1759
    %v1840 = vpack.c.b16 %v1764, %v1762
    %v1841 = vpack.c.b16 %v1765, %v1763
    %v1842 = vpack.c.b16 %v1768, %v1766
    %v1843 = vpack.c.b16 %v1769, %v1767
    %v1844 = vpack.c.b16 %v1772, %v1770
    %v1845 = vpack.c.b16 %v1773, %v1771
    %v1846 = vpack.c.b16 %v1776, %v1774
    %v1847 = vpack.c.b16 %v1777, %v1775
    %v1848 = vpack.c.b16 %v1780, %v1778
    %v1849 = vpack.c.b16 %v1781, %v1779
    %v1850 = vpack.c.b16 %v1784, %v1782
    %v1851 = vpack.c.b16 %v1785, %v1783
    %v1852 = vpack.c.b16 %v1788, %v1786
    %v1853 = vpack.c.b16 %v1789, %v1787
    %v1854 = vpack.c.b16 %v1792, %v1790
    %v1855 = vpack.c.b16 %v1793, %v1791
    %v1856 = vpack.c.b16 %v1796, %v1794
    %v1857 = vpack.c.b16 %v1797, %v1795
    %v1858 = vpack.c.b16 %v1800, %v1798
    %v1859 = vpack.c.b16 %v1801, %v1799
    %v1860 = vpack.c.b16 %v1804, %v1802
    %v1861 = vpack.c.b16 %v1805, %v1803
    %v1862 = vpack.c.b16 %v1808, %v1806
    %v1863 = vpack.c.b16 %v1809, %v1807
    %v1864 = vpack.c.b16 %v1812, %v1810
    %v1865 = vpack.c.b16 %v1813, %v1811
    %v1866 = vpack.c.b16 %v1816, %v1814
    %v1867 = vpack.c.b16 %v1817, %v1815
    %v1868 = vpack.c.b16 %v1820, %v1818
    %v1869 = vpack.c.b16 %v1821, %v1819
    %1918 = vmatprep.subr.bf16.mxu0 %v1823
    %1919 = vmatpush1.bf16.msra.mxu0 %v1822
    %1920 = vmatprep.subr.bf16.mxu0 %v1825
    %1921 = vmatpush1.bf16.msra.mxu0 %v1824
    %1922 = vmatprep.subr.bf16.mxu0 %v1827
    %1923 = vmatpush1.bf16.msra.mxu0 %v1826
    %1924 = vmatprep.subr.bf16.mxu0 %v1829
    %1925 = vmatpush1.bf16.msra.mxu0 %v1828
    %1926 = vmatprep.subr.bf16.mxu0 %v1831
    %1927 = vmatpush1.bf16.msra.mxu0 %v1830
    %1928 = vmatprep.subr.bf16.mxu0 %v1833
    %1929 = vmatpush1.bf16.msra.mxu0 %v1832
    %1930 = vmatprep.subr.bf16.mxu0 %v1835
    %1931 = vmatpush1.bf16.msra.mxu0 %v1834
    %1932 = vmatprep.subr.bf16.mxu0 %v1837
    %1933 = vmatpush1.bf16.msra.mxu0 %v1836
    %1934 = vmatprep.subr.bf16.mxu0 %v1839
    %1935 = vmatpush1.bf16.msra.mxu0 %v1838
    %1936 = vmatprep.subr.bf16.mxu0 %v1841
    %1937 = vmatpush1.bf16.msra.mxu0 %v1840
    %1938 = vmatprep.subr.bf16.mxu0 %v1843
    %1939 = vmatpush1.bf16.msra.mxu0 %v1842
    %1940 = vmatprep.subr.bf16.mxu0 %v1845
    %1941 = vmatpush1.bf16.msra.mxu0 %v1844
    %1942 = vmatprep.subr.bf16.mxu0 %v1847
    %1943 = vmatpush1.bf16.msra.mxu0 %v1846
    %1944 = vmatprep.subr.bf16.mxu0 %v1849
    %1945 = vmatpush1.bf16.msra.mxu0 %v1848
    %1946 = vmatprep.subr.bf16.mxu0 %v1851
    %1947 = vmatpush1.bf16.msra.mxu0 %v1850
    %1948 = vmatprep.subr.bf16.mxu0 %v1853
    %1949 = vmatpush1.bf16.msra.mxu0 %v1852
    %1950 = vmatprep.mubr.bf16.mxu0 %v1613
    %1951 = vmatmul.mubr.bf16.gmra.mrb[0].mxu0 %v1606
    %v1952 = vpop.f32.mrb[0].mxu0
    %v1953 = vadd.f32 %v1671, %v1952
    %v1954 = vpop.f32.mrb[0].mxu0
    %v1955 = vadd.f32 %v1675, %v1954
    %v1956 = vpop.f32.mrb[0].mxu0
    %v1957 = vpop.f32.mrb[0].mxu0
    %1958 = vdwg.mxu0
    %1959 = vmatprep.subr.bf16.mxu0 %v1855
    %1960 = vmatpush1.bf16.msra.mxu0 %v1854
    %1961 = vmatprep.subr.bf16.mxu0 %v1857
    %1962 = vmatpush1.bf16.msra.mxu0 %v1856
    %1963 = vmatprep.subr.bf16.mxu0 %v1859
    %1964 = vmatpush1.bf16.msra.mxu0 %v1858
    %1965 = vmatprep.subr.bf16.mxu0 %v1861
    %1966 = vmatpush1.bf16.msra.mxu0 %v1860
    %1967 = vmatprep.subr.bf16.mxu0 %v1863
    %1968 = vmatpush1.bf16.msra.mxu0 %v1862
    %1969 = vmatprep.subr.bf16.mxu0 %v1865
    %1970 = vmatpush1.bf16.msra.mxu0 %v1864
    %1971 = vmatprep.subr.bf16.mxu0 %v1867
    %1972 = vmatpush1.bf16.msra.mxu0 %v1866
    %1973 = vmatprep.subr.bf16.mxu0 %v1869
    %1974 = vmatpush1.bf16.msra.mxu0 %v1868
    %1975 = vmatprep.subr.bf16.mxu0 0
    %1976 = vmatpush1.bf16.msra.mxu0 0
    %1977 = vmatprep.subr.bf16.mxu0 0
    %1978 = vmatpush1.bf16.msra.mxu0 0
    %1979 = vmatprep.subr.bf16.mxu0 0
    %1980 = vmatpush1.bf16.msra.mxu0 0
    %1981 = vmatprep.subr.bf16.mxu0 0
    %1982 = vmatpush1.bf16.msra.mxu0 0
    %1983 = vmatprep.subr.bf16.mxu0 0
    %1984 = vmatpush1.bf16.msra.mxu0 0
    %1985 = vmatprep.subr.bf16.mxu0 0
    %1986 = vmatpush1.bf16.msra.mxu0 0
    %1987 = vmatprep.subr.bf16.mxu0 0
    %1988 = vmatpush1.bf16.msra.mxu0 0
    %1989 = vmatprep.subr.bf16.mxu0 0
    %1990 = vmatpush1.bf16.msra.mxu0 0
    %1991 = vmatprep.mubr.bf16.mxu0 0
    %1992 = vmatmul.mubr.bf16.gmra.mrb[0].mxu0 %v1616
    %v1993 = vpop.f32.mrb[0].mxu0
    %v1994 = vadd.f32 %v1953, %v1993
    %v1995 = vpop.f32.mrb[0].mxu0
    %v1996 = vadd.f32 %v1955, %v1995
    %v1997 = vpop.f32.mrb[0].mxu0
    %v1998 = vpop.f32.mrb[0].mxu0
    %1999 = vdwg.mxu0
    %v2000 = vmax.f32 %v1994, 0.0
    %v2001 = vmax.f32 %v1996, 0.0
    %v2002 = vpack.c.bf16 %v2000, %v2000
    %v2003 = vpack.c.bf16 %v2001, %v2001
    %v2005 = vshrl.u32 %v2002, 16
    %v2007 = vrot.slane %v2005, 7
    %v2008 = vshll.u32 %v2002, 16
    %v2010 = vor.u32 %v2007, %v2008
    %v2012 = vshrl.u32 %v2003, 16
    %v2014 = vrot.slane %v2012, 7
    %v2015 = vshll.u32 %v2003, 16
    %v2017 = vor.u32 %v2014, %v2015
    %v2020 = vsel %vm858, 0, %v2010
    %v2021 = vsel %vm858, 0, %v2017
    %v2022 = vsel %vm862, %v2020, 0
    %v2023 = vsel %vm862, %v2021, 0
    %v2025 = vshrl.u32 %v2022, 16
    %v2027 = vshll.u32 %v2022, 16
    %v2029 = vrot.slane %v2027, 1
    %v2030 = vor.u32 %v2025, %v2029
    %v2032 = vshrl.u32 %v2023, 16
    %v2034 = vshll.u32 %v2023, 16
    %v2036 = vrot.slane %v2034, 1
    %v2037 = vor.u32 %v2032, %v2036
    %v2042 = vrot.slane %v2022, 1
    %v2043 = vrot.slane %v2023, 1
    %v2046 = vld [vmem:[%s21] sm:$0xff]
    %v2047 = vld [vmem:[%s21 + $0x8] sm:$0xff]
    %v2048 = vld [vmem:[%s21 + $0x10] sm:$0xff]
    %v2049 = vld [vmem:[%s21 + $0x18] sm:$0xff]
    %v2050 = vld [vmem:[%s21 + $0x20] sm:$0xff]
    %v2051 = vld [vmem:[%s21 + $0x28] sm:$0xff]
    %v2052 = vld [vmem:[%s21 + $0x30] sm:$0xff]
    %v2053 = vld [vmem:[%s21 + $0x38] sm:$0xff]
    %v2054 = vld [vmem:[%s21 + $0x40] sm:$0xff]
    %v2055 = vld [vmem:[%s21 + $0x48] sm:$0xff]
    %v2056 = vld [vmem:[%s21 + $0x50] sm:$0xff]
    %v2057 = vld [vmem:[%s21 + $0x58] sm:$0xff]
    %v2058 = vld [vmem:[%s21 + $0x60] sm:$0xff]
    %v2059 = vld [vmem:[%s21 + $0x68] sm:$0xff]
    %v2060 = vld [vmem:[%s21 + $0x70] sm:$0xff]
    %v2061 = vld [vmem:[%s21 + $0x78] sm:$0xff]
    %v2062 = vld [vmem:[%s21 + $0x80] sm:$0xff]
    %v2063 = vld [vmem:[%s21 + $0x88] sm:$0xff]
    %v2064 = vld [vmem:[%s21 + $0x90] sm:$0xff]
    %v2065 = vld [vmem:[%s21 + $0x98] sm:$0xff]
    %v2066 = vld [vmem:[%s21 + $0xa0] sm:$0xff]
    %v2067 = vld [vmem:[%s21 + $0xa8] sm:$0xff]
    %v2068 = vld [vmem:[%s21 + $0xb0] sm:$0xff]
    %v2069 = vld [vmem:[%s21 + $0xb8] sm:$0xff]
    %v2070 = vld [vmem:[%s21 + $0xc0] sm:$0xff]
    %v2071 = vld [vmem:[%s21 + $0xc8] sm:$0xff]
    %v2072 = vld [vmem:[%s21 + $0xd0] sm:$0xff]
    %v2073 = vld [vmem:[%s21 + $0xd8] sm:$0xff]
    %v2074 = vld [vmem:[%s21 + $0xe0] sm:$0xff]
    %v2075 = vld [vmem:[%s21 + $0xe8] sm:$0xff]
    %v2076 = vld [vmem:[%s21 + $0xf0] sm:$0xff]
    %v2077 = vld [vmem:[%s21 + $0xf8] sm:$0xff]
    %v2078 = vld [vmem:[%s21 + $0x100] sm:$0xff]
    %v2079 = vld [vmem:[%s21 + $0x108] sm:$0xff]
    %v2080 = vld [vmem:[%s21 + $0x110] sm:$0xff]
    %v2081 = vld [vmem:[%s21 + $0x118] sm:$0xff]
    %v2082 = vld [vmem:[%s21 + $0x120] sm:$0xff]
    %v2083 = vld [vmem:[%s21 + $0x128] sm:$0xff]
    %v2084 = vld [vmem:[%s21 + $0x130] sm:$0xff]
    %v2085 = vld [vmem:[%s21 + $0x138] sm:$0xff]
    %v2086 = vld [vmem:[%s21 + $0x140] sm:$0xff]
    %v2087 = vld [vmem:[%s21 + $0x148] sm:$0xff]
    %v2088 = vld [vmem:[%s21 + $0x150] sm:$0xff]
    %v2089 = vld [vmem:[%s21 + $0x158] sm:$0xff]
    %v2090 = vld [vmem:[%s21 + $0x160] sm:$0xff]
    %v2091 = vld [vmem:[%s21 + $0x168] sm:$0xff]
    %v2092 = vld [vmem:[%s21 + $0x170] sm:$0xff]
    %v2093 = vld [vmem:[%s21 + $0x178] sm:$0xff]
    %v2094 = vld [vmem:[%s21 + $0x180] sm:$0xff]
    %v2095 = vld [vmem:[%s21 + $0x188] sm:$0xff]
    %v2096 = vld [vmem:[%s21 + $0x190] sm:$0xff]
    %v2097 = vld [vmem:[%s21 + $0x198] sm:$0xff]
    %v2098 = vld [vmem:[%s21 + $0x1a0] sm:$0xff]
    %v2099 = vld [vmem:[%s21 + $0x1a8] sm:$0xff]
    %v2100 = vld [vmem:[%s21 + $0x1b0] sm:$0xff]
    %v2101 = vld [vmem:[%s21 + $0x1b8] sm:$0xff]
    %v2102 = vld [vmem:[%s21 + $0x1c0] sm:$0xff]
    %v2103 = vld [vmem:[%s21 + $0x1c8] sm:$0xff]
    %v2104 = vld [vmem:[%s21 + $0x1d0] sm:$0xff]
    %v2105 = vld [vmem:[%s21 + $0x1d8] sm:$0xff]
    %v2106 = vld [vmem:[%s21 + $0x1e0] sm:$0xff]
    %v2107 = vld [vmem:[%s21 + $0x1e8] sm:$0xff]
    %v2108 = vld [vmem:[%s21 + $0x1f0] sm:$0xff]
    %v2109 = vld [vmem:[%s21 + $0x1f8] sm:$0xff]
    %v2110 = vld [vmem:[%s21 + $0x200] sm:$0xff]
    %v2111 = vld [vmem:[%s21 + $0x208] sm:$0xff]
    %v2112 = vld [vmem:[%s21 + $0x210] sm:$0xff]
    %v2113 = vld [vmem:[%s21 + $0x218] sm:$0xff]
    %v2114 = vld [vmem:[%s21 + $0x220] sm:$0xff]
    %v2115 = vld [vmem:[%s21 + $0x228] sm:$0xff]
    %v2116 = vld [vmem:[%s21 + $0x230] sm:$0xff]
    %v2117 = vld [vmem:[%s21 + $0x238] sm:$0xff]
    %v2118 = vld [vmem:[%s21 + $0x240] sm:$0xff]
    %v2119 = vld [vmem:[%s21 + $0x248] sm:$0xff]
    %v2120 = vld [vmem:[%s21 + $0x250] sm:$0xff]
    %v2121 = vld [vmem:[%s21 + $0x258] sm:$0xff]
    %v2122 = vld [vmem:[%s21 + $0x260] sm:$0xff]
    %v2123 = vld [vmem:[%s21 + $0x268] sm:$0xff]
    %v2124 = vld [vmem:[%s21 + $0x270] sm:$0xff]
    %v2125 = vld [vmem:[%s21 + $0x278] sm:$0xff]
    %v2126 = vld [vmem:[%s21 + $0x280] sm:$0xff]
    %v2127 = vld [vmem:[%s21 + $0x288] sm:$0xff]
    %v2128 = vld [vmem:[%s21 + $0x290] sm:$0xff]
    %v2129 = vld [vmem:[%s21 + $0x298] sm:$0xff]
    %v2130 = vld [vmem:[%s21 + $0x2a0] sm:$0xff]
    %v2131 = vld [vmem:[%s21 + $0x2a8] sm:$0xff]
    %v2132 = vld [vmem:[%s21 + $0x2b0] sm:$0xff]
    %v2133 = vld [vmem:[%s21 + $0x2b8] sm:$0xff]
    %v2134 = vld [vmem:[%s21 + $0x2c0] sm:$0xff]
    %v2135 = vld [vmem:[%s21 + $0x2c8] sm:$0xff]
    %v2136 = vld [vmem:[%s21 + $0x2d0] sm:$0xff]
    %v2137 = vld [vmem:[%s21 + $0x2d8] sm:$0xff]
    %v2138 = vld [vmem:[%s21 + $0x2e0] sm:$0xff]
    %v2139 = vld [vmem:[%s21 + $0x2e8] sm:$0xff]
    %v2140 = vld [vmem:[%s21 + $0x2f0] sm:$0xff]
    %v2141 = vld [vmem:[%s21 + $0x2f8] sm:$0xff]
    %v2142 = vld [vmem:[%s23] sm:$0x3]
    %v2144 = vlaneseq
    %v2145 = vshrl.u32 %v2144, 7
    %v2146 = vsub.s32 0, %v2145
    %v2147 = vrot.slane %v2142, %v2146
    %v2148 = vlaneseq
    %v2149 = vshrl.u32 %v2148, 7
    %v2150 = vsub.s32 1, %v2149
    %v2151 = vrot.slane %v2142, %v2150
    %v2250 = vunpack.c.l.b16 %v2046
    %v2251 = vunpack.c.h.b16 %v2046
    %v2252 = vunpack.c.l.b16 %v2047
    %v2253 = vunpack.c.h.b16 %v2047
    %v2254 = vunpack.c.l.b16 %v2048
    %v2255 = vunpack.c.h.b16 %v2048
    %v2256 = vunpack.c.l.b16 %v2049
    %v2257 = vunpack.c.h.b16 %v2049
    %v2258 = vunpack.c.l.b16 %v2050
    %v2259 = vunpack.c.h.b16 %v2050
    %v2260 = vunpack.c.l.b16 %v2051
    %v2261 = vunpack.c.h.b16 %v2051
    %v2262 = vunpack.c.l.b16 %v2052
    %v2263 = vunpack.c.h.b16 %v2052
    %v2264 = vunpack.c.l.b16 %v2053
    %v2265 = vunpack.c.h.b16 %v2053
    %v2266 = vunpack.c.l.b16 %v2054
    %v2267 = vunpack.c.h.b16 %v2054
    %v2268 = vunpack.c.l.b16 %v2055
    %v2269 = vunpack.c.h.b16 %v2055
    %v2270 = vunpack.c.l.b16 %v2056
    %v2271 = vunpack.c.h.b16 %v2056
    %v2272 = vunpack.c.l.b16 %v2057
    %v2273 = vunpack.c.h.b16 %v2057
    %v2274 = vunpack.c.l.b16 %v2058
    %v2275 = vunpack.c.h.b16 %v2058
    %v2276 = vunpack.c.l.b16 %v2059
    %v2277 = vunpack.c.h.b16 %v2059
    %v2278 = vunpack.c.l.b16 %v2060
    %v2279 = vunpack.c.h.b16 %v2060
    %v2280 = vunpack.c.l.b16 %v2061
    %v2281 = vunpack.c.h.b16 %v2061
    %v2282 = vunpack.c.l.b16 %v2062
    %v2283 = vunpack.c.h.b16 %v2062
    %v2284 = vunpack.c.l.b16 %v2063
    %v2285 = vunpack.c.h.b16 %v2063
    %v2286 = vunpack.c.l.b16 %v2064
    %v2287 = vunpack.c.h.b16 %v2064
    %v2288 = vunpack.c.l.b16 %v2065
    %v2289 = vunpack.c.h.b16 %v2065
    %v2290 = vunpack.c.l.b16 %v2066
    %v2291 = vunpack.c.h.b16 %v2066
    %v2292 = vunpack.c.l.b16 %v2067
    %v2293 = vunpack.c.h.b16 %v2067
    %v2294 = vunpack.c.l.b16 %v2068
    %v2295 = vunpack.c.h.b16 %v2068
    %v2296 = vunpack.c.l.b16 %v2069
    %v2297 = vunpack.c.h.b16 %v2069
    %v2298 = vunpack.c.l.b16 %v2070
    %v2299 = vunpack.c.h.b16 %v2070
    %v2300 = vunpack.c.l.b16 %v2071
    %v2301 = vunpack.c.h.b16 %v2071
    %v2302 = vunpack.c.l.b16 %v2072
    %v2303 = vunpack.c.h.b16 %v2072
    %v2304 = vunpack.c.l.b16 %v2073
    %v2305 = vunpack.c.h.b16 %v2073
    %v2306 = vunpack.c.l.b16 %v2074
    %v2307 = vunpack.c.h.b16 %v2074
    %v2308 = vunpack.c.l.b16 %v2075
    %v2309 = vunpack.c.h.b16 %v2075
    %v2310 = vunpack.c.l.b16 %v2076
    %v2311 = vunpack.c.h.b16 %v2076
    %v2312 = vunpack.c.l.b16 %v2077
    %v2313 = vunpack.c.h.b16 %v2077
    %v2314 = vunpack.c.l.b16 %v2078
    %v2315 = vunpack.c.h.b16 %v2078
    %v2316 = vunpack.c.l.b16 %v2079
    %v2317 = vunpack.c.h.b16 %v2079
    %v2318 = vunpack.c.l.b16 %v2080
    %v2319 = vunpack.c.h.b16 %v2080
    %v2320 = vunpack.c.l.b16 %v2081
    %v2321 = vunpack.c.h.b16 %v2081
    %v2322 = vunpack.c.l.b16 %v2082
    %v2323 = vunpack.c.h.b16 %v2082
    %v2324 = vunpack.c.l.b16 %v2083
    %v2325 = vunpack.c.h.b16 %v2083
    %v2326 = vunpack.c.l.b16 %v2084
    %v2327 = vunpack.c.h.b16 %v2084
    %v2328 = vunpack.c.l.b16 %v2085
    %v2329 = vunpack.c.h.b16 %v2085
    %v2330 = vunpack.c.l.b16 %v2086
    %v2331 = vunpack.c.h.b16 %v2086
    %v2332 = vunpack.c.l.b16 %v2087
    %v2333 = vunpack.c.h.b16 %v2087
    %v2334 = vunpack.c.l.b16 %v2088
    %v2335 = vunpack.c.h.b16 %v2088
    %v2336 = vunpack.c.l.b16 %v2089
    %v2337 = vunpack.c.h.b16 %v2089
    %v2338 = vunpack.c.l.b16 %v2090
    %v2339 = vunpack.c.h.b16 %v2090
    %v2340 = vunpack.c.l.b16 %v2091
    %v2341 = vunpack.c.h.b16 %v2091
    %v2342 = vunpack.c.l.b16 %v2092
    %v2343 = vunpack.c.h.b16 %v2092
    %v2344 = vunpack.c.l.b16 %v2093
    %v2345 = vunpack.c.h.b16 %v2093
    %v2346 = vunpack.c.l.b16 %v2094
    %v2347 = vunpack.c.h.b16 %v2094
    %v2348 = vunpack.c.l.b16 %v2095
    %v2349 = vunpack.c.h.b16 %v2095
    %v2350 = vunpack.c.l.b16 %v2096
    %v2351 = vunpack.c.h.b16 %v2096
    %v2352 = vunpack.c.l.b16 %v2097
    %v2353 = vunpack.c.h.b16 %v2097
    %v2354 = vunpack.c.l.b16 %v2098
    %v2355 = vunpack.c.h.b16 %v2098
    %v2356 = vunpack.c.l.b16 %v2099
    %v2357 = vunpack.c.h.b16 %v2099
    %v2358 = vunpack.c.l.b16 %v2100
    %v2359 = vunpack.c.h.b16 %v2100
    %v2360 = vunpack.c.l.b16 %v2101
    %v2361 = vunpack.c.h.b16 %v2101
    %v2362 = vunpack.c.l.b16 %v2102
    %v2363 = vunpack.c.h.b16 %v2102
    %v2364 = vunpack.c.l.b16 %v2103
    %v2365 = vunpack.c.h.b16 %v2103
    %v2366 = vunpack.c.l.b16 %v2104
    %v2367 = vunpack.c.h.b16 %v2104
    %v2368 = vunpack.c.l.b16 %v2105
    %v2369 = vunpack.c.h.b16 %v2105
    %v2370 = vunpack.c.l.b16 %v2106
    %v2371 = vunpack.c.h.b16 %v2106
    %v2372 = vunpack.c.l.b16 %v2107
    %v2373 = vunpack.c.h.b16 %v2107
    %v2374 = vunpack.c.l.b16 %v2108
    %v2375 = vunpack.c.h.b16 %v2108
    %v2376 = vunpack.c.l.b16 %v2109
    %v2377 = vunpack.c.h.b16 %v2109
    %v2378 = vunpack.c.l.b16 %v2110
    %v2379 = vunpack.c.h.b16 %v2110
    %v2380 = vunpack.c.l.b16 %v2111
    %v2381 = vunpack.c.h.b16 %v2111
    %v2382 = vunpack.c.l.b16 %v2112
    %v2383 = vunpack.c.h.b16 %v2112
    %v2384 = vunpack.c.l.b16 %v2113
    %v2385 = vunpack.c.h.b16 %v2113
    %v2386 = vunpack.c.l.b16 %v2114
    %v2387 = vunpack.c.h.b16 %v2114
    %v2388 = vunpack.c.l.b16 %v2115
    %v2389 = vunpack.c.h.b16 %v2115
    %v2390 = vunpack.c.l.b16 %v2116
    %v2391 = vunpack.c.h.b16 %v2116
    %v2392 = vunpack.c.l.b16 %v2117
    %v2393 = vunpack.c.h.b16 %v2117
    %v2394 = vunpack.c.l.b16 %v2118
    %v2395 = vunpack.c.h.b16 %v2118
    %v2396 = vunpack.c.l.b16 %v2119
    %v2397 = vunpack.c.h.b16 %v2119
    %v2398 = vunpack.c.l.b16 %v2120
    %v2399 = vunpack.c.h.b16 %v2120
    %v2400 = vunpack.c.l.b16 %v2121
    %v2401 = vunpack.c.h.b16 %v2121
    %v2402 = vunpack.c.l.b16 %v2122
    %v2403 = vunpack.c.h.b16 %v2122
    %v2404 = vunpack.c.l.b16 %v2123
    %v2405 = vunpack.c.h.b16 %v2123
    %v2406 = vunpack.c.l.b16 %v2124
    %v2407 = vunpack.c.h.b16 %v2124
    %v2408 = vunpack.c.l.b16 %v2125
    %v2409 = vunpack.c.h.b16 %v2125
    %v2410 = vunpack.c.l.b16 %v2126
    %v2411 = vunpack.c.h.b16 %v2126
    %v2412 = vunpack.c.l.b16 %v2127
    %v2413 = vunpack.c.h.b16 %v2127
    %v2414 = vunpack.c.l.b16 %v2128
    %v2415 = vunpack.c.h.b16 %v2128
    %v2416 = vunpack.c.l.b16 %v2129
    %v2417 = vunpack.c.h.b16 %v2129
    %v2418 = vunpack.c.l.b16 %v2130
    %v2419 = vunpack.c.h.b16 %v2130
    %v2420 = vunpack.c.l.b16 %v2131
    %v2421 = vunpack.c.h.b16 %v2131
    %v2422 = vunpack.c.l.b16 %v2132
    %v2423 = vunpack.c.h.b16 %v2132
    %v2424 = vunpack.c.l.b16 %v2133
    %v2425 = vunpack.c.h.b16 %v2133
    %v2426 = vunpack.c.l.b16 %v2134
    %v2427 = vunpack.c.h.b16 %v2134
    %v2428 = vunpack.c.l.b16 %v2135
    %v2429 = vunpack.c.h.b16 %v2135
    %v2430 = vunpack.c.l.b16 %v2136
    %v2431 = vunpack.c.h.b16 %v2136
    %v2432 = vunpack.c.l.b16 %v2137
    %v2433 = vunpack.c.h.b16 %v2137
    %v2434 = vunpack.c.l.b16 %v2138
    %v2435 = vunpack.c.h.b16 %v2138
    %v2436 = vunpack.c.l.b16 %v2139
    %v2437 = vunpack.c.h.b16 %v2139
    %v2438 = vunpack.c.l.b16 %v2140
    %v2439 = vunpack.c.h.b16 %v2140
    %v2440 = vunpack.c.l.b16 %v2141
    %v2441 = vunpack.c.h.b16 %v2141
    %v2442 = vpack.c.b16 %v2252, %v2250
    %v2443 = vpack.c.b16 %v2253, %v2251
    %v2444 = vpack.c.b16 %v2256, %v2254
    %v2445 = vpack.c.b16 %v2257, %v2255
    %v2446 = vpack.c.b16 %v2260, %v2258
    %v2447 = vpack.c.b16 %v2261, %v2259
    %v2448 = vpack.c.b16 %v2264, %v2262
    %v2449 = vpack.c.b16 %v2265, %v2263
    %v2450 = vpack.c.b16 %v2268, %v2266
    %v2451 = vpack.c.b16 %v2269, %v2267
    %v2452 = vpack.c.b16 %v2272, %v2270
    %v2453 = vpack.c.b16 %v2273, %v2271
    %v2454 = vpack.c.b16 %v2276, %v2274
    %v2455 = vpack.c.b16 %v2277, %v2275
    %v2456 = vpack.c.b16 %v2280, %v2278
    %v2457 = vpack.c.b16 %v2281, %v2279
    %v2458 = vpack.c.b16 %v2284, %v2282
    %v2459 = vpack.c.b16 %v2285, %v2283
    %v2460 = vpack.c.b16 %v2288, %v2286
    %v2461 = vpack.c.b16 %v2289, %v2287
    %v2462 = vpack.c.b16 %v2292, %v2290
    %v2463 = vpack.c.b16 %v2293, %v2291
    %v2464 = vpack.c.b16 %v2296, %v2294
    %v2465 = vpack.c.b16 %v2297, %v2295
    %v2466 = vpack.c.b16 %v2300, %v2298
    %v2467 = vpack.c.b16 %v2301, %v2299
    %v2468 = vpack.c.b16 %v2304, %v2302
    %v2469 = vpack.c.b16 %v2305, %v2303
    %v2470 = vpack.c.b16 %v2308, %v2306
    %v2471 = vpack.c.b16 %v2309, %v2307
    %v2472 = vpack.c.b16 %v2312, %v2310
    %v2473 = vpack.c.b16 %v2313, %v2311
    %v2474 = vpack.c.b16 %v2316, %v2314
    %v2475 = vpack.c.b16 %v2317, %v2315
    %v2476 = vpack.c.b16 %v2320, %v2318
    %v2477 = vpack.c.b16 %v2321, %v2319
    %v2478 = vpack.c.b16 %v2324, %v2322
    %v2479 = vpack.c.b16 %v2325, %v2323
    %v2480 = vpack.c.b16 %v2328, %v2326
    %v2481 = vpack.c.b16 %v2329, %v2327
    %v2482 = vpack.c.b16 %v2332, %v2330
    %v2483 = vpack.c.b16 %v2333, %v2331
    %v2484 = vpack.c.b16 %v2336, %v2334
    %v2485 = vpack.c.b16 %v2337, %v2335
    %v2486 = vpack.c.b16 %v2340, %v2338
    %v2487 = vpack.c.b16 %v2341, %v2339
    %v2488 = vpack.c.b16 %v2344, %v2342
    %v2489 = vpack.c.b16 %v2345, %v2343
    %v2490 = vpack.c.b16 %v2348, %v2346
    %v2491 = vpack.c.b16 %v2349, %v2347
    %v2492 = vpack.c.b16 %v2352, %v2350
    %v2493 = vpack.c.b16 %v2353, %v2351
    %v2494 = vpack.c.b16 %v2356, %v2354
    %v2495 = vpack.c.b16 %v2357, %v2355
    %v2496 = vpack.c.b16 %v2360, %v2358
    %v2497 = vpack.c.b16 %v2361, %v2359
    %v2498 = vpack.c.b16 %v2364, %v2362
    %v2499 = vpack.c.b16 %v2365, %v2363
    %v2500 = vpack.c.b16 %v2368, %v2366
    %v2501 = vpack.c.b16 %v2369, %v2367
    %v2502 = vpack.c.b16 %v2372, %v2370
    %v2503 = vpack.c.b16 %v2373, %v2371
    %v2504 = vpack.c.b16 %v2376, %v2374
    %v2505 = vpack.c.b16 %v2377, %v2375
    %v2506 = vpack.c.b16 %v2380, %v2378
    %v2507 = vpack.c.b16 %v2381, %v2379
    %v2508 = vpack.c.b16 %v2384, %v2382
    %v2509 = vpack.c.b16 %v2385, %v2383
    %v2510 = vpack.c.b16 %v2388, %v2386
    %v2511 = vpack.c.b16 %v2389, %v2387
    %v2512 = vpack.c.b16 %v2392, %v2390
    %v2513 = vpack.c.b16 %v2393, %v2391
    %v2514 = vpack.c.b16 %v2396, %v2394
    %v2515 = vpack.c.b16 %v2397, %v2395
    %v2516 = vpack.c.b16 %v2400, %v2398
    %v2517 = vpack.c.b16 %v2401, %v2399
    %v2518 = vpack.c.b16 %v2404, %v2402
    %v2519 = vpack.c.b16 %v2405, %v2403
    %v2520 = vpack.c.b16 %v2408, %v2406
    %v2521 = vpack.c.b16 %v2409, %v2407
    %v2522 = vpack.c.b16 %v2412, %v2410
    %v2523 = vpack.c.b16 %v2413, %v2411
    %v2524 = vpack.c.b16 %v2416, %v2414
    %v2525 = vpack.c.b16 %v2417, %v2415
    %v2526 = vpack.c.b16 %v2420, %v2418
    %v2527 = vpack.c.b16 %v2421, %v2419
    %v2528 = vpack.c.b16 %v2424, %v2422
    %v2529 = vpack.c.b16 %v2425, %v2423
    %v2530 = vpack.c.b16 %v2428, %v2426
    %v2531 = vpack.c.b16 %v2429, %v2427
    %v2532 = vpack.c.b16 %v2432, %v2430
    %v2533 = vpack.c.b16 %v2433, %v2431
    %v2534 = vpack.c.b16 %v2436, %v2434
    %v2535 = vpack.c.b16 %v2437, %v2435
    %v2536 = vpack.c.b16 %v2440, %v2438
    %v2537 = vpack.c.b16 %v2441, %v2439
    %2634 = vmatprep.subr.bf16.mxu0 %v2443
    %2635 = vmatpush1.bf16.msra.mxu0 %v2442
    %2636 = vmatprep.subr.bf16.mxu0 %v2445
    %2637 = vmatpush1.bf16.msra.mxu0 %v2444
    %2638 = vmatprep.subr.bf16.mxu0 %v2447
    %2639 = vmatpush1.bf16.msra.mxu0 %v2446
    %2640 = vmatprep.subr.bf16.mxu0 %v2449
    %2641 = vmatpush1.bf16.msra.mxu0 %v2448
    %2642 = vmatprep.subr.bf16.mxu0 %v2451
    %2643 = vmatpush1.bf16.msra.mxu0 %v2450
    %2644 = vmatprep.subr.bf16.mxu0 %v2453
    %2645 = vmatpush1.bf16.msra.mxu0 %v2452
    %2646 = vmatprep.subr.bf16.mxu0 %v2455
    %2647 = vmatpush1.bf16.msra.mxu0 %v2454
    %2648 = vmatprep.subr.bf16.mxu0 %v2457
    %2649 = vmatpush1.bf16.msra.mxu0 %v2456
    %2650 = vmatprep.subr.bf16.mxu0 %v2459
    %2651 = vmatpush1.bf16.msra.mxu0 %v2458
    %2652 = vmatprep.subr.bf16.mxu0 %v2461
    %2653 = vmatpush1.bf16.msra.mxu0 %v2460
    %2654 = vmatprep.subr.bf16.mxu0 %v2463
    %2655 = vmatpush1.bf16.msra.mxu0 %v2462
    %2656 = vmatprep.subr.bf16.mxu0 %v2465
    %2657 = vmatpush1.bf16.msra.mxu0 %v2464
    %2658 = vmatprep.subr.bf16.mxu0 %v2467
    %2659 = vmatpush1.bf16.msra.mxu0 %v2466
    %2660 = vmatprep.subr.bf16.mxu0 %v2469
    %2661 = vmatpush1.bf16.msra.mxu0 %v2468
    %2662 = vmatprep.subr.bf16.mxu0 %v2471
    %2663 = vmatpush1.bf16.msra.mxu0 %v2470
    %2664 = vmatprep.subr.bf16.mxu0 %v2473
    %2665 = vmatpush1.bf16.msra.mxu0 %v2472
    %2666 = vmatprep.mubr.bf16.mxu0 %v2023
    %2667 = vmatmul.mubr.bf16.gmra.mrb[0].mxu0 %v2022
    %v2668 = vpop.f32.mrb[0].mxu0
    %v2669 = vadd.f32 %v2147, %v2668
    %v2670 = vpop.f32.mrb[0].mxu0
    %v2671 = vadd.f32 %v2151, %v2670
    %v2672 = vpop.f32.mrb[0].mxu0
    %v2673 = vpop.f32.mrb[0].mxu0
    %2674 = vdwg.mxu0
    %2675 = vmatprep.subr.bf16.mxu0 %v2475
    %2676 = vmatpush1.bf16.msra.mxu0 %v2474
    %2677 = vmatprep.subr.bf16.mxu0 %v2477
    %2678 = vmatpush1.bf16.msra.mxu0 %v2476
    %2679 = vmatprep.subr.bf16.mxu0 %v2479
    %2680 = vmatpush1.bf16.msra.mxu0 %v2478
    %2681 = vmatprep.subr.bf16.mxu0 %v2481
    %2682 = vmatpush1.bf16.msra.mxu0 %v2480
    %2683 = vmatprep.subr.bf16.mxu0 %v2483
    %2684 = vmatpush1.bf16.msra.mxu0 %v2482
    %2685 = vmatprep.subr.bf16.mxu0 %v2485
    %2686 = vmatpush1.bf16.msra.mxu0 %v2484
    %2687 = vmatprep.subr.bf16.mxu0 %v2487
    %2688 = vmatpush1.bf16.msra.mxu0 %v2486
    %2689 = vmatprep.subr.bf16.mxu0 %v2489
    %2690 = vmatpush1.bf16.msra.mxu0 %v2488
    %2691 = vmatprep.subr.bf16.mxu0 %v2491
    %2692 = vmatpush1.bf16.msra.mxu0 %v2490
    %2693 = vmatprep.subr.bf16.mxu0 %v2493
    %2694 = vmatpush1.bf16.msra.mxu0 %v2492
    %2695 = vmatprep.subr.bf16.mxu0 %v2495
    %2696 = vmatpush1.bf16.msra.mxu0 %v2494
    %2697 = vmatprep.subr.bf16.mxu0 %v2497
    %2698 = vmatpush1.bf16.msra.mxu0 %v2496
    %2699 = vmatprep.subr.bf16.mxu0 %v2499
    %2700 = vmatpush1.bf16.msra.mxu0 %v2498
    %2701 = vmatprep.subr.bf16.mxu0 %v2501
    %2702 = vmatpush1.bf16.msra.mxu0 %v2500
    %2703 = vmatprep.subr.bf16.mxu0 %v2503
    %2704 = vmatpush1.bf16.msra.mxu0 %v2502
    %2705 = vmatprep.subr.bf16.mxu0 %v2505
    %2706 = vmatpush1.bf16.msra.mxu0 %v2504
    %2707 = vmatprep.mubr.bf16.mxu0 %v2037
    %2708 = vmatmul.mubr.bf16.gmra.mrb[0].mxu0 %v2030
    %v2709 = vpop.f32.mrb[0].mxu0
    %v2710 = vadd.f32 %v2669, %v2709
    %v2711 = vpop.f32.mrb[0].mxu0
    %v2712 = vadd.f32 %v2671, %v2711
    %v2713 = vpop.f32.mrb[0].mxu0
    %v2714 = vpop.f32.mrb[0].mxu0
    %2715 = vdwg.mxu0
    %2716 = vmatprep.subr.bf16.mxu0 %v2507
    %2717 = vmatpush1.bf16.msra.mxu0 %v2506
    %2718 = vmatprep.subr.bf16.mxu0 %v2509
    %2719 = vmatpush1.bf16.msra.mxu0 %v2508
    %2720 = vmatprep.subr.bf16.mxu0 %v2511
    %2721 = vmatpush1.bf16.msra.mxu0 %v2510
    %2722 = vmatprep.subr.bf16.mxu0 %v2513
    %2723 = vmatpush1.bf16.msra.mxu0 %v2512
    %2724 = vmatprep.subr.bf16.mxu0 %v2515
    %2725 = vmatpush1.bf16.msra.mxu0 %v2514
    %2726 = vmatprep.subr.bf16.mxu0 %v2517
    %2727 = vmatpush1.bf16.msra.mxu0 %v2516
    %2728 = vmatprep.subr.bf16.mxu0 %v2519
    %2729 = vmatpush1.bf16.msra.mxu0 %v2518
    %2730 = vmatprep.subr.bf16.mxu0 %v2521
    %2731 = vmatpush1.bf16.msra.mxu0 %v2520
    %2732 = vmatprep.subr.bf16.mxu0 %v2523
    %2733 = vmatpush1.bf16.msra.mxu0 %v2522
    %2734 = vmatprep.subr.bf16.mxu0 %v2525
    %2735 = vmatpush1.bf16.msra.mxu0 %v2524
    %2736 = vmatprep.subr.bf16.mxu0 %v2527
    %2737 = vmatpush1.bf16.msra.mxu0 %v2526
    %2738 = vmatprep.subr.bf16.mxu0 %v2529
    %2739 = vmatpush1.bf16.msra.mxu0 %v2528
    %2740 = vmatprep.subr.bf16.mxu0 %v2531
    %2741 = vmatpush1.bf16.msra.mxu0 %v2530
    %2742 = vmatprep.subr.bf16.mxu0 %v2533
    %2743 = vmatpush1.bf16.msra.mxu0 %v2532
    %2744 = vmatprep.subr.bf16.mxu0 %v2535
    %2745 = vmatpush1.bf16.msra.mxu0 %v2534
    %2746 = vmatprep.subr.bf16.mxu0 %v2537
    %2747 = vmatpush1.bf16.msra.mxu0 %v2536
    %2748 = vmatprep.mubr.bf16.mxu0 %v2043
    %2749 = vmatmul.mubr.bf16.gmra.mrb[0].mxu0 %v2042
    %v2750 = vpop.f32.mrb[0].mxu0
    %v2751 = vadd.f32 %v2710, %v2750
    %v2752 = vpop.f32.mrb[0].mxu0
    %v2753 = vadd.f32 %v2712, %v2752
    %v2754 = vpop.f32.mrb[0].mxu0
    %v2755 = vpop.f32.mrb[0].mxu0
    %2756 = vdwg.mxu0
    %v2757 = vadd.f32 %v2751, %v1590
    %v2758 = vadd.f32 %v2753, %v1592
    %v2760 = vlaneseq
    %v2761 = vshrl.u32 %v2760, 7
    %v2762 = vsub.s32 0, %v2761
    %v2763 = vrot.slane %v1596, %v2762
    %v2764 = vlaneseq
    %v2765 = vshrl.u32 %v2764, 7
    %v2766 = vsub.s32 1, %v2765
    %v2767 = vrot.slane %v1596, %v2766
    %v2770 = vadd.f32 %v2757, %v2763
    %v2771 = vadd.f32 %v2758, %v2767
    %v2772 = vmax.f32 %v2770, 0.0
    %v2773 = vmax.f32 %v2771, 0.0
    %v2774 = vpack.c.bf16 %v2772, %v2772
    %v2775 = vpack.c.bf16 %v2773, %v2773
    %v2776 = vld [vmem:[%s39] sm:$0xf]
    %v2777 = vld [vmem:[%s39 + $0x4] sm:$0xf]
    %v2778 = vld [vmem:[%s39 + $0x8] sm:$0xf]
    %v2779 = vld [vmem:[%s39 + $0xc] sm:$0xf]
    %v2780 = vld [vmem:[%s39 + $0x10] sm:$0xf]
    %v2781 = vld [vmem:[%s39 + $0x14] sm:$0xf]
    %v2782 = vld [vmem:[%s39 + $0x18] sm:$0xf]
    %v2783 = vld [vmem:[%s39 + $0x1c] sm:$0xf]
    %v2784 = vld [vmem:[%s39 + $0x20] sm:$0xf]
    %v2785 = vld [vmem:[%s39 + $0x24] sm:$0xf]
    %v2786 = vld [vmem:[%s39 + $0x28] sm:$0xf]
    %v2787 = vld [vmem:[%s39 + $0x2c] sm:$0xf]
    %v2788 = vld [vmem:[%s39 + $0x30] sm:$0xf]
    %v2789 = vld [vmem:[%s39 + $0x34] sm:$0xf]
    %v2790 = vld [vmem:[%s39 + $0x38] sm:$0xf]
    %v2791 = vld [vmem:[%s39 + $0x3c] sm:$0xf]
    %v2792 = vld [vmem:[%s39 + $0x40] sm:$0xf]
    %v2793 = vld [vmem:[%s39 + $0x44] sm:$0xf]
    %v2794 = vld [vmem:[%s39 + $0x48] sm:$0xf]
    %v2795 = vld [vmem:[%s39 + $0x4c] sm:$0xf]
    %v2796 = vld [vmem:[%s39 + $0x50] sm:$0xf]
    %v2797 = vld [vmem:[%s39 + $0x54] sm:$0xf]
    %v2798 = vld [vmem:[%s39 + $0x58] sm:$0xf]
    %v2799 = vld [vmem:[%s39 + $0x5c] sm:$0xf]
    %v2800 = vld [vmem:[%s39 + $0x60] sm:$0xf]
    %v2801 = vld [vmem:[%s39 + $0x64] sm:$0xf]
    %v2802 = vld [vmem:[%s39 + $0x68] sm:$0xf]
    %v2803 = vld [vmem:[%s39 + $0x6c] sm:$0xf]
    %v2804 = vld [vmem:[%s39 + $0x70] sm:$0xf]
    %v2805 = vld [vmem:[%s39 + $0x74] sm:$0xf]
    %v2806 = vld [vmem:[%s39 + $0x78] sm:$0xf]
    %v2807 = vld [vmem:[%s39 + $0x7c] sm:$0xf]
    %v2840 = vunpack.c.l.b16 %v2776
    %v2841 = vunpack.c.l.b16 %v2777
    %v2842 = vunpack.c.l.b16 %v2778
    %v2843 = vunpack.c.l.b16 %v2779
    %v2844 = vunpack.c.l.b16 %v2780
    %v2845 = vunpack.c.l.b16 %v2781
    %v2846 = vunpack.c.l.b16 %v2782
    %v2847 = vunpack.c.l.b16 %v2783
    %v2848 = vunpack.c.l.b16 %v2784
    %v2849 = vunpack.c.l.b16 %v2785
    %v2850 = vunpack.c.l.b16 %v2786
    %v2851 = vunpack.c.l.b16 %v2787
    %v2852 = vunpack.c.l.b16 %v2788
    %v2853 = vunpack.c.l.b16 %v2789
    %v2854 = vunpack.c.l.b16 %v2790
    %v2855 = vunpack.c.l.b16 %v2791
    %v2856 = vunpack.c.l.b16 %v2792
    %v2857 = vunpack.c.l.b16 %v2793
    %v2858 = vunpack.c.l.b16 %v2794
    %v2859 = vunpack.c.l.b16 %v2795
    %v2860 = vunpack.c.l.b16 %v2796
    %v2861 = vunpack.c.l.b16 %v2797
    %v2862 = vunpack.c.l.b16 %v2798
    %v2863 = vunpack.c.l.b16 %v2799
    %v2864 = vunpack.c.l.b16 %v2800
    %v2865 = vunpack.c.l.b16 %v2801
    %v2866 = vunpack.c.l.b16 %v2802
    %v2867 = vunpack.c.l.b16 %v2803
    %v2868 = vunpack.c.l.b16 %v2804
    %v2869 = vunpack.c.l.b16 %v2805
    %v2870 = vunpack.c.l.b16 %v2806
    %v2871 = vunpack.c.l.b16 %v2807
    %v2872 = vpack.c.b16 %v2841, %v2840
    %v2873 = vpack.c.b16 %v2843, %v2842
    %v2874 = vpack.c.b16 %v2845, %v2844
    %v2875 = vpack.c.b16 %v2847, %v2846
    %v2876 = vpack.c.b16 %v2849, %v2848
    %v2877 = vpack.c.b16 %v2851, %v2850
    %v2878 = vpack.c.b16 %v2853, %v2852
    %v2879 = vpack.c.b16 %v2855, %v2854
    %v2880 = vpack.c.b16 %v2857, %v2856
    %v2881 = vpack.c.b16 %v2859, %v2858
    %v2882 = vpack.c.b16 %v2861, %v2860
    %v2883 = vpack.c.b16 %v2863, %v2862
    %v2884 = vpack.c.b16 %v2865, %v2864
    %v2885 = vpack.c.b16 %v2867, %v2866
    %v2886 = vpack.c.b16 %v2869, %v2868
    %v2887 = vpack.c.b16 %v2871, %v2870
    %2904 = vmatprep.subr.bf16.mxu0 0
    %2905 = vmatpush1.bf16.msra.mxu0 %v2872
    %2906 = vmatprep.subr.bf16.mxu0 0
    %2907 = vmatpush1.bf16.msra.mxu0 %v2873
    %2908 = vmatprep.subr.bf16.mxu0 0
    %2909 = vmatpush1.bf16.msra.mxu0 %v2874
    %2910 = vmatprep.subr.bf16.mxu0 0
    %2911 = vmatpush1.bf16.msra.mxu0 %v2875
    %2912 = vmatprep.subr.bf16.mxu0 0
    %2913 = vmatpush1.bf16.msra.mxu0 %v2876
    %2914 = vmatprep.subr.bf16.mxu0 0
    %2915 = vmatpush1.bf16.msra.mxu0 %v2877
    %2916 = vmatprep.subr.bf16.mxu0 0
    %2917 = vmatpush1.bf16.msra.mxu0 %v2878
    %2918 = vmatprep.subr.bf16.mxu0 0
    %2919 = vmatpush1.bf16.msra.mxu0 %v2879
    %2920 = vmatprep.subr.bf16.mxu0 0
    %2921 = vmatpush1.bf16.msra.mxu0 %v2880
    %2922 = vmatprep.subr.bf16.mxu0 0
    %2923 = vmatpush1.bf16.msra.mxu0 %v2881
    %2924 = vmatprep.subr.bf16.mxu0 0
    %2925 = vmatpush1.bf16.msra.mxu0 %v2882
    %2926 = vmatprep.subr.bf16.mxu0 0
    %2927 = vmatpush1.bf16.msra.mxu0 %v2883
    %2928 = vmatprep.subr.bf16.mxu0 0
    %2929 = vmatpush1.bf16.msra.mxu0 %v2884
    %2930 = vmatprep.subr.bf16.mxu0 0
    %2931 = vmatpush1.bf16.msra.mxu0 %v2885
    %2932 = vmatprep.subr.bf16.mxu0 0
    %2933 = vmatpush1.bf16.msra.mxu0 %v2886
    %2934 = vmatprep.subr.bf16.mxu0 0
    %2935 = vmatpush1.bf16.msra.mxu0 %v2887
    %2936 = vmatprep.mubr.bf16.mxu0 %v2775
    %2937 = vmatmul.mubr.bf16.gmra.mrb[0].mxu0 %v2774
    %v2938 = vpop.f32.mrb[0].mxu0
    %v2939 = vadd.f32 0.0, %v2938
    %v2940 = vpop.f32.mrb[0].mxu0
    %v2941 = vpop.f32.mrb[0].mxu0
    %v2942 = vpop.f32.mrb[0].mxu0
    %2943 = vdwg.mxu0
    %v2944 = vld [vmem:[%s41] sm:$0x1]
    %v2945 = vld [vmem:[%s29] sm:$0xf]
    %v2946 = vld [vmem:[%s29 + $0x4] sm:$0xf]
    %v2947 = vld [vmem:[%s29 + $0x8] sm:$0xf]
    %v2948 = vld [vmem:[%s29 + $0xc] sm:$0xf]
    %v2949 = vld [vmem:[%s29 + $0x10] sm:$0xf]
    %v2950 = vld [vmem:[%s29 + $0x14] sm:$0xf]
    %v2951 = vld [vmem:[%s29 + $0x18] sm:$0xf]
    %v2952 = vld [vmem:[%s29 + $0x1c] sm:$0xf]
    %v2953 = vld [vmem:[%s29 + $0x20] sm:$0xf]
    %v2954 = vld [vmem:[%s29 + $0x24] sm:$0xf]
    %v2955 = vld [vmem:[%s29 + $0x28] sm:$0xf]
    %v2956 = vld [vmem:[%s29 + $0x2c] sm:$0xf]
    %v2957 = vld [vmem:[%s29 + $0x30] sm:$0xf]
    %v2958 = vld [vmem:[%s29 + $0x34] sm:$0xf]
    %v2959 = vld [vmem:[%s29 + $0x38] sm:$0xf]
    %v2960 = vld [vmem:[%s29 + $0x3c] sm:$0xf]
    %v2961 = vld [vmem:[%s29 + $0x40] sm:$0xf]
    %v2962 = vld [vmem:[%s29 + $0x44] sm:$0xf]
    %v2963 = vld [vmem:[%s29 + $0x48] sm:$0xf]
    %v2964 = vld [vmem:[%s29 + $0x4c] sm:$0xf]
    %v2965 = vld [vmem:[%s29 + $0x50] sm:$0xf]
    %v2966 = vld [vmem:[%s29 + $0x54] sm:$0xf]
    %v2967 = vld [vmem:[%s29 + $0x58] sm:$0xf]
    %v2968 = vld [vmem:[%s29 + $0x5c] sm:$0xf]
    %v2969 = vld [vmem:[%s29 + $0x60] sm:$0xf]
    %v2970 = vld [vmem:[%s29 + $0x64] sm:$0xf]
    %v2971 = vld [vmem:[%s29 + $0x68] sm:$0xf]
    %v2972 = vld [vmem:[%s29 + $0x6c] sm:$0xf]
    %v2973 = vld [vmem:[%s29 + $0x70] sm:$0xf]
    %v2974 = vld [vmem:[%s29 + $0x74] sm:$0xf]
    %v2975 = vld [vmem:[%s29 + $0x78] sm:$0xf]
    %v2976 = vld [vmem:[%s29 + $0x7c] sm:$0xf]
    %v3009 = vunpack.c.l.b16 %v2945
    %v3010 = vunpack.c.l.b16 %v2946
    %v3011 = vunpack.c.l.b16 %v2947
    %v3012 = vunpack.c.l.b16 %v2948
    %v3013 = vunpack.c.l.b16 %v2949
    %v3014 = vunpack.c.l.b16 %v2950
    %v3015 = vunpack.c.l.b16 %v2951
    %v3016 = vunpack.c.l.b16 %v2952
    %v3017 = vunpack.c.l.b16 %v2953
    %v3018 = vunpack.c.l.b16 %v2954
    %v3019 = vunpack.c.l.b16 %v2955
    %v3020 = vunpack.c.l.b16 %v2956
    %v3021 = vunpack.c.l.b16 %v2957
    %v3022 = vunpack.c.l.b16 %v2958
    %v3023 = vunpack.c.l.b16 %v2959
    %v3024 = vunpack.c.l.b16 %v2960
    %v3025 = vunpack.c.l.b16 %v2961
    %v3026 = vunpack.c.l.b16 %v2962
    %v3027 = vunpack.c.l.b16 %v2963
    %v3028 = vunpack.c.l.b16 %v2964
    %v3029 = vunpack.c.l.b16 %v2965
    %v3030 = vunpack.c.l.b16 %v2966
    %v3031 = vunpack.c.l.b16 %v2967
    %v3032 = vunpack.c.l.b16 %v2968
    %v3033 = vunpack.c.l.b16 %v2969
    %v3034 = vunpack.c.l.b16 %v2970
    %v3035 = vunpack.c.l.b16 %v2971
    %v3036 = vunpack.c.l.b16 %v2972
    %v3037 = vunpack.c.l.b16 %v2973
    %v3038 = vunpack.c.l.b16 %v2974
    %v3039 = vunpack.c.l.b16 %v2975
    %v3040 = vunpack.c.l.b16 %v2976
    %v3041 = vpack.c.b16 %v3010, %v3009
    %v3042 = vpack.c.b16 %v3012, %v3011
    %v3043 = vpack.c.b16 %v3014, %v3013
    %v3044 = vpack.c.b16 %v3016, %v3015
    %v3045 = vpack.c.b16 %v3018, %v3017
    %v3046 = vpack.c.b16 %v3020, %v3019
    %v3047 = vpack.c.b16 %v3022, %v3021
    %v3048 = vpack.c.b16 %v3024, %v3023
    %v3049 = vpack.c.b16 %v3026, %v3025
    %v3050 = vpack.c.b16 %v3028, %v3027
    %v3051 = vpack.c.b16 %v3030, %v3029
    %v3052 = vpack.c.b16 %v3032, %v3031
    %v3053 = vpack.c.b16 %v3034, %v3033
    %v3054 = vpack.c.b16 %v3036, %v3035
    %v3055 = vpack.c.b16 %v3038, %v3037
    %v3056 = vpack.c.b16 %v3040, %v3039
    %3073 = vmatprep.subr.bf16.mxu0 0
    %3074 = vmatpush1.bf16.msra.mxu0 %v3041
    %3075 = vmatprep.subr.bf16.mxu0 0
    %3076 = vmatpush1.bf16.msra.mxu0 %v3042
    %3077 = vmatprep.subr.bf16.mxu0 0
    %3078 = vmatpush1.bf16.msra.mxu0 %v3043
    %3079 = vmatprep.subr.bf16.mxu0 0
    %3080 = vmatpush1.bf16.msra.mxu0 %v3044
    %3081 = vmatprep.subr.bf16.mxu0 0
    %3082 = vmatpush1.bf16.msra.mxu0 %v3045
    %3083 = vmatprep.subr.bf16.mxu0 0
    %3084 = vmatpush1.bf16.msra.mxu0 %v3046
    %3085 = vmatprep.subr.bf16.mxu0 0
    %3086 = vmatpush1.bf16.msra.mxu0 %v3047
    %3087 = vmatprep.subr.bf16.mxu0 0
    %3088 = vmatpush1.bf16.msra.mxu0 %v3048
    %3089 = vmatprep.subr.bf16.mxu0 0
    %3090 = vmatpush1.bf16.msra.mxu0 %v3049
    %3091 = vmatprep.subr.bf16.mxu0 0
    %3092 = vmatpush1.bf16.msra.mxu0 %v3050
    %3093 = vmatprep.subr.bf16.mxu0 0
    %3094 = vmatpush1.bf16.msra.mxu0 %v3051
    %3095 = vmatprep.subr.bf16.mxu0 0
    %3096 = vmatpush1.bf16.msra.mxu0 %v3052
    %3097 = vmatprep.subr.bf16.mxu0 0
    %3098 = vmatpush1.bf16.msra.mxu0 %v3053
    %3099 = vmatprep.subr.bf16.mxu0 0
    %3100 = vmatpush1.bf16.msra.mxu0 %v3054
    %3101 = vmatprep.subr.bf16.mxu0 0
    %3102 = vmatpush1.bf16.msra.mxu0 %v3055
    %3103 = vmatprep.subr.bf16.mxu0 0
    %3104 = vmatpush1.bf16.msra.mxu0 %v3056
    %3105 = vmatprep.mubr.bf16.mxu0 %v2775
    %3106 = vmatmul.mubr.bf16.gmra.mrb[0].mxu0 %v2774
    %v3107 = vpop.f32.mrb[0].mxu0
    %v3108 = vadd.f32 0.0, %v3107
    %v3109 = vpop.f32.mrb[0].mxu0
    %v3110 = vpop.f32.mrb[0].mxu0
    %v3111 = vpop.f32.mrb[0].mxu0
    %3112 = vdwg.mxu0
    %v3114 = vshrl.u32 %v2774, 16
    %v3116 = vshll.u32 %v2774, 16
    %v3118 = vrot.slane %v3116, 1
    %v3119 = vor.u32 %v3114, %v3118
    %v3121 = vshrl.u32 %v2775, 16
    %v3123 = vshll.u32 %v2775, 16
    %v3125 = vrot.slane %v3123, 1
    %v3126 = vor.u32 %v3121, %v3125
    %v3129 = vld [vmem:[%s31] sm:$0xf]
    %v3130 = vld [vmem:[%s31 + $0x4] sm:$0xf]
    %v3131 = vld [vmem:[%s31 + $0x8] sm:$0xf]
    %v3132 = vld [vmem:[%s31 + $0xc] sm:$0xf]
    %v3133 = vld [vmem:[%s31 + $0x10] sm:$0xf]
    %v3134 = vld [vmem:[%s31 + $0x14] sm:$0xf]
    %v3135 = vld [vmem:[%s31 + $0x18] sm:$0xf]
    %v3136 = vld [vmem:[%s31 + $0x1c] sm:$0xf]
    %v3137 = vld [vmem:[%s31 + $0x20] sm:$0xf]
    %v3138 = vld [vmem:[%s31 + $0x24] sm:$0xf]
    %v3139 = vld [vmem:[%s31 + $0x28] sm:$0xf]
    %v3140 = vld [vmem:[%s31 + $0x2c] sm:$0xf]
    %v3141 = vld [vmem:[%s31 + $0x30] sm:$0xf]
    %v3142 = vld [vmem:[%s31 + $0x34] sm:$0xf]
    %v3143 = vld [vmem:[%s31 + $0x38] sm:$0xf]
    %v3144 = vld [vmem:[%s31 + $0x3c] sm:$0xf]
    %v3145 = vld [vmem:[%s31 + $0x40] sm:$0xf]
    %v3146 = vld [vmem:[%s31 + $0x44] sm:$0xf]
    %v3147 = vld [vmem:[%s31 + $0x48] sm:$0xf]
    %v3148 = vld [vmem:[%s31 + $0x4c] sm:$0xf]
    %v3149 = vld [vmem:[%s31 + $0x50] sm:$0xf]
    %v3150 = vld [vmem:[%s31 + $0x54] sm:$0xf]
    %v3151 = vld [vmem:[%s31 + $0x58] sm:$0xf]
    %v3152 = vld [vmem:[%s31 + $0x5c] sm:$0xf]
    %v3153 = vld [vmem:[%s31 + $0x60] sm:$0xf]
    %v3154 = vld [vmem:[%s31 + $0x64] sm:$0xf]
    %v3155 = vld [vmem:[%s31 + $0x68] sm:$0xf]
    %v3156 = vld [vmem:[%s31 + $0x6c] sm:$0xf]
    %v3157 = vld [vmem:[%s31 + $0x70] sm:$0xf]
    %v3158 = vld [vmem:[%s31 + $0x74] sm:$0xf]
    %v3159 = vld [vmem:[%s31 + $0x78] sm:$0xf]
    %v3160 = vld [vmem:[%s31 + $0x7c] sm:$0xf]
    %v3161 = vld [vmem:[%s31 + $0x80] sm:$0xf]
    %v3162 = vld [vmem:[%s31 + $0x84] sm:$0xf]
    %v3163 = vld [vmem:[%s31 + $0x88] sm:$0xf]
    %v3164 = vld [vmem:[%s31 + $0x8c] sm:$0xf]
    %v3165 = vld [vmem:[%s31 + $0x90] sm:$0xf]
    %v3166 = vld [vmem:[%s31 + $0x94] sm:$0xf]
    %v3167 = vld [vmem:[%s31 + $0x98] sm:$0xf]
    %v3168 = vld [vmem:[%s31 + $0x9c] sm:$0xf]
    %v3169 = vld [vmem:[%s31 + $0xa0] sm:$0xf]
    %v3170 = vld [vmem:[%s31 + $0xa4] sm:$0xf]
    %v3171 = vld [vmem:[%s31 + $0xa8] sm:$0xf]
    %v3172 = vld [vmem:[%s31 + $0xac] sm:$0xf]
    %v3173 = vld [vmem:[%s31 + $0xb0] sm:$0xf]
    %v3174 = vld [vmem:[%s31 + $0xb4] sm:$0xf]
    %v3175 = vld [vmem:[%s31 + $0xb8] sm:$0xf]
    %v3176 = vld [vmem:[%s31 + $0xbc] sm:$0xf]
    %v3177 = vld [vmem:[%s31 + $0xc0] sm:$0xf]
    %v3178 = vld [vmem:[%s31 + $0xc4] sm:$0xf]
    %v3179 = vld [vmem:[%s31 + $0xc8] sm:$0xf]
    %v3180 = vld [vmem:[%s31 + $0xcc] sm:$0xf]
    %v3181 = vld [vmem:[%s31 + $0xd0] sm:$0xf]
    %v3182 = vld [vmem:[%s31 + $0xd4] sm:$0xf]
    %v3183 = vld [vmem:[%s31 + $0xd8] sm:$0xf]
    %v3184 = vld [vmem:[%s31 + $0xdc] sm:$0xf]
    %v3185 = vld [vmem:[%s31 + $0xe0] sm:$0xf]
    %v3186 = vld [vmem:[%s31 + $0xe4] sm:$0xf]
    %v3187 = vld [vmem:[%s31 + $0xe8] sm:$0xf]
    %v3188 = vld [vmem:[%s31 + $0xec] sm:$0xf]
    %v3189 = vld [vmem:[%s31 + $0xf0] sm:$0xf]
    %v3190 = vld [vmem:[%s31 + $0xf4] sm:$0xf]
    %v3191 = vld [vmem:[%s31 + $0xf8] sm:$0xf]
    %v3192 = vld [vmem:[%s31 + $0xfc] sm:$0xf]
    %v3257 = vunpack.c.l.b16 %v3129
    %v3258 = vunpack.c.l.b16 %v3130
    %v3259 = vunpack.c.l.b16 %v3131
    %v3260 = vunpack.c.l.b16 %v3132
    %v3261 = vunpack.c.l.b16 %v3133
    %v3262 = vunpack.c.l.b16 %v3134
    %v3263 = vunpack.c.l.b16 %v3135
    %v3264 = vunpack.c.l.b16 %v3136
    %v3265 = vunpack.c.l.b16 %v3137
    %v3266 = vunpack.c.l.b16 %v3138
    %v3267 = vunpack.c.l.b16 %v3139
    %v3268 = vunpack.c.l.b16 %v3140
    %v3269 = vunpack.c.l.b16 %v3141
    %v3270 = vunpack.c.l.b16 %v3142
    %v3271 = vunpack.c.l.b16 %v3143
    %v3272 = vunpack.c.l.b16 %v3144
    %v3273 = vunpack.c.l.b16 %v3145
    %v3274 = vunpack.c.l.b16 %v3146
    %v3275 = vunpack.c.l.b16 %v3147
    %v3276 = vunpack.c.l.b16 %v3148
    %v3277 = vunpack.c.l.b16 %v3149
    %v3278 = vunpack.c.l.b16 %v3150
    %v3279 = vunpack.c.l.b16 %v3151
    %v3280 = vunpack.c.l.b16 %v3152
    %v3281 = vunpack.c.l.b16 %v3153
    %v3282 = vunpack.c.l.b16 %v3154
    %v3283 = vunpack.c.l.b16 %v3155
    %v3284 = vunpack.c.l.b16 %v3156
    %v3285 = vunpack.c.l.b16 %v3157
    %v3286 = vunpack.c.l.b16 %v3158
    %v3287 = vunpack.c.l.b16 %v3159
    %v3288 = vunpack.c.l.b16 %v3160
    %v3289 = vunpack.c.l.b16 %v3161
    %v3290 = vunpack.c.l.b16 %v3162
    %v3291 = vunpack.c.l.b16 %v3163
    %v3292 = vunpack.c.l.b16 %v3164
    %v3293 = vunpack.c.l.b16 %v3165
    %v3294 = vunpack.c.l.b16 %v3166
    %v3295 = vunpack.c.l.b16 %v3167
    %v3296 = vunpack.c.l.b16 %v3168
    %v3297 = vunpack.c.l.b16 %v3169
    %v3298 = vunpack.c.l.b16 %v3170
    %v3299 = vunpack.c.l.b16 %v3171
    %v3300 = vunpack.c.l.b16 %v3172
    %v3301 = vunpack.c.l.b16 %v3173
    %v3302 = vunpack.c.l.b16 %v3174
    %v3303 = vunpack.c.l.b16 %v3175
    %v3304 = vunpack.c.l.b16 %v3176
    %v3305 = vunpack.c.l.b16 %v3177
    %v3306 = vunpack.c.l.b16 %v3178
    %v3307 = vunpack.c.l.b16 %v3179
    %v3308 = vunpack.c.l.b16 %v3180
    %v3309 = vunpack.c.l.b16 %v3181
    %v3310 = vunpack.c.l.b16 %v3182
    %v3311 = vunpack.c.l.b16 %v3183
    %v3312 = vunpack.c.l.b16 %v3184
    %v3313 = vunpack.c.l.b16 %v3185
    %v3314 = vunpack.c.l.b16 %v3186
    %v3315 = vunpack.c.l.b16 %v3187
    %v3316 = vunpack.c.l.b16 %v3188
    %v3317 = vunpack.c.l.b16 %v3189
    %v3318 = vunpack.c.l.b16 %v3190
    %v3319 = vunpack.c.l.b16 %v3191
    %v3320 = vunpack.c.l.b16 %v3192
    %v3321 = vpack.c.b16 %v3258, %v3257
    %v3322 = vpack.c.b16 %v3260, %v3259
    %v3323 = vpack.c.b16 %v3262, %v3261
    %v3324 = vpack.c.b16 %v3264, %v3263
    %v3325 = vpack.c.b16 %v3266, %v3265
    %v3326 = vpack.c.b16 %v3268, %v3267
    %v3327 = vpack.c.b16 %v3270, %v3269
    %v3328 = vpack.c.b16 %v3272, %v3271
    %v3329 = vpack.c.b16 %v3274, %v3273
    %v3330 = vpack.c.b16 %v3276, %v3275
    %v3331 = vpack.c.b16 %v3278, %v3277
    %v3332 = vpack.c.b16 %v3280, %v3279
    %v3333 = vpack.c.b16 %v3282, %v3281
    %v3334 = vpack.c.b16 %v3284, %v3283
    %v3335 = vpack.c.b16 %v3286, %v3285
    %v3336 = vpack.c.b16 %v3288, %v3287
    %v3337 = vpack.c.b16 %v3290, %v3289
    %v3338 = vpack.c.b16 %v3292, %v3291
    %v3339 = vpack.c.b16 %v3294, %v3293
    %v3340 = vpack.c.b16 %v3296, %v3295
    %v3341 = vpack.c.b16 %v3298, %v3297
    %v3342 = vpack.c.b16 %v3300, %v3299
    %v3343 = vpack.c.b16 %v3302, %v3301
    %v3344 = vpack.c.b16 %v3304, %v3303
    %v3345 = vpack.c.b16 %v3306, %v3305
    %v3346 = vpack.c.b16 %v3308, %v3307
    %v3347 = vpack.c.b16 %v3310, %v3309
    %v3348 = vpack.c.b16 %v3312, %v3311
    %v3349 = vpack.c.b16 %v3314, %v3313
    %v3350 = vpack.c.b16 %v3316, %v3315
    %v3351 = vpack.c.b16 %v3318, %v3317
    %v3352 = vpack.c.b16 %v3320, %v3319
    %3385 = vmatprep.subr.bf16.mxu0 0
    %3386 = vmatpush1.bf16.msra.mxu0 %v3321
    %3387 = vmatprep.subr.bf16.mxu0 0
    %3388 = vmatpush1.bf16.msra.mxu0 %v3322
    %3389 = vmatprep.subr.bf16.mxu0 0
    %3390 = vmatpush1.bf16.msra.mxu0 %v3323
    %3391 = vmatprep.subr.bf16.mxu0 0
    %3392 = vmatpush1.bf16.msra.mxu0 %v3324
    %3393 = vmatprep.subr.bf16.mxu0 0
    %3394 = vmatpush1.bf16.msra.mxu0 %v3325
    %3395 = vmatprep.subr.bf16.mxu0 0
    %3396 = vmatpush1.bf16.msra.mxu0 %v3326
    %3397 = vmatprep.subr.bf16.mxu0 0
    %3398 = vmatpush1.bf16.msra.mxu0 %v3327
    %3399 = vmatprep.subr.bf16.mxu0 0
    %3400 = vmatpush1.bf16.msra.mxu0 %v3328
    %3401 = vmatprep.subr.bf16.mxu0 0
    %3402 = vmatpush1.bf16.msra.mxu0 %v3329
    %3403 = vmatprep.subr.bf16.mxu0 0
    %3404 = vmatpush1.bf16.msra.mxu0 %v3330
    %3405 = vmatprep.subr.bf16.mxu0 0
    %3406 = vmatpush1.bf16.msra.mxu0 %v3331
    %3407 = vmatprep.subr.bf16.mxu0 0
    %3408 = vmatpush1.bf16.msra.mxu0 %v3332
    %3409 = vmatprep.subr.bf16.mxu0 0
    %3410 = vmatpush1.bf16.msra.mxu0 %v3333
    %3411 = vmatprep.subr.bf16.mxu0 0
    %3412 = vmatpush1.bf16.msra.mxu0 %v3334
    %3413 = vmatprep.subr.bf16.mxu0 0
    %3414 = vmatpush1.bf16.msra.mxu0 %v3335
    %3415 = vmatprep.subr.bf16.mxu0 0
    %3416 = vmatpush1.bf16.msra.mxu0 %v3336
    %3417 = vmatprep.mubr.bf16.mxu0 %v2775
    %3418 = vmatmul.mubr.bf16.gmra.mrb[0].mxu0 %v2774
    %v3419 = vpop.f32.mrb[0].mxu0
    %v3420 = vadd.f32 0.0, %v3419
    %v3421 = vpop.f32.mrb[0].mxu0
    %v3422 = vpop.f32.mrb[0].mxu0
    %v3423 = vpop.f32.mrb[0].mxu0
    %3424 = vdwg.mxu0
    %3425 = vmatprep.subr.bf16.mxu0 0
    %3426 = vmatpush1.bf16.msra.mxu0 %v3337
    %3427 = vmatprep.subr.bf16.mxu0 0
    %3428 = vmatpush1.bf16.msra.mxu0 %v3338
    %3429 = vmatprep.subr.bf16.mxu0 0
    %3430 = vmatpush1.bf16.msra.mxu0 %v3339
    %3431 = vmatprep.subr.bf16.mxu0 0
    %3432 = vmatpush1.bf16.msra.mxu0 %v3340
    %3433 = vmatprep.subr.bf16.mxu0 0
    %3434 = vmatpush1.bf16.msra.mxu0 %v3341
    %3435 = vmatprep.subr.bf16.mxu0 0
    %3436 = vmatpush1.bf16.msra.mxu0 %v3342
    %3437 = vmatprep.subr.bf16.mxu0 0
    %3438 = vmatpush1.bf16.msra.mxu0 %v3343
    %3439 = vmatprep.subr.bf16.mxu0 0
    %3440 = vmatpush1.bf16.msra.mxu0 %v3344
    %3441 = vmatprep.subr.bf16.mxu0 0
    %3442 = vmatpush1.bf16.msra.mxu0 %v3345
    %3443 = vmatprep.subr.bf16.mxu0 0
    %3444 = vmatpush1.bf16.msra.mxu0 %v3346
    %3445 = vmatprep.subr.bf16.mxu0 0
    %3446 = vmatpush1.bf16.msra.mxu0 %v3347
    %3447 = vmatprep.subr.bf16.mxu0 0
    %3448 = vmatpush1.bf16.msra.mxu0 %v3348
    %3449 = vmatprep.subr.bf16.mxu0 0
    %3450 = vmatpush1.bf16.msra.mxu0 %v3349
    %3451 = vmatprep.subr.bf16.mxu0 0
    %3452 = vmatpush1.bf16.msra.mxu0 %v3350
    %3453 = vmatprep.subr.bf16.mxu0 0
    %3454 = vmatpush1.bf16.msra.mxu0 %v3351
    %3455 = vmatprep.subr.bf16.mxu0 0
    %3456 = vmatpush1.bf16.msra.mxu0 %v3352
    %3457 = vmatprep.mubr.bf16.mxu0 %v3126
    %3458 = vmatmul.mubr.bf16.gmra.mrb[0].mxu0 %v3119
    %v3459 = vpop.f32.mrb[0].mxu0
    %v3460 = vadd.f32 %v3420, %v3459
    %v3461 = vpop.f32.mrb[0].mxu0
    %v3462 = vpop.f32.mrb[0].mxu0
    %v3463 = vpop.f32.mrb[0].mxu0
    %3464 = vdwg.mxu0
    %v3466 = vrot.slane %v3460, 7
    %v3469 = vrot.slane %v3108, 7
    %v3471 = vrot.slane %v3460, 6
    %v3473 = vrot.slane %v3108, 6
    %v3475 = vrot.slane %v3460, 5
    %v3477 = vrot.slane %v3108, 5
    %v3479 = vsel %vm827, %v3108, %v3466
    %v3480 = vsel %vm843, %v3479, %v3469
    %v3481 = vsel %vm845, %v3480, %v3471
    %vm3482 = vcmask 1043456
    %v3483 = vsel %vm3482, %v3481, %v3473
    %vm3484 = vcmask 1044480
    %v3485 = vsel %vm3484, %v3483, %v3475
    %vm3486 = vcmask 1045504
    %v3487 = vsel %vm3486, %v3485, %v3477
    %v3488 = vld [vmem:[%s33] sm:$0x1]
    %v3490 = vlaneseq
    %v3491 = vshrl.u32 %v3490, 7
    %v3492 = vsub.s32 0, %v3491
    %v3493 = vrot.slane %v3488, %v3492
    %v3495 = vadd.f32 %v3487, %v3493
    %v3496 = vmax.f32 %v3495, 0.0
    %v3497 = vpack.c.bf16 %v3496, %v3496
    %v3499 = vshrl.u32 %v3497, 16
    %v3501 = vrot.slane %v3499, 7
    %v3502 = vshll.u32 %v3497, 16
    %v3504 = vor.u32 %v3501, %v3502
    %v3506 = vsel %vm858, 0, %v3504
    %v3509 = vsel %vm3482, %v3506, 0
    %v3511 = vshrl.u32 %v3509, 16
    %v3513 = vshll.u32 %v3509, 16
    %v3515 = vrot.slane %v3513, 1
    %v3516 = vor.u32 %v3511, %v3515
    %v3519 = vrot.slane %v3509, 1
    %v3521 = vld [vmem:[%s35] sm:$0xf]
    %v3522 = vld [vmem:[%s35 + $0x4] sm:$0xf]
    %v3523 = vld [vmem:[%s35 + $0x8] sm:$0xf]
    %v3524 = vld [vmem:[%s35 + $0xc] sm:$0xf]
    %v3525 = vld [vmem:[%s35 + $0x10] sm:$0xf]
    %v3526 = vld [vmem:[%s35 + $0x14] sm:$0xf]
    %v3527 = vld [vmem:[%s35 + $0x18] sm:$0xf]
    %v3528 = vld [vmem:[%s35 + $0x1c] sm:$0xf]
    %v3529 = vld [vmem:[%s35 + $0x20] sm:$0xf]
    %v3530 = vld [vmem:[%s35 + $0x24] sm:$0xf]
    %v3531 = vld [vmem:[%s35 + $0x28] sm:$0xf]
    %v3532 = vld [vmem:[%s35 + $0x2c] sm:$0xf]
    %v3533 = vld [vmem:[%s35 + $0x30] sm:$0xf]
    %v3534 = vld [vmem:[%s35 + $0x34] sm:$0xf]
    %v3535 = vld [vmem:[%s35 + $0x38] sm:$0xf]
    %v3536 = vld [vmem:[%s35 + $0x3c] sm:$0xf]
    %v3537 = vld [vmem:[%s35 + $0x40] sm:$0xf]
    %v3538 = vld [vmem:[%s35 + $0x44] sm:$0xf]
    %v3539 = vld [vmem:[%s35 + $0x48] sm:$0xf]
    %v3540 = vld [vmem:[%s35 + $0x4c] sm:$0xf]
    %v3541 = vld [vmem:[%s35 + $0x50] sm:$0xf]
    %v3542 = vld [vmem:[%s35 + $0x54] sm:$0xf]
    %v3543 = vld [vmem:[%s35 + $0x58] sm:$0xf]
    %v3544 = vld [vmem:[%s35 + $0x5c] sm:$0xf]
    %v3545 = vld [vmem:[%s35 + $0x60] sm:$0xf]
    %v3546 = vld [vmem:[%s35 + $0x64] sm:$0xf]
    %v3547 = vld [vmem:[%s35 + $0x68] sm:$0xf]
    %v3548 = vld [vmem:[%s35 + $0x6c] sm:$0xf]
    %v3549 = vld [vmem:[%s35 + $0x70] sm:$0xf]
    %v3550 = vld [vmem:[%s35 + $0x74] sm:$0xf]
    %v3551 = vld [vmem:[%s35 + $0x78] sm:$0xf]
    %v3552 = vld [vmem:[%s35 + $0x7c] sm:$0xf]
    %v3553 = vld [vmem:[%s35 + $0x80] sm:$0xf]
    %v3554 = vld [vmem:[%s35 + $0x84] sm:$0xf]
    %v3555 = vld [vmem:[%s35 + $0x88] sm:$0xf]
    %v3556 = vld [vmem:[%s35 + $0x8c] sm:$0xf]
    %v3557 = vld [vmem:[%s35 + $0x90] sm:$0xf]
    %v3558 = vld [vmem:[%s35 + $0x94] sm:$0xf]
    %v3559 = vld [vmem:[%s35 + $0x98] sm:$0xf]
    %v3560 = vld [vmem:[%s35 + $0x9c] sm:$0xf]
    %v3561 = vld [vmem:[%s35 + $0xa0] sm:$0xf]
    %v3562 = vld [vmem:[%s35 + $0xa4] sm:$0xf]
    %v3563 = vld [vmem:[%s35 + $0xa8] sm:$0xf]
    %v3564 = vld [vmem:[%s35 + $0xac] sm:$0xf]
    %v3565 = vld [vmem:[%s35 + $0xb0] sm:$0xf]
    %v3566 = vld [vmem:[%s35 + $0xb4] sm:$0xf]
    %v3567 = vld [vmem:[%s35 + $0xb8] sm:$0xf]
    %v3568 = vld [vmem:[%s35 + $0xbc] sm:$0xf]
    %v3569 = vld [vmem:[%s37] sm:$0x1]
    %v3571 = vlaneseq
    %v3572 = vshrl.u32 %v3571, 7
    %v3573 = vsub.s32 0, %v3572
    %v3574 = vrot.slane %v3569, %v3573
    %v3624 = vunpack.c.l.b16 %v3521
    %v3625 = vunpack.c.l.b16 %v3522
    %v3626 = vunpack.c.l.b16 %v3523
    %v3627 = vunpack.c.l.b16 %v3524
    %v3628 = vunpack.c.l.b16 %v3525
    %v3629 = vunpack.c.l.b16 %v3526
    %v3630 = vunpack.c.l.b16 %v3527
    %v3631 = vunpack.c.l.b16 %v3528
    %v3632 = vunpack.c.l.b16 %v3529
    %v3633 = vunpack.c.l.b16 %v3530
    %v3634 = vunpack.c.l.b16 %v3531
    %v3635 = vunpack.c.l.b16 %v3532
    %v3636 = vunpack.c.l.b16 %v3533
    %v3637 = vunpack.c.l.b16 %v3534
    %v3638 = vunpack.c.l.b16 %v3535
    %v3639 = vunpack.c.l.b16 %v3536
    %v3640 = vunpack.c.l.b16 %v3537
    %v3641 = vunpack.c.l.b16 %v3538
    %v3642 = vunpack.c.l.b16 %v3539
    %v3643 = vunpack.c.l.b16 %v3540
    %v3644 = vunpack.c.l.b16 %v3541
    %v3645 = vunpack.c.l.b16 %v3542
    %v3646 = vunpack.c.l.b16 %v3543
    %v3647 = vunpack.c.l.b16 %v3544
    %v3648 = vunpack.c.l.b16 %v3545
    %v3649 = vunpack.c.l.b16 %v3546
    %v3650 = vunpack.c.l.b16 %v3547
    %v3651 = vunpack.c.l.b16 %v3548
    %v3652 = vunpack.c.l.b16 %v3549
    %v3653 = vunpack.c.l.b16 %v3550
    %v3654 = vunpack.c.l.b16 %v3551
    %v3655 = vunpack.c.l.b16 %v3552
    %v3656 = vunpack.c.l.b16 %v3553
    %v3657 = vunpack.c.l.b16 %v3554
    %v3658 = vunpack.c.l.b16 %v3555
    %v3659 = vunpack.c.l.b16 %v3556
    %v3660 = vunpack.c.l.b16 %v3557
    %v3661 = vunpack.c.l.b16 %v3558
    %v3662 = vunpack.c.l.b16 %v3559
    %v3663 = vunpack.c.l.b16 %v3560
    %v3664 = vunpack.c.l.b16 %v3561
    %v3665 = vunpack.c.l.b16 %v3562
    %v3666 = vunpack.c.l.b16 %v3563
    %v3667 = vunpack.c.l.b16 %v3564
    %v3668 = vunpack.c.l.b16 %v3565
    %v3669 = vunpack.c.l.b16 %v3566
    %v3670 = vunpack.c.l.b16 %v3567
    %v3671 = vunpack.c.l.b16 %v3568
    %v3672 = vpack.c.b16 %v3625, %v3624
    %v3673 = vpack.c.b16 %v3627, %v3626
    %v3674 = vpack.c.b16 %v3629, %v3628
    %v3675 = vpack.c.b16 %v3631, %v3630
    %v3676 = vpack.c.b16 %v3633, %v3632
    %v3677 = vpack.c.b16 %v3635, %v3634
    %v3678 = vpack.c.b16 %v3637, %v3636
    %v3679 = vpack.c.b16 %v3639, %v3638
    %v3680 = vpack.c.b16 %v3641, %v3640
    %v3681 = vpack.c.b16 %v3643, %v3642
    %v3682 = vpack.c.b16 %v3645, %v3644
    %v3683 = vpack.c.b16 %v3647, %v3646
    %v3684 = vpack.c.b16 %v3649, %v3648
    %v3685 = vpack.c.b16 %v3651, %v3650
    %v3686 = vpack.c.b16 %v3653, %v3652
    %v3687 = vpack.c.b16 %v3655, %v3654
    %v3688 = vpack.c.b16 %v3657, %v3656
    %v3689 = vpack.c.b16 %v3659, %v3658
    %v3690 = vpack.c.b16 %v3661, %v3660
    %v3691 = vpack.c.b16 %v3663, %v3662
    %v3692 = vpack.c.b16 %v3665, %v3664
    %v3693 = vpack.c.b16 %v3667, %v3666
    %v3694 = vpack.c.b16 %v3669, %v3668
    %v3695 = vpack.c.b16 %v3671, %v3670
    %3720 = vmatprep.subr.bf16.mxu0 0
    %3721 = vmatpush1.bf16.msra.mxu0 %v3672
    %3722 = vmatprep.subr.bf16.mxu0 0
    %3723 = vmatpush1.bf16.msra.mxu0 %v3673
    %3724 = vmatprep.subr.bf16.mxu0 0
    %3725 = vmatpush1.bf16.msra.mxu0 %v3674
    %3726 = vmatprep.subr.bf16.mxu0 0
    %3727 = vmatpush1.bf16.msra.mxu0 %v3675
    %3728 = vmatprep.subr.bf16.mxu0 0
    %3729 = vmatpush1.bf16.msra.mxu0 %v3676
    %3730 = vmatprep.subr.bf16.mxu0 0
    %3731 = vmatpush1.bf16.msra.mxu0 %v3677
    %3732 = vmatprep.subr.bf16.mxu0 0
    %3733 = vmatpush1.bf16.msra.mxu0 %v3678
    %3734 = vmatprep.subr.bf16.mxu0 0
    %3735 = vmatpush1.bf16.msra.mxu0 %v3679
    %3736 = vmatprep.subr.bf16.mxu0 0
    %3737 = vmatpush1.bf16.msra.mxu0 %v3680
    %3738 = vmatprep.subr.bf16.mxu0 0
    %3739 = vmatpush1.bf16.msra.mxu0 %v3681
    %3740 = vmatprep.subr.bf16.mxu0 0
    %3741 = vmatpush1.bf16.msra.mxu0 %v3682
    %3742 = vmatprep.subr.bf16.mxu0 0
    %3743 = vmatpush1.bf16.msra.mxu0 %v3683
    %3744 = vmatprep.subr.bf16.mxu0 0
    %3745 = vmatpush1.bf16.msra.mxu0 %v3684
    %3746 = vmatprep.subr.bf16.mxu0 0
    %3747 = vmatpush1.bf16.msra.mxu0 %v3685
    %3748 = vmatprep.subr.bf16.mxu0 0
    %3749 = vmatpush1.bf16.msra.mxu0 %v3686
    %3750 = vmatprep.subr.bf16.mxu0 0
    %3751 = vmatpush1.bf16.msra.mxu0 %v3687
    %3752 = vmatprep.mubr.bf16.mxu0 %v3516
    %3753 = vmatmul.mubr.bf16.gmra.mrb[0].mxu0 %v3509
    %v3754 = vpop.f32.mrb[0].mxu0
    %v3755 = vadd.f32 %v3574, %v3754
    %v3756 = vpop.f32.mrb[0].mxu0
    %v3757 = vpop.f32.mrb[0].mxu0
    %v3758 = vpop.f32.mrb[0].mxu0
    %3759 = vdwg.mxu0
    %3760 = vmatprep.subr.bf16.mxu0 0
    %3761 = vmatpush1.bf16.msra.mxu0 %v3688
    %3762 = vmatprep.subr.bf16.mxu0 0
    %3763 = vmatpush1.bf16.msra.mxu0 %v3689
    %3764 = vmatprep.subr.bf16.mxu0 0
    %3765 = vmatpush1.bf16.msra.mxu0 %v3690
    %3766 = vmatprep.subr.bf16.mxu0 0
    %3767 = vmatpush1.bf16.msra.mxu0 %v3691
    %3768 = vmatprep.subr.bf16.mxu0 0
    %3769 = vmatpush1.bf16.msra.mxu0 %v3692
    %3770 = vmatprep.subr.bf16.mxu0 0
    %3771 = vmatpush1.bf16.msra.mxu0 %v3693
    %3772 = vmatprep.subr.bf16.mxu0 0
    %3773 = vmatpush1.bf16.msra.mxu0 %v3694
    %3774 = vmatprep.subr.bf16.mxu0 0
    %3775 = vmatpush1.bf16.msra.mxu0 %v3695
    %3776 = vmatprep.subr.bf16.mxu0 0
    %3777 = vmatpush1.bf16.msra.mxu0 0
    %3778 = vmatprep.subr.bf16.mxu0 0
    %3779 = vmatpush1.bf16.msra.mxu0 0
    %3780 = vmatprep.subr.bf16.mxu0 0
    %3781 = vmatpush1.bf16.msra.mxu0 0
    %3782 = vmatprep.subr.bf16.mxu0 0
    %3783 = vmatpush1.bf16.msra.mxu0 0
    %3784 = vmatprep.subr.bf16.mxu0 0
    %3785 = vmatpush1.bf16.msra.mxu0 0
    %3786 = vmatprep.subr.bf16.mxu0 0
    %3787 = vmatpush1.bf16.msra.mxu0 0
    %3788 = vmatprep.subr.bf16.mxu0 0
    %3789 = vmatpush1.bf16.msra.mxu0 0
    %3790 = vmatprep.subr.bf16.mxu0 0
    %3791 = vmatpush1.bf16.msra.mxu0 0
    %3792 = vmatprep.mubr.bf16.mxu0 0
    %3793 = vmatmul.mubr.bf16.gmra.mrb[0].mxu0 %v3519
    %v3794 = vpop.f32.mrb[0].mxu0
    %v3795 = vadd.f32 %v3755, %v3794
    %v3796 = vpop.f32.mrb[0].mxu0
    %v3797 = vpop.f32.mrb[0].mxu0
    %v3798 = vpop.f32.mrb[0].mxu0
    %3799 = vdwg.mxu0
    %v3801 = vrot.slane %v2939, 7
    %v3803 = vrot.slane %v2939, 6
    %v3805 = vrot.slane %v2939, 5
    %v3807 = vsel %vm827, %v2939, 0.0
    %v3808 = vsel %vm843, %v3807, %v3801
    %v3809 = vsel %vm845, %v3808, 0.0
    %v3810 = vsel %vm3482, %v3809, %v3803
    %v3811 = vsel %vm3484, %v3810, 0.0
    %v3812 = vsel %vm3486, %v3811, %v3805
    %v3813 = vadd.f32 %v3795, %v3812
    %v3815 = vlaneseq
    %v3816 = vshrl.u32 %v3815, 7
    %v3817 = vsub.s32 0, %v3816
    %v3818 = vrot.slane %v2944, %v3817
    %v3820 = vadd.f32 %v3813, %v3818
    %v3821 = vmax.f32 %v3820, 0.0
    %v3822 = vpack.c.bf16 %v3821, %v3821
    %v3823 = vld [vmem:[%s53] sm:$0xf]
    %v3824 = vld [vmem:[%s53 + $0x4] sm:$0xf]
    %v3825 = vld [vmem:[%s53 + $0x8] sm:$0xf]
    %v3826 = vld [vmem:[%s53 + $0xc] sm:$0xf]
    %v3827 = vld [vmem:[%s53 + $0x10] sm:$0xf]
    %v3828 = vld [vmem:[%s53 + $0x14] sm:$0xf]
    %v3829 = vld [vmem:[%s53 + $0x18] sm:$0xf]
    %v3830 = vld [vmem:[%s53 + $0x1c] sm:$0xf]
    %v3831 = vld [vmem:[%s53 + $0x20] sm:$0xf]
    %v3832 = vld [vmem:[%s53 + $0x24] sm:$0xf]
    %v3833 = vld [vmem:[%s53 + $0x28] sm:$0xf]
    %v3834 = vld [vmem:[%s53 + $0x2c] sm:$0xf]
    %v3835 = vld [vmem:[%s53 + $0x30] sm:$0xf]
    %v3836 = vld [vmem:[%s53 + $0x34] sm:$0xf]
    %v3837 = vld [vmem:[%s53 + $0x38] sm:$0xf]
    %v3838 = vld [vmem:[%s53 + $0x3c] sm:$0xf]
    %v3855 = vunpack.c.l.b16 %v3823
    %v3856 = vunpack.c.l.b16 %v3824
    %v3857 = vunpack.c.l.b16 %v3825
    %v3858 = vunpack.c.l.b16 %v3826
    %v3859 = vunpack.c.l.b16 %v3827
    %v3860 = vunpack.c.l.b16 %v3828
    %v3861 = vunpack.c.l.b16 %v3829
    %v3862 = vunpack.c.l.b16 %v3830
    %v3863 = vunpack.c.l.b16 %v3831
    %v3864 = vunpack.c.l.b16 %v3832
    %v3865 = vunpack.c.l.b16 %v3833
    %v3866 = vunpack.c.l.b16 %v3834
    %v3867 = vunpack.c.l.b16 %v3835
    %v3868 = vunpack.c.l.b16 %v3836
    %v3869 = vunpack.c.l.b16 %v3837
    %v3870 = vunpack.c.l.b16 %v3838
    %v3871 = vpack.c.b16 %v3856, %v3855
    %v3872 = vpack.c.b16 %v3858, %v3857
    %v3873 = vpack.c.b16 %v3860, %v3859
    %v3874 = vpack.c.b16 %v3862, %v3861
    %v3875 = vpack.c.b16 %v3864, %v3863
    %v3876 = vpack.c.b16 %v3866, %v3865
    %v3877 = vpack.c.b16 %v3868, %v3867
    %v3878 = vpack.c.b16 %v3870, %v3869
    %3887 = vmatprep.subr.bf16.mxu0 0
    %3888 = vmatpush1.bf16.msra.mxu0 %v3871
    %3889 = vmatprep.subr.bf16.mxu0 0
    %3890 = vmatpush1.bf16.msra.mxu0 %v3872
    %3891 = vmatprep.subr.bf16.mxu0 0
    %3892 = vmatpush1.bf16.msra.mxu0 %v3873
    %3893 = vmatprep.subr.bf16.mxu0 0
    %3894 = vmatpush1.bf16.msra.mxu0 %v3874
    %3895 = vmatprep.subr.bf16.mxu0 0
    %3896 = vmatpush1.bf16.msra.mxu0 %v3875
    %3897 = vmatprep.subr.bf16.mxu0 0
    %3898 = vmatpush1.bf16.msra.mxu0 %v3876
    %3899 = vmatprep.subr.bf16.mxu0 0
    %3900 = vmatpush1.bf16.msra.mxu0 %v3877
    %3901 = vmatprep.subr.bf16.mxu0 0
    %3902 = vmatpush1.bf16.msra.mxu0 %v3878
    %3903 = vmatprep.subr.bf16.mxu0 0
    %3904 = vmatpush1.bf16.msra.mxu0 0
    %3905 = vmatprep.subr.bf16.mxu0 0
    %3906 = vmatpush1.bf16.msra.mxu0 0
    %3907 = vmatprep.subr.bf16.mxu0 0
    %3908 = vmatpush1.bf16.msra.mxu0 0
    %3909 = vmatprep.subr.bf16.mxu0 0
    %3910 = vmatpush1.bf16.msra.mxu0 0
    %3911 = vmatprep.subr.bf16.mxu0 0
    %3912 = vmatpush1.bf16.msra.mxu0 0
    %3913 = vmatprep.subr.bf16.mxu0 0
    %3914 = vmatpush1.bf16.msra.mxu0 0
    %3915 = vmatprep.subr.bf16.mxu0 0
    %3916 = vmatpush1.bf16.msra.mxu0 0
    %3917 = vmatprep.subr.bf16.mxu0 0
    %3918 = vmatpush1.bf16.msra.mxu0 0
    %3919 = vmatprep.mubr.bf16.mxu0 0
    %3920 = vmatmul.mubr.bf16.gmra.mrb[0].mxu0 %v3822
    %v3921 = vpop.f32.mrb[0].mxu0
    %v3922 = vadd.f32 0.0, %v3921
    %v3923 = vpop.f32.mrb[0].mxu0
    %v3924 = vpop.f32.mrb[0].mxu0
    %v3925 = vpop.f32.mrb[0].mxu0
    %3926 = vdwg.mxu0
    %v3927 = vld [vmem:[%s55] sm:$0x1]
    %v3928 = vld [vmem:[%s43] sm:$0xf]
    %v3929 = vld [vmem:[%s43 + $0x4] sm:$0xf]
    %v3930 = vld [vmem:[%s43 + $0x8] sm:$0xf]
    %v3931 = vld [vmem:[%s43 + $0xc] sm:$0xf]
    %v3932 = vld [vmem:[%s43 + $0x10] sm:$0xf]
    %v3933 = vld [vmem:[%s43 + $0x14] sm:$0xf]
    %v3934 = vld [vmem:[%s43 + $0x18] sm:$0xf]
    %v3935 = vld [vmem:[%s43 + $0x1c] sm:$0xf]
    %v3936 = vld [vmem:[%s43 + $0x20] sm:$0xf]
    %v3937 = vld [vmem:[%s43 + $0x24] sm:$0xf]
    %v3938 = vld [vmem:[%s43 + $0x28] sm:$0xf]
    %v3939 = vld [vmem:[%s43 + $0x2c] sm:$0xf]
    %v3940 = vld [vmem:[%s43 + $0x30] sm:$0xf]
    %v3941 = vld [vmem:[%s43 + $0x34] sm:$0xf]
    %v3942 = vld [vmem:[%s43 + $0x38] sm:$0xf]
    %v3943 = vld [vmem:[%s43 + $0x3c] sm:$0xf]
    %v3960 = vunpack.c.l.b16 %v3928
    %v3961 = vunpack.c.l.b16 %v3929
    %v3962 = vunpack.c.l.b16 %v3930
    %v3963 = vunpack.c.l.b16 %v3931
    %v3964 = vunpack.c.l.b16 %v3932
    %v3965 = vunpack.c.l.b16 %v3933
    %v3966 = vunpack.c.l.b16 %v3934
    %v3967 = vunpack.c.l.b16 %v3935
    %v3968 = vunpack.c.l.b16 %v3936
    %v3969 = vunpack.c.l.b16 %v3937
    %v3970 = vunpack.c.l.b16 %v3938
    %v3971 = vunpack.c.l.b16 %v3939
    %v3972 = vunpack.c.l.b16 %v3940
    %v3973 = vunpack.c.l.b16 %v3941
    %v3974 = vunpack.c.l.b16 %v3942
    %v3975 = vunpack.c.l.b16 %v3943
    %v3976 = vpack.c.b16 %v3961, %v3960
    %v3977 = vpack.c.b16 %v3963, %v3962
    %v3978 = vpack.c.b16 %v3965, %v3964
    %v3979 = vpack.c.b16 %v3967, %v3966
    %v3980 = vpack.c.b16 %v3969, %v3968
    %v3981 = vpack.c.b16 %v3971, %v3970
    %v3982 = vpack.c.b16 %v3973, %v3972
    %v3983 = vpack.c.b16 %v3975, %v3974
    %3992 = vmatprep.subr.bf16.mxu0 0
    %3993 = vmatpush1.bf16.msra.mxu0 %v3976
    %3994 = vmatprep.subr.bf16.mxu0 0
    %3995 = vmatpush1.bf16.msra.mxu0 %v3977
    %3996 = vmatprep.subr.bf16.mxu0 0
    %3997 = vmatpush1.bf16.msra.mxu0 %v3978
    %3998 = vmatprep.subr.bf16.mxu0 0
    %3999 = vmatpush1.bf16.msra.mxu0 %v3979
    %4000 = vmatprep.subr.bf16.mxu0 0
    %4001 = vmatpush1.bf16.msra.mxu0 %v3980
    %4002 = vmatprep.subr.bf16.mxu0 0
    %4003 = vmatpush1.bf16.msra.mxu0 %v3981
    %4004 = vmatprep.subr.bf16.mxu0 0
    %4005 = vmatpush1.bf16.msra.mxu0 %v3982
    %4006 = vmatprep.subr.bf16.mxu0 0
    %4007 = vmatpush1.bf16.msra.mxu0 %v3983
    %4008 = vmatprep.subr.bf16.mxu0 0
    %4009 = vmatpush1.bf16.msra.mxu0 0
    %4010 = vmatprep.subr.bf16.mxu0 0
    %4011 = vmatpush1.bf16.msra.mxu0 0
    %4012 = vmatprep.subr.bf16.mxu0 0
    %4013 = vmatpush1.bf16.msra.mxu0 0
    %4014 = vmatprep.subr.bf16.mxu0 0
    %4015 = vmatpush1.bf16.msra.mxu0 0
    %4016 = vmatprep.subr.bf16.mxu0 0
    %4017 = vmatpush1.bf16.msra.mxu0 0
    %4018 = vmatprep.subr.bf16.mxu0 0
    %4019 = vmatpush1.bf16.msra.mxu0 0
    %4020 = vmatprep.subr.bf16.mxu0 0
    %4021 = vmatpush1.bf16.msra.mxu0 0
    %4022 = vmatprep.subr.bf16.mxu0 0
    %4023 = vmatpush1.bf16.msra.mxu0 0
    %4024 = vmatprep.mubr.bf16.mxu0 0
    %4025 = vmatmul.mubr.bf16.gmra.mrb[0].mxu0 %v3822
    %v4026 = vpop.f32.mrb[0].mxu0
    %v4027 = vadd.f32 0.0, %v4026
    %v4028 = vpop.f32.mrb[0].mxu0
    %v4029 = vpop.f32.mrb[0].mxu0
    %v4030 = vpop.f32.mrb[0].mxu0
    %4031 = vdwg.mxu0
    %v4033 = vshrl.u32 %v3822, 16
    %v4035 = vshll.u32 %v3822, 16
    %v4037 = vrot.slane %v4035, 1
    %v4038 = vor.u32 %v4033, %v4037
    %v4040 = vld [vmem:[%s45] sm:$0xf]
    %v4041 = vld [vmem:[%s45 + $0x4] sm:$0xf]
    %v4042 = vld [vmem:[%s45 + $0x8] sm:$0xf]
    %v4043 = vld [vmem:[%s45 + $0xc] sm:$0xf]
    %v4044 = vld [vmem:[%s45 + $0x10] sm:$0xf]
    %v4045 = vld [vmem:[%s45 + $0x14] sm:$0xf]
    %v4046 = vld [vmem:[%s45 + $0x18] sm:$0xf]
    %v4047 = vld [vmem:[%s45 + $0x1c] sm:$0xf]
    %v4048 = vld [vmem:[%s45 + $0x20] sm:$0xf]
    %v4049 = vld [vmem:[%s45 + $0x24] sm:$0xf]
    %v4050 = vld [vmem:[%s45 + $0x28] sm:$0xf]
    %v4051 = vld [vmem:[%s45 + $0x2c] sm:$0xf]
    %v4052 = vld [vmem:[%s45 + $0x30] sm:$0xf]
    %v4053 = vld [vmem:[%s45 + $0x34] sm:$0xf]
    %v4054 = vld [vmem:[%s45 + $0x38] sm:$0xf]
    %v4055 = vld [vmem:[%s45 + $0x3c] sm:$0xf]
    %v4056 = vld [vmem:[%s45 + $0x40] sm:$0xf]
    %v4057 = vld [vmem:[%s45 + $0x44] sm:$0xf]
    %v4058 = vld [vmem:[%s45 + $0x48] sm:$0xf]
    %v4059 = vld [vmem:[%s45 + $0x4c] sm:$0xf]
    %v4060 = vld [vmem:[%s45 + $0x50] sm:$0xf]
    %v4061 = vld [vmem:[%s45 + $0x54] sm:$0xf]
    %v4062 = vld [vmem:[%s45 + $0x58] sm:$0xf]
    %v4063 = vld [vmem:[%s45 + $0x5c] sm:$0xf]
    %v4064 = vld [vmem:[%s45 + $0x60] sm:$0xf]
    %v4065 = vld [vmem:[%s45 + $0x64] sm:$0xf]
    %v4066 = vld [vmem:[%s45 + $0x68] sm:$0xf]
    %v4067 = vld [vmem:[%s45 + $0x6c] sm:$0xf]
    %v4068 = vld [vmem:[%s45 + $0x70] sm:$0xf]
    %v4069 = vld [vmem:[%s45 + $0x74] sm:$0xf]
    %v4070 = vld [vmem:[%s45 + $0x78] sm:$0xf]
    %v4071 = vld [vmem:[%s45 + $0x7c] sm:$0xf]
    %v4104 = vunpack.c.l.b16 %v4040
    %v4105 = vunpack.c.l.b16 %v4041
    %v4106 = vunpack.c.l.b16 %v4042
    %v4107 = vunpack.c.l.b16 %v4043
    %v4108 = vunpack.c.l.b16 %v4044
    %v4109 = vunpack.c.l.b16 %v4045
    %v4110 = vunpack.c.l.b16 %v4046
    %v4111 = vunpack.c.l.b16 %v4047
    %v4112 = vunpack.c.l.b16 %v4048
    %v4113 = vunpack.c.l.b16 %v4049
    %v4114 = vunpack.c.l.b16 %v4050
    %v4115 = vunpack.c.l.b16 %v4051
    %v4116 = vunpack.c.l.b16 %v4052
    %v4117 = vunpack.c.l.b16 %v4053
    %v4118 = vunpack.c.l.b16 %v4054
    %v4119 = vunpack.c.l.b16 %v4055
    %v4120 = vunpack.c.l.b16 %v4056
    %v4121 = vunpack.c.l.b16 %v4057
    %v4122 = vunpack.c.l.b16 %v4058
    %v4123 = vunpack.c.l.b16 %v4059
    %v4124 = vunpack.c.l.b16 %v4060
    %v4125 = vunpack.c.l.b16 %v4061
    %v4126 = vunpack.c.l.b16 %v4062
    %v4127 = vunpack.c.l.b16 %v4063
    %v4128 = vunpack.c.l.b16 %v4064
    %v4129 = vunpack.c.l.b16 %v4065
    %v4130 = vunpack.c.l.b16 %v4066
    %v4131 = vunpack.c.l.b16 %v4067
    %v4132 = vunpack.c.l.b16 %v4068
    %v4133 = vunpack.c.l.b16 %v4069
    %v4134 = vunpack.c.l.b16 %v4070
    %v4135 = vunpack.c.l.b16 %v4071
    %v4136 = vpack.c.b16 %v4105, %v4104
    %v4137 = vpack.c.b16 %v4107, %v4106
    %v4138 = vpack.c.b16 %v4109, %v4108
    %v4139 = vpack.c.b16 %v4111, %v4110
    %v4140 = vpack.c.b16 %v4113, %v4112
    %v4141 = vpack.c.b16 %v4115, %v4114
    %v4142 = vpack.c.b16 %v4117, %v4116
    %v4143 = vpack.c.b16 %v4119, %v4118
    %v4144 = vpack.c.b16 %v4121, %v4120
    %v4145 = vpack.c.b16 %v4123, %v4122
    %v4146 = vpack.c.b16 %v4125, %v4124
    %v4147 = vpack.c.b16 %v4127, %v4126
    %v4148 = vpack.c.b16 %v4129, %v4128
    %v4149 = vpack.c.b16 %v4131, %v4130
    %v4150 = vpack.c.b16 %v4133, %v4132
    %v4151 = vpack.c.b16 %v4135, %v4134
    %4168 = vmatprep.subr.bf16.mxu0 0
    %4169 = vmatpush1.bf16.msra.mxu0 %v4136
    %4170 = vmatprep.subr.bf16.mxu0 0
    %4171 = vmatpush1.bf16.msra.mxu0 %v4137
    %4172 = vmatprep.subr.bf16.mxu0 0
    %4173 = vmatpush1.bf16.msra.mxu0 %v4138
    %4174 = vmatprep.subr.bf16.mxu0 0
    %4175 = vmatpush1.bf16.msra.mxu0 %v4139
    %4176 = vmatprep.subr.bf16.mxu0 0
    %4177 = vmatpush1.bf16.msra.mxu0 %v4140
    %4178 = vmatprep.subr.bf16.mxu0 0
    %4179 = vmatpush1.bf16.msra.mxu0 %v4141
    %4180 = vmatprep.subr.bf16.mxu0 0
    %4181 = vmatpush1.bf16.msra.mxu0 %v4142
    %4182 = vmatprep.subr.bf16.mxu0 0
    %4183 = vmatpush1.bf16.msra.mxu0 %v4143
    %4184 = vmatprep.subr.bf16.mxu0 0
    %4185 = vmatpush1.bf16.msra.mxu0 %v4144
    %4186 = vmatprep.subr.bf16.mxu0 0
    %4187 = vmatpush1.bf16.msra.mxu0 %v4145
    %4188 = vmatprep.subr.bf16.mxu0 0
    %4189 = vmatpush1.bf16.msra.mxu0 %v4146
    %4190 = vmatprep.subr.bf16.mxu0 0
    %4191 = vmatpush1.bf16.msra.mxu0 %v4147
    %4192 = vmatprep.subr.bf16.mxu0 0
    %4193 = vmatpush1.bf16.msra.mxu0 %v4148
    %4194 = vmatprep.subr.bf16.mxu0 0
    %4195 = vmatpush1.bf16.msra.mxu0 %v4149
    %4196 = vmatprep.subr.bf16.mxu0 0
    %4197 = vmatpush1.bf16.msra.mxu0 %v4150
    %4198 = vmatprep.subr.bf16.mxu0 0
    %4199 = vmatpush1.bf16.msra.mxu0 %v4151
    %4200 = vmatprep.mubr.bf16.mxu0 %v4038
    %4201 = vmatmul.mubr.bf16.gmra.mrb[0].mxu0 %v3822
    %v4202 = vpop.f32.mrb[0].mxu0
    %v4203 = vadd.f32 0.0, %v4202
    %v4204 = vpop.f32.mrb[0].mxu0
    %v4205 = vpop.f32.mrb[0].mxu0
    %v4206 = vpop.f32.mrb[0].mxu0
    %4207 = vdwg.mxu0
    %v4209 = vrot.slane %v4203, 7
    %v4212 = vrot.slane %v4027, 7
    %v4214 = vrot.slane %v4203, 6
    %v4216 = vrot.slane %v4027, 6
    %v4218 = vrot.slane %v4203, 5
    %v4220 = vrot.slane %v4027, 5
    %v4222 = vrot.slane %v4203, 4
    %v4224 = vrot.slane %v4027, 4
    %v4226 = vrot.slane %v4203, 3
    %v4228 = vrot.slane %v4027, 3
    %v4230 = vrot.slane %v4203, 2
    %v4232 = vrot.slane %v4027, 2
    %v4234 = vsel %vm827, %v4027, %v4209
    %v4235 = vsel %vm843, %v4234, %v4212
    %v4236 = vsel %vm845, %v4235, %v4214
    %v4237 = vsel %vm3482, %v4236, %v4216
    %v4238 = vsel %vm3484, %v4237, %v4218
    %v4239 = vsel %vm3486, %v4238, %v4220
    %v4240 = vsel %vm831, %v4239, %v4222
    %v4241 = vsel %vm827, %v4224, %v4226
    %v4242 = vsel %vm843, %v4241, %v4228
    %v4243 = vsel %vm845, %v4242, %v4230
    %v4244 = vsel %vm3482, %v4243, %v4232
    %v4245 = vld [vmem:[%s47] sm:$0x1]
    %v4247 = vlaneseq
    %v4248 = vshrl.u32 %v4247, 7
    %v4249 = vsub.s32 0, %v4248
    %v4250 = vrot.slane %v4245, %v4249
    %v4252 = vadd.f32 %v4240, %v4250
    %v4253 = vadd.f32 %v4244, %v4250
    %v4254 = vmax.f32 %v4252, 0.0
    %v4255 = vmax.f32 %v4253, 0.0
    %v4256 = vpack.c.bf16 %v4255, %v4254
    %v4258 = vshrl.u32 %v4256, 16
    %v4260 = vrot.slane %v4258, 7
    %v4261 = vshll.u32 %v4256, 16
    %v4263 = vor.u32 %v4260, %v4261
    %v4265 = vsel %vm858, 0, %v4263
    %v4267 = vsel %vm831, %v4265, 0
    %v4269 = vshrl.u32 %v4267, 16
    %v4271 = vshll.u32 %v4267, 16
    %v4273 = vrot.slane %v4271, 1
    %v4274 = vor.u32 %v4269, %v4273
    %v4277 = vrot.slane %v4267, 1
    %v4279 = vld [vmem:[%s49] sm:$0xf]
    %v4280 = vld [vmem:[%s49 + $0x4] sm:$0xf]
    %v4281 = vld [vmem:[%s49 + $0x8] sm:$0xf]
    %v4282 = vld [vmem:[%s49 + $0xc] sm:$0xf]
    %v4283 = vld [vmem:[%s49 + $0x10] sm:$0xf]
    %v4284 = vld [vmem:[%s49 + $0x14] sm:$0xf]
    %v4285 = vld [vmem:[%s49 + $0x18] sm:$0xf]
    %v4286 = vld [vmem:[%s49 + $0x1c] sm:$0xf]
    %v4287 = vld [vmem:[%s49 + $0x20] sm:$0xf]
    %v4288 = vld [vmem:[%s49 + $0x24] sm:$0xf]
    %v4289 = vld [vmem:[%s49 + $0x28] sm:$0xf]
    %v4290 = vld [vmem:[%s49 + $0x2c] sm:$0xf]
    %v4291 = vld [vmem:[%s49 + $0x30] sm:$0xf]
    %v4292 = vld [vmem:[%s49 + $0x34] sm:$0xf]
    %v4293 = vld [vmem:[%s49 + $0x38] sm:$0xf]
    %v4294 = vld [vmem:[%s49 + $0x3c] sm:$0xf]
    %v4295 = vld [vmem:[%s49 + $0x40] sm:$0xf]
    %v4296 = vld [vmem:[%s49 + $0x44] sm:$0xf]
    %v4297 = vld [vmem:[%s49 + $0x48] sm:$0xf]
    %v4298 = vld [vmem:[%s49 + $0x4c] sm:$0xf]
    %v4299 = vld [vmem:[%s49 + $0x50] sm:$0xf]
    %v4300 = vld [vmem:[%s49 + $0x54] sm:$0xf]
    %v4301 = vld [vmem:[%s49 + $0x58] sm:$0xf]
    %v4302 = vld [vmem:[%s49 + $0x5c] sm:$0xf]
    %v4303 = vld [vmem:[%s49 + $0x60] sm:$0xf]
    %v4304 = vld [vmem:[%s49 + $0x64] sm:$0xf]
    %v4305 = vld [vmem:[%s49 + $0x68] sm:$0xf]
    %v4306 = vld [vmem:[%s49 + $0x6c] sm:$0xf]
    %v4307 = vld [vmem:[%s49 + $0x70] sm:$0xf]
    %v4308 = vld [vmem:[%s49 + $0x74] sm:$0xf]
    %v4309 = vld [vmem:[%s49 + $0x78] sm:$0xf]
    %v4310 = vld [vmem:[%s49 + $0x7c] sm:$0xf]
    %v4311 = vld [vmem:[%s49 + $0x80] sm:$0xf]
    %v4312 = vld [vmem:[%s49 + $0x84] sm:$0xf]
    %v4313 = vld [vmem:[%s49 + $0x88] sm:$0xf]
    %v4314 = vld [vmem:[%s49 + $0x8c] sm:$0xf]
    %v4315 = vld [vmem:[%s49 + $0x90] sm:$0xf]
    %v4316 = vld [vmem:[%s49 + $0x94] sm:$0xf]
    %v4317 = vld [vmem:[%s49 + $0x98] sm:$0xf]
    %v4318 = vld [vmem:[%s49 + $0x9c] sm:$0xf]
    %v4319 = vld [vmem:[%s49 + $0xa0] sm:$0xf]
    %v4320 = vld [vmem:[%s49 + $0xa4] sm:$0xf]
    %v4321 = vld [vmem:[%s49 + $0xa8] sm:$0xf]
    %v4322 = vld [vmem:[%s49 + $0xac] sm:$0xf]
    %v4323 = vld [vmem:[%s49 + $0xb0] sm:$0xf]
    %v4324 = vld [vmem:[%s49 + $0xb4] sm:$0xf]
    %v4325 = vld [vmem:[%s49 + $0xb8] sm:$0xf]
    %v4326 = vld [vmem:[%s49 + $0xbc] sm:$0xf]
    %v4327 = vld [vmem:[%s51] sm:$0x1]
    %v4329 = vlaneseq
    %v4330 = vshrl.u32 %v4329, 7
    %v4331 = vsub.s32 0, %v4330
    %v4332 = vrot.slane %v4327, %v4331
    %v4382 = vunpack.c.l.b16 %v4279
    %v4383 = vunpack.c.l.b16 %v4280
    %v4384 = vunpack.c.l.b16 %v4281
    %v4385 = vunpack.c.l.b16 %v4282
    %v4386 = vunpack.c.l.b16 %v4283
    %v4387 = vunpack.c.l.b16 %v4284
    %v4388 = vunpack.c.l.b16 %v4285
    %v4389 = vunpack.c.l.b16 %v4286
    %v4390 = vunpack.c.l.b16 %v4287
    %v4391 = vunpack.c.l.b16 %v4288
    %v4392 = vunpack.c.l.b16 %v4289
    %v4393 = vunpack.c.l.b16 %v4290
    %v4394 = vunpack.c.l.b16 %v4291
    %v4395 = vunpack.c.l.b16 %v4292
    %v4396 = vunpack.c.l.b16 %v4293
    %v4397 = vunpack.c.l.b16 %v4294
    %v4398 = vunpack.c.l.b16 %v4295
    %v4399 = vunpack.c.l.b16 %v4296
    %v4400 = vunpack.c.l.b16 %v4297
    %v4401 = vunpack.c.l.b16 %v4298
    %v4402 = vunpack.c.l.b16 %v4299
    %v4403 = vunpack.c.l.b16 %v4300
    %v4404 = vunpack.c.l.b16 %v4301
    %v4405 = vunpack.c.l.b16 %v4302
    %v4406 = vunpack.c.l.b16 %v4303
    %v4407 = vunpack.c.l.b16 %v4304
    %v4408 = vunpack.c.l.b16 %v4305
    %v4409 = vunpack.c.l.b16 %v4306
    %v4410 = vunpack.c.l.b16 %v4307
    %v4411 = vunpack.c.l.b16 %v4308
    %v4412 = vunpack.c.l.b16 %v4309
    %v4413 = vunpack.c.l.b16 %v4310
    %v4414 = vunpack.c.l.b16 %v4311
    %v4415 = vunpack.c.l.b16 %v4312
    %v4416 = vunpack.c.l.b16 %v4313
    %v4417 = vunpack.c.l.b16 %v4314
    %v4418 = vunpack.c.l.b16 %v4315
    %v4419 = vunpack.c.l.b16 %v4316
    %v4420 = vunpack.c.l.b16 %v4317
    %v4421 = vunpack.c.l.b16 %v4318
    %v4422 = vunpack.c.l.b16 %v4319
    %v4423 = vunpack.c.l.b16 %v4320
    %v4424 = vunpack.c.l.b16 %v4321
    %v4425 = vunpack.c.l.b16 %v4322
    %v4426 = vunpack.c.l.b16 %v4323
    %v4427 = vunpack.c.l.b16 %v4324
    %v4428 = vunpack.c.l.b16 %v4325
    %v4429 = vunpack.c.l.b16 %v4326
    %v4430 = vpack.c.b16 %v4383, %v4382
    %v4431 = vpack.c.b16 %v4385, %v4384
    %v4432 = vpack.c.b16 %v4387, %v4386
    %v4433 = vpack.c.b16 %v4389, %v4388
    %v4434 = vpack.c.b16 %v4391, %v4390
    %v4435 = vpack.c.b16 %v4393, %v4392
    %v4436 = vpack.c.b16 %v4395, %v4394
    %v4437 = vpack.c.b16 %v4397, %v4396
    %v4438 = vpack.c.b16 %v4399, %v4398
    %v4439 = vpack.c.b16 %v4401, %v4400
    %v4440 = vpack.c.b16 %v4403, %v4402
    %v4441 = vpack.c.b16 %v4405, %v4404
    %v4442 = vpack.c.b16 %v4407, %v4406
    %v4443 = vpack.c.b16 %v4409, %v4408
    %v4444 = vpack.c.b16 %v4411, %v4410
    %v4445 = vpack.c.b16 %v4413, %v4412
    %v4446 = vpack.c.b16 %v4415, %v4414
    %v4447 = vpack.c.b16 %v4417, %v4416
    %v4448 = vpack.c.b16 %v4419, %v4418
    %v4449 = vpack.c.b16 %v4421, %v4420
    %v4450 = vpack.c.b16 %v4423, %v4422
    %v4451 = vpack.c.b16 %v4425, %v4424
    %v4452 = vpack.c.b16 %v4427, %v4426
    %v4453 = vpack.c.b16 %v4429, %v4428
    %4478 = vmatprep.subr.bf16.mxu0 0
    %4479 = vmatpush1.bf16.msra.mxu0 %v4430
    %4480 = vmatprep.subr.bf16.mxu0 0
    %4481 = vmatpush1.bf16.msra.mxu0 %v4431
    %4482 = vmatprep.subr.bf16.mxu0 0
    %4483 = vmatpush1.bf16.msra.mxu0 %v4432
    %4484 = vmatprep.subr.bf16.mxu0 0
    %4485 = vmatpush1.bf16.msra.mxu0 %v4433
    %4486 = vmatprep.subr.bf16.mxu0 0
    %4487 = vmatpush1.bf16.msra.mxu0 %v4434
    %4488 = vmatprep.subr.bf16.mxu0 0
    %4489 = vmatpush1.bf16.msra.mxu0 %v4435
    %4490 = vmatprep.subr.bf16.mxu0 0
    %4491 = vmatpush1.bf16.msra.mxu0 %v4436
    %4492 = vmatprep.subr.bf16.mxu0 0
    %4493 = vmatpush1.bf16.msra.mxu0 %v4437
    %4494 = vmatprep.subr.bf16.mxu0 0
    %4495 = vmatpush1.bf16.msra.mxu0 %v4438
    %4496 = vmatprep.subr.bf16.mxu0 0
    %4497 = vmatpush1.bf16.msra.mxu0 %v4439
    %4498 = vmatprep.subr.bf16.mxu0 0
    %4499 = vmatpush1.bf16.msra.mxu0 %v4440
    %4500 = vmatprep.subr.bf16.mxu0 0
    %4501 = vmatpush1.bf16.msra.mxu0 %v4441
    %4502 = vmatprep.subr.bf16.mxu0 0
    %4503 = vmatpush1.bf16.msra.mxu0 %v4442
    %4504 = vmatprep.subr.bf16.mxu0 0
    %4505 = vmatpush1.bf16.msra.mxu0 %v4443
    %4506 = vmatprep.subr.bf16.mxu0 0
    %4507 = vmatpush1.bf16.msra.mxu0 %v4444
    %4508 = vmatprep.subr.bf16.mxu0 0
    %4509 = vmatpush1.bf16.msra.mxu0 %v4445
    %4510 = vmatprep.mubr.bf16.mxu0 %v4274
    %4511 = vmatmul.mubr.bf16.gmra.mrb[0].mxu0 %v4267
    %v4512 = vpop.f32.mrb[0].mxu0
    %v4513 = vadd.f32 %v4332, %v4512
    %v4514 = vpop.f32.mrb[0].mxu0
    %v4515 = vpop.f32.mrb[0].mxu0
    %v4516 = vadd.f32 %v4332, %v4515
    %v4517 = vpop.f32.mrb[0].mxu0
    %4518 = vdwg.mxu0
    %4519 = vmatprep.subr.bf16.mxu0 0
    %4520 = vmatpush1.bf16.msra.mxu0 %v4446
    %4521 = vmatprep.subr.bf16.mxu0 0
    %4522 = vmatpush1.bf16.msra.mxu0 %v4447
    %4523 = vmatprep.subr.bf16.mxu0 0
    %4524 = vmatpush1.bf16.msra.mxu0 %v4448
    %4525 = vmatprep.subr.bf16.mxu0 0
    %4526 = vmatpush1.bf16.msra.mxu0 %v4449
    %4527 = vmatprep.subr.bf16.mxu0 0
    %4528 = vmatpush1.bf16.msra.mxu0 %v4450
    %4529 = vmatprep.subr.bf16.mxu0 0
    %4530 = vmatpush1.bf16.msra.mxu0 %v4451
    %4531 = vmatprep.subr.bf16.mxu0 0
    %4532 = vmatpush1.bf16.msra.mxu0 %v4452
    %4533 = vmatprep.subr.bf16.mxu0 0
    %4534 = vmatpush1.bf16.msra.mxu0 %v4453
    %4535 = vmatprep.subr.bf16.mxu0 0
    %4536 = vmatpush1.bf16.msra.mxu0 0
    %4537 = vmatprep.subr.bf16.mxu0 0
    %4538 = vmatpush1.bf16.msra.mxu0 0
    %4539 = vmatprep.subr.bf16.mxu0 0
    %4540 = vmatpush1.bf16.msra.mxu0 0
    %4541 = vmatprep.subr.bf16.mxu0 0
    %4542 = vmatpush1.bf16.msra.mxu0 0
    %4543 = vmatprep.subr.bf16.mxu0 0
    %4544 = vmatpush1.bf16.msra.mxu0 0
    %4545 = vmatprep.subr.bf16.mxu0 0
    %4546 = vmatpush1.bf16.msra.mxu0 0
    %4547 = vmatprep.subr.bf16.mxu0 0
    %4548 = vmatpush1.bf16.msra.mxu0 0
    %4549 = vmatprep.subr.bf16.mxu0 0
    %4550 = vmatpush1.bf16.msra.mxu0 0
    %4551 = vmatprep.mubr.bf16.mxu0 0
    %4552 = vmatmul.mubr.bf16.gmra.mrb[0].mxu0 %v4277
    %v4553 = vpop.f32.mrb[0].mxu0
    %v4554 = vadd.f32 %v4513, %v4553
    %v4555 = vpop.f32.mrb[0].mxu0
    %v4556 = vpop.f32.mrb[0].mxu0
    %v4557 = vadd.f32 %v4516, %v4556
    %v4558 = vpop.f32.mrb[0].mxu0
    %4559 = vdwg.mxu0
    %v4561 = vrot.slane %v3922, 7
    %v4563 = vrot.slane %v3922, 6
    %v4565 = vrot.slane %v3922, 5
    %v4567 = vrot.slane %v3922, 4
    %v4569 = vrot.slane %v3922, 3
    %v4571 = vrot.slane %v3922, 2
    %v4573 = vsel %vm827, %v3922, 0.0
    %v4574 = vsel %vm843, %v4573, %v4561
    %v4575 = vsel %vm845, %v4574, 0.0
    %v4576 = vsel %vm3482, %v4575, %v4563
    %v4577 = vsel %vm3484, %v4576, 0.0
    %v4578 = vsel %vm3486, %v4577, %v4565
    %v4579 = vsel %vm831, %v4578, 0.0
    %v4580 = vsel %vm827, %v4567, 0.0
    %v4581 = vsel %vm843, %v4580, %v4569
    %v4582 = vsel %vm845, %v4581, 0.0
    %v4583 = vsel %vm3482, %v4582, %v4571
    %v4584 = vadd.f32 %v4554, %v4579
    %v4585 = vadd.f32 %v4557, %v4583
    %v4587 = vlaneseq
    %v4588 = vshrl.u32 %v4587, 7
    %v4589 = vsub.s32 0, %v4588
    %v4590 = vrot.slane %v3927, %v4589
    %v4592 = vadd.f32 %v4584, %v4590
    %v4593 = vadd.f32 %v4585, %v4590
    %v4594 = vmax.f32 %v4592, 0.0
    %v4595 = vmax.f32 %v4593, 0.0
    %v4596 = vld [vmem:[#allocation2] sm:$0xff]
    %v4597 = vld [vmem:[#allocation2 + $0x8] sm:$0xff]
    %v4598 = vld [vmem:[#allocation2 + $0x10] sm:$0xff]
    %v4599 = vld [vmem:[#allocation2 + $0x18] sm:$0xff]
    %v4600 = vld [vmem:[#allocation2 + $0x20] sm:$0xff]
    %v4601 = vld [vmem:[#allocation2 + $0x28] sm:$0xff]
    %v4602 = vld [vmem:[#allocation2 + $0x30] sm:$0xff]
    %v4603 = vld [vmem:[#allocation2 + $0x38] sm:$0xff]
    %v4604 = vld [vmem:[#allocation2 + $0x40] sm:$0xff]
    %v4605 = vld [vmem:[#allocation2 + $0x48] sm:$0xff]
    %v4606 = vld [vmem:[#allocation2 + $0x50] sm:$0xff]
    %v4607 = vld [vmem:[#allocation2 + $0x58] sm:$0xff]
    %v4608 = vld [vmem:[#allocation2 + $0x60] sm:$0xff]
    %v4609 = vld [vmem:[#allocation2 + $0x68] sm:$0xff]
    %v4610 = vld [vmem:[#allocation2 + $0x70] sm:$0xff]
    %v4611 = vld [vmem:[#allocation2 + $0x78] sm:$0xff]
    %4612 = vmatprep.subr.mxu0 0.0
    %4613 = vmatpush1.msra.mxu0 %v4596
    %4614 = vmatprep.subr.mxu0 0.0
    %4615 = vmatpush1.msra.mxu0 %v4597
    %4616 = vmatprep.subr.mxu0 0.0
    %4617 = vmatpush1.msra.mxu0 %v4598
    %4618 = vmatprep.subr.mxu0 0.0
    %4619 = vmatpush1.msra.mxu0 %v4599
    %4620 = vmatprep.subr.mxu0 0.0
    %4621 = vmatpush1.msra.mxu0 %v4600
    %4622 = vmatprep.subr.mxu0 0.0
    %4623 = vmatpush1.msra.mxu0 %v4601
    %4624 = vmatprep.subr.mxu0 0.0
    %4625 = vmatpush1.msra.mxu0 %v4602
    %4626 = vmatprep.subr.mxu0 0.0
    %4627 = vmatpush1.msra.mxu0 %v4603
    %4628 = vmatprep.subr.mxu0 0.0
    %4629 = vmatpush1.msra.mxu0 %v4604
    %4630 = vmatprep.subr.mxu0 0.0
    %4631 = vmatpush1.msra.mxu0 %v4605
    %4632 = vmatprep.subr.mxu0 0.0
    %4633 = vmatpush1.msra.mxu0 %v4606
    %4634 = vmatprep.subr.mxu0 0.0
    %4635 = vmatpush1.msra.mxu0 %v4607
    %4636 = vmatprep.subr.mxu0 0.0
    %4637 = vmatpush1.msra.mxu0 %v4608
    %4638 = vmatprep.subr.mxu0 0.0
    %4639 = vmatpush1.msra.mxu0 %v4609
    %4640 = vmatprep.subr.mxu0 0.0
    %4641 = vmatpush1.msra.mxu0 %v4610
    %4642 = vmatprep.subr.mxu0 0.0
    %4643 = vmatpush1.msra.mxu0 %v4611
    %4644 = vmatprep.subr.mxu0 0.0
    %4645 = vmatpush1.msra.mxu0 0.0
    %4646 = vmatprep.subr.mxu0 0.0
    %4647 = vmatpush1.msra.mxu0 0.0
    %4648 = vmatprep.subr.mxu0 0.0
    %4649 = vmatpush1.msra.mxu0 0.0
    %4650 = vmatprep.subr.mxu0 0.0
    %4651 = vmatpush1.msra.mxu0 0.0
    %4652 = vmatprep.subr.mxu0 0.0
    %4653 = vmatpush1.msra.mxu0 0.0
    %4654 = vmatprep.subr.mxu0 0.0
    %4655 = vmatpush1.msra.mxu0 0.0
    %4656 = vmatprep.subr.mxu0 0.0
    %4657 = vmatpush1.msra.mxu0 0.0
    %4658 = vmatprep.subr.mxu0 0.0
    %4659 = vmatpush1.msra.mxu0 0.0
    %4660 = vmatprep.subr.mxu0 0.0
    %4661 = vmatpush1.msra.mxu0 0.0
    %4662 = vmatprep.subr.mxu0 0.0
    %4663 = vmatpush1.msra.mxu0 0.0
    %4664 = vmatprep.subr.mxu0 0.0
    %4665 = vmatpush1.msra.mxu0 0.0
    %4666 = vmatprep.subr.mxu0 0.0
    %4667 = vmatpush1.msra.mxu0 0.0
    %4668 = vmatprep.subr.mxu0 0.0
    %4669 = vmatpush1.msra.mxu0 0.0
    %4670 = vmatprep.subr.mxu0 0.0
    %4671 = vmatpush1.msra.mxu0 0.0
    %4672 = vmatprep.subr.mxu0 0.0
    %4673 = vmatpush1.msra.mxu0 0.0
    %4674 = vmatprep.subr.mxu0 0.0
    %4675 = vmatpush1.msra.mxu0 0.0
    %4676 = vmatprep.mubr.f32.mxu0 0.0
    %4677 = vmatmul.mubr.f32.gmra.mrb[0].mxu0 %v4594
    %v4678 = vpop.f32.mrb[0].mxu0
    %v4679 = vadd.f32 0.0, %v4678
    %v4680 = vpop.f32.mrb[0].mxu0
    %4681 = vmatprep.mubr.f32.mxu0 0.0
    %4682 = vmatmul.mubr.f32.gmra.mrb[0].mxu0 %v4595
    %v4683 = vpop.f32.mrb[0].mxu0
    %v4684 = vadd.f32 0.0, %v4683
    %v4685 = vpop.f32.mrb[0].mxu0
    %4686 = vdwg.mxu0
    %v4687 = vld [vmem:[%s59] sm:$0xff]
    %vm4688 = vcmask 105472
    %v4690 = vsel %vm4688, %v4687, 0
    %v4693 = vsel %vm3484, %v4684, 0
    %4695 = vmatprep.subr.mxu0 0.0
    %4696 = vmatpush1.msra.mxu0 %v4679
    %4697 = vmatprep.subr.mxu0 0.0
    %4698 = vmatpush1.msra.mxu0 %v4693
    %4699 = vmatprep.subr.mxu0 0.0
    %4700 = vmatpush1.msra.mxu0 0.0
    %4701 = vmatprep.subr.mxu0 0.0
    %4702 = vmatpush1.msra.mxu0 0.0
    %4703 = vmatprep.subr.mxu0 0.0
    %4704 = vmatpush1.msra.mxu0 0.0
    %4705 = vmatprep.subr.mxu0 0.0
    %4706 = vmatpush1.msra.mxu0 0.0
    %4707 = vmatprep.subr.mxu0 0.0
    %4708 = vmatpush1.msra.mxu0 0.0
    %4709 = vmatprep.subr.mxu0 0.0
    %4710 = vmatpush1.msra.mxu0 0.0
    %4711 = vmatprep.subr.mxu0 0.0
    %4712 = vmatpush1.msra.mxu0 0.0
    %4713 = vmatprep.subr.mxu0 0.0
    %4714 = vmatpush1.msra.mxu0 0.0
    %4715 = vmatprep.subr.mxu0 0.0
    %4716 = vmatpush1.msra.mxu0 0.0
    %4717 = vmatprep.subr.mxu0 0.0
    %4718 = vmatpush1.msra.mxu0 0.0
    %4719 = vmatprep.subr.mxu0 0.0
    %4720 = vmatpush1.msra.mxu0 0.0
    %4721 = vmatprep.subr.mxu0 0.0
    %4722 = vmatpush1.msra.mxu0 0.0
    %4723 = vmatprep.subr.mxu0 0.0
    %4724 = vmatpush1.msra.mxu0 0.0
    %4725 = vmatprep.subr.mxu0 0.0
    %4726 = vmatpush1.msra.mxu0 0.0
    %4727 = vmatprep.subr.mxu0 0.0
    %4728 = vmatpush1.msra.mxu0 0.0
    %4729 = vmatprep.subr.mxu0 0.0
    %4730 = vmatpush1.msra.mxu0 0.0
    %4731 = vmatprep.subr.mxu0 0.0
    %4732 = vmatpush1.msra.mxu0 0.0
    %4733 = vmatprep.subr.mxu0 0.0
    %4734 = vmatpush1.msra.mxu0 0.0
    %4735 = vmatprep.subr.mxu0 0.0
    %4736 = vmatpush1.msra.mxu0 0.0
    %4737 = vmatprep.subr.mxu0 0.0
    %4738 = vmatpush1.msra.mxu0 0.0
    %4739 = vmatprep.subr.mxu0 0.0
    %4740 = vmatpush1.msra.mxu0 0.0
    %4741 = vmatprep.subr.mxu0 0.0
    %4742 = vmatpush1.msra.mxu0 0.0
    %4743 = vmatprep.subr.mxu0 0.0
    %4744 = vmatpush1.msra.mxu0 0.0
    %4745 = vmatprep.subr.mxu0 0.0
    %4746 = vmatpush1.msra.mxu0 0.0
    %4747 = vmatprep.subr.mxu0 0.0
    %4748 = vmatpush1.msra.mxu0 0.0
    %4749 = vmatprep.subr.mxu0 0.0
    %4750 = vmatpush1.msra.mxu0 0.0
    %4751 = vmatprep.subr.mxu0 0.0
    %4752 = vmatpush1.msra.mxu0 0.0
    %4753 = vmatprep.subr.mxu0 0.0
    %4754 = vmatpush1.msra.mxu0 0.0
    %4755 = vmatprep.subr.mxu0 0.0
    %4756 = vmatpush1.msra.mxu0 0.0
    %4757 = vmatprep.subr.mxu0 0.0
    %4758 = vmatpush1.msra.mxu0 0.0
    %4759 = vmatprep.mubr.f32.mxu0 0.0
    %4760 = vmatmul.mubr.f32.gmra.mrb[0].mxu0 %v4690
    %v4761 = vpop.f32.mrb[0].mxu0
    %v4762 = vadd.f32 0.0, %v4761
    %v4763 = vpop.f32.mrb[0].mxu0
    %4764 = vdwg.mxu0
    %4765 = vst [vmem:[%s61] sm:$0xff] %v4762
    // Predicated region
    $region126: #{forward.1} parent=1 // pred_check
      _
    $region127: #{forward.1} parent=1 // pred_check_branch
      %4767 = sbr.rel (0) target = $region129
    $region128: #{forward.1} parent=1 // pred_region
      _
    $region129: #{forward.1} parent=1 // pred_fallthru
      _
    // Predicated region
    $region130: #{forward.1} parent=1 // pred_check
      _
    $region131: #{forward.1} parent=1 // pred_check_branch
      %4769 = sbr.rel (0) target = $region133
    $region132: #{forward.1} parent=1 // pred_region
      _
    $region133: #{forward.1} parent=1 // pred_fallthru
      _
    %4770 = vsyncpa [#allocation3], 1

</llo_original>
